<compile_context>
chip_gen: v6e
topology: v6e:2x2x1
jax: 0.10.0
libtpu: 0.0.40
codegen_flags: <defaults>
</compile_context>

<pallas_src>
import math
import functools

import numpy as np
import jax
import jax.numpy as jnp
from jax import lax
from jax.experimental import pallas as pl
from jax.experimental.pallas import tpu as pltpu

# Set to jnp.bfloat16 on v6e / v7x for ~2x MXU throughput (f32 accumulation is
# kept via preferred_element_type).  Left at f32 so the numerics match the
# torch / pure-f32 reference at tight tolerances.
MATMUL_DTYPE = jnp.float32


# -----------------------------------------------------------------------------
# Kernel
# -----------------------------------------------------------------------------
def _mha_kernel(de_ref, en_ref, mask_ref,
                wq_ref, bq_ref, wkv_ref, bkv_ref, wo3_ref, bo_ref, gb_ref,
                out_ref, *, n_heads, d_head):
    hp = n_heads * d_head

    de = de_ref[0]                                    # (tq, H) f32
    en = en_ref[0]                                    # (Le, H) f32
    madd = mask_ref[0].astype(jnp.float32)            # (tq, Le) additive mask

    # Projections.  Q has the 1/sqrt(d_k) scale pre-folded into Wq/bq; K and V
    # are computed with one fused matmul and sliced at a lane-aligned boundary.
    q = jnp.dot(de.astype(MATMUL_DTYPE), wq_ref[...],
                preferred_element_type=jnp.float32) + bq_ref[...]          # (tq, Hp)
    kv = jnp.dot(en.astype(MATMUL_DTYPE), wkv_ref[...],
                 preferred_element_type=jnp.float32) + bkv_ref[...]        # (Le, 2Hp)
    k = kv[:, :hp]
    v = kv[:, hp:]

    tq = q.shape[0]
    le = k.shape[0]

    # (L, Hp) -> (n_heads, L, d_head).  Head blocks are contiguous columns
    # because the wrapper pre-permuted the projection weight columns.
    q3 = jnp.transpose(q.reshape(tq, n_heads, d_head), (1, 0, 2)).astype(MATMUL_DTYPE)
    k3 = jnp.transpose(k.reshape(le, n_heads, d_head), (1, 0, 2)).astype(MATMUL_DTYPE)
    v3 = jnp.transpose(v.reshape(le, n_heads, d_head), (1, 0, 2)).astype(MATMUL_DTYPE)

    # Batched scores + masked, numerically-stable softmax over all heads at once.
    s = jnp.einsum('hqd,hkd->hqk', q3, k3,
                   preferred_element_type=jnp.float32)                     # (h, tq, Le)
    s = s + madd[None, :, :]
    s = s - jnp.max(s, axis=-1, keepdims=True)
    p = jnp.exp(s)
    denom = jnp.sum(p, axis=-1, keepdims=True)
    alpha = p * pl.reciprocal(denom, approx=True)

    heads = jnp.einsum('hqk,hkd->hqd', alpha.astype(MATMUL_DTYPE), v3,
                       preferred_element_type=jnp.float32)                 # (h, tq, dh)

    # Output projection, batched per head then summed over heads.  This equals
    # concat(head_0..head_7, axis=-1) @ Wo^T without the 8-way concatenate.
    oh = jnp.einsum('hqd,hdf->hqf', heads.astype(MATMUL_DTYPE), wo3_ref[...],
                    preferred_element_type=jnp.float32)                    # (h, tq, H)
    res = jnp.sum(oh, axis=0) + bo_ref[...] + de                           # (tq, H)

    # Norm(): torch.var is unbiased (ddof = 1).
    h_dim = res.shape[-1]
    mu = jnp.mean(res, axis=-1, keepdims=True)
    cen = res - mu
    var = jnp.sum(cen * cen, axis=-1, keepdims=True) * (1.0 / (h_dim - 1))
    xnorm = cen * lax.rsqrt(var + 1e-8)
    out_ref[0] = gb_ref[0:1, :] * xnorm + gb_ref[1:2, :]


def _pick_q_tile(length):
    for t in (256, 128, 64, 32, 16, 8):
        if length % t == 0:
            return t
    return length


# -----------------------------------------------------------------------------
# Wrapper (parameter plumbing in plain JAX)
# -----------------------------------------------------------------------------
def multi_head_attention(en, de, mask, params, *, n_heads=8):
    B, Ld, H = de.shape
    _, Le, _ = en.shape
    Hp = params["wq"].shape[0]                 # hidden_dim_
    d_head = Hp // n_heads
    scale = 1.0 / math.sqrt(H)                 # torch uses d_k = de.shape[-1]

    # torch splits the projection output as view(..., Hp//8, 8): head h owns the
    # strided columns [h, h+8, ...].  Permute the weight columns so head h is
    # the contiguous block [h*d_head : (h+1)*d_head] inside the kernel.
    perm = np.array([n_heads * i + h for h in range(n_heads) for i in range(d_head)],
                    dtype=np.int32)
    wq_t = (params["wq"][perm, :].T * scale).astype(MATMUL_DTYPE)          # (H, Hp)
    bq = (params["bq"][perm][None, :] * scale).astype(jnp.float32)         # (1, Hp)
    wk_t = params["wk"][perm, :].T
    wv_t = params["wv"][perm, :].T
    wkv_t = jnp.concatenate([wk_t, wv_t], axis=1).astype(MATMUL_DTYPE)     # (H, 2Hp)
    bkv = jnp.concatenate([params["bk"][perm],
                           params["bv"][perm]])[None, :].astype(jnp.float32)
    # torch.cat order == contiguous-head order, so Wo^T only needs a reshape.
    wo3 = params["wo"].T.reshape(n_heads, d_head, H).astype(MATMUL_DTYPE)  # (h, dh, H)
    bo = params["bo"][None, :].astype(jnp.float32)                         # (1, H)
    gb = jnp.stack([jnp.full((H,), params["gamma"], jnp.float32),
                    jnp.full((H,), params["beta"], jnp.float32)])          # (2, H)

    # Additive mask (0 / -1e10) in bf16: halves mask HBM traffic / VMEM.
    mask_add = jnp.where(mask, jnp.float32(-1e10),
                         jnp.float32(0.0)).astype(jnp.bfloat16)

    tq = _pick_q_tile(Ld)
    grid = (B, Ld // tq)
    kernel = functools.partial(_mha_kernel, n_heads=n_heads, d_head=d_head)

    grid_spec = pltpu.PrefetchScalarGridSpec(
        num_scalar_prefetch=0,
        grid=grid,
        in_specs=[
            pl.BlockSpec((1, tq, H), lambda b, qi: (b, qi, 0)),            # de tile
            pl.BlockSpec((1, Le, H), lambda b, qi: (b, 0, 0)),             # en (full)
            pl.BlockSpec((1, tq, Le), lambda b, qi: (b, qi, 0)),           # additive mask
            pl.BlockSpec((H, Hp), lambda b, qi: (0, 0)),                   # Wq^T (scaled)
            pl.BlockSpec((1, Hp), lambda b, qi: (0, 0)),                   # bq (scaled)
            pl.BlockSpec((H, 2 * Hp), lambda b, qi: (0, 0)),               # [Wk^T | Wv^T]
            pl.BlockSpec((1, 2 * Hp), lambda b, qi: (0, 0)),               # [bk | bv]
            pl.BlockSpec((n_heads, d_head, H), lambda b, qi: (0, 0, 0)),   # Wo^T per head
            pl.BlockSpec((1, H), lambda b, qi: (0, 0)),                    # bo
            pl.BlockSpec((2, H), lambda b, qi: (0, 0)),                    # gamma/beta rows
        ],
        out_specs=pl.BlockSpec((1, tq, H), lambda b, qi: (b, qi, 0)),
    )
    return pl.pallas_call(
        kernel,
        out_shape=jax.ShapeDtypeStruct((B, Ld, H), jnp.float32),
        grid_spec=grid_spec,
        compiler_params=pltpu.CompilerParams(
            dimension_semantics=("parallel", "parallel")),
    )(de, en, mask_add, wq_t, bq, wkv_t, bkv, wo3, bo, gb)


# -----------------------------------------------------------------------------
# Deterministic parameter init (mirrors the torch __init__ distributions)
# -----------------------------------------------------------------------------
def init_params(key, hidden_dim, hidden_dim_):
    ks = jax.random.split(key, 8)
    std = math.sqrt(2.0 / hidden_dim)
    wq = std * jax.random.normal(ks[0], (hidden_dim_, hidden_dim), jnp.float32)
    wk = std * jax.random.normal(ks[1], (hidden_dim_, hidden_dim), jnp.float32)
    wv = std * jax.random.normal(ks[2], (hidden_dim_, hidden_dim), jnp.float32)
    xav = math.sqrt(2.0 / (hidden_dim + hidden_dim_))
    wo = xav * jax.random.normal(ks[3], (hidden_dim, hidden_dim_), jnp.float32)
    b_in = 1.0 / math.sqrt(hidden_dim)
    bq = jax.random.uniform(ks[4], (hidden_dim_,), jnp.float32, -b_in, b_in)
    bk = jax.random.uniform(ks[5], (hidden_dim_,), jnp.float32, -b_in, b_in)
    bv = jax.random.uniform(ks[6], (hidden_dim_,), jnp.float32, -b_in, b_in)
    b_out = 1.0 / math.sqrt(hidden_dim_)
    bo = jax.random.uniform(ks[7], (hidden_dim,), jnp.float32, -b_out, b_out)
    return dict(wq=wq, bq=bq, wk=wk, bk=bk, wv=wv, bv=bv, wo=wo, bo=bo,
                gamma=jnp.float32(1.0), beta=jnp.float32(0.0))


# -----------------------------------------------------------------------------
# Pure-JAX reference (literal transcription of the torch forward) for checking
# -----------------------------------------------------------------------------
def ref_forward(en, de, mask, p, n_heads=8):
    B, Ld, H = de.shape
    _, Le, _ = en.shape
    Hp = p["wq"].shape[0]
    dh = Hp // n_heads
    with jax.default_matmul_precision("float32"):
        q = (de @ p["wq"].T + p["bq"]).reshape(B, Ld, dh, n_heads).transpose(3, 0, 1, 2)
        k = (en @ p["wk"].T + p["bk"]).reshape(B, Le, dh, n_heads).transpose(3, 0, 2, 1)
        v = (en @ p["wv"].T + p["bv"]).reshape(B, Le, dh, n_heads).transpose(3, 0, 1, 2)
        e = jnp.matmul(q, k) / math.sqrt(H)
        e = jnp.where(mask[None], -1e10, e)
        alpha = jax.nn.softmax(e, axis=-1)
        head3 = jnp.matmul(alpha, v)                        # (8, B, Ld, dh)
        a = jnp.concatenate([head3[h] for h in range(n_heads)], axis=2)
        res = a @ p["wo"].T + p["bo"] + de
    mu = jnp.mean(res, axis=-1, keepdims=True)
    var = jnp.sum((res - mu) ** 2, axis=-1, keepdims=True) / (H - 1)
    return p["gamma"] * (res - mu) / jnp.sqrt(var + 1e-8) + p["beta"]


if __name__ == "__main__":
    # Small shapes consistent with the module (hidden_dim_ must be /8 for heads;
    # H chosen as a multiple of 128 so the output block is lane-dense).
    B, Le, Ld, H, Hp = 2, 32, 32, 128, 128

    key = jax.random.PRNGKey(0)
    k_en, k_de, k_mask, k_par = jax.random.split(key, 4)
    en = jax.random.normal(k_en, (B, Le, H), jnp.float32)
    de = jax.random.normal(k_de, (B, Ld, H), jnp.float32)
    mask = jax.random.bernoulli(k_mask, 0.15, (B, Ld, Le))
    params = init_params(k_par, H, Hp)

    out = multi_head_attention(en, de, mask, params)
    out = jax.block_until_ready(out)

    ref = ref_forward(en, de, mask, params)
    assert out.shape == (B, Ld, H)
    np.testing.assert_allclose(np.asarray(out), np.asarray(ref), rtol=1e-2, atol=1e-2)

    print("KERNEL_OK")
</pallas_src>

<mosaic_0001>
module attributes {stable_mosaic.version = 11 : i64} {
  func.func @_mha_kernel(%arg0: i32, %arg1: i32, %arg2: memref<1x32x128xf32, #tpu.memory_space<vmem>>, %arg3: memref<1x32x128xf32, #tpu.memory_space<vmem>>, %arg4: memref<1x32x32xbf16, #tpu.memory_space<vmem>>, %arg5: memref<128x128xf32, #tpu.memory_space<vmem>>, %arg6: memref<1x128xf32, #tpu.memory_space<vmem>>, %arg7: memref<128x256xf32, #tpu.memory_space<vmem>>, %arg8: memref<1x256xf32, #tpu.memory_space<vmem>>, %arg9: memref<8x16x128xf32, #tpu.memory_space<vmem>>, %arg10: memref<1x128xf32, #tpu.memory_space<vmem>>, %arg11: memref<2x128xf32, #tpu.memory_space<vmem>>, %arg12: memref<1x32x128xf32, #tpu.memory_space<vmem>>) attributes {dimension_semantics = [#tpu.dimension_semantics<parallel>, #tpu.dimension_semantics<parallel>], iteration_bounds = array<i64: 2, 1>, scalar_prefetch = 0 : i64, scratch_operands = 0 : i64, tpu.core_type = #tpu.core_type<tc>, window_params = [{transform_indices = @transform_0, window_bounds = array<i64: 1, 32, 128>}, {transform_indices = @transform_1, window_bounds = array<i64: 1, 32, 128>}, {transform_indices = @transform_2, window_bounds = array<i64: 1, 32, 32>}, {pipeline_mode = #tpu.pipeline_mode<synchronous>, transform_indices = @transform_3, window_bounds = array<i64: 128, 128>}, {pipeline_mode = #tpu.pipeline_mode<synchronous>, transform_indices = @transform_4, window_bounds = array<i64: 1, 128>}, {pipeline_mode = #tpu.pipeline_mode<synchronous>, transform_indices = @transform_5, window_bounds = array<i64: 128, 256>}, {pipeline_mode = #tpu.pipeline_mode<synchronous>, transform_indices = @transform_6, window_bounds = array<i64: 1, 256>}, {pipeline_mode = #tpu.pipeline_mode<synchronous>, transform_indices = @transform_7, window_bounds = array<i64: 8, 16, 128>}, {pipeline_mode = #tpu.pipeline_mode<synchronous>, transform_indices = @transform_8, window_bounds = array<i64: 1, 128>}, {pipeline_mode = #tpu.pipeline_mode<synchronous>, transform_indices = @transform_9, window_bounds = array<i64: 2, 128>}, {transform_indices = @transform_10, window_bounds = array<i64: 1, 32, 128>}]} {
    %c0 = arith.constant 0 : index
    %c0_0 = arith.constant 0 : index
    %c0_1 = arith.constant 0 : index
    %0 = vector.load %arg2[%c0, %c0_0, %c0_1] : memref<1x32x128xf32, #tpu.memory_space<vmem>>, vector<1x32x128xf32>
    %1 = vector.shape_cast %0 : vector<1x32x128xf32> to vector<32x128xf32>
    %c0_2 = arith.constant 0 : index
    %c0_3 = arith.constant 0 : index
    %c0_4 = arith.constant 0 : index
    %2 = vector.load %arg3[%c0_2, %c0_3, %c0_4] : memref<1x32x128xf32, #tpu.memory_space<vmem>>, vector<1x32x128xf32>
    %3 = vector.shape_cast %2 : vector<1x32x128xf32> to vector<32x128xf32>
    %c0_5 = arith.constant 0 : index
    %c0_6 = arith.constant 0 : index
    %c0_7 = arith.constant 0 : index
    %4 = vector.load %arg4[%c0_5, %c0_6, %c0_7] : memref<1x32x32xbf16, #tpu.memory_space<vmem>>, vector<1x32x32xbf16>
    %5 = vector.shape_cast %4 : vector<1x32x32xbf16> to vector<32x32xbf16>
    %6 = arith.extf %5 : vector<32x32xbf16> to vector<32x32xf32>
    %c0_8 = arith.constant 0 : index
    %c0_9 = arith.constant 0 : index
    %7 = vector.load %arg5[%c0_8, %c0_9] : memref<128x128xf32, #tpu.memory_space<vmem>>, vector<128x128xf32>
    %cst = arith.constant dense<0.000000e+00> : vector<32x128xf32>
    %8 = tpu.matmul %1, %7, %cst {dimension_numbers = #tpu.dot_dimension_numbers<[1], [0], [0], [1], [0, 0, 1, 1], [], []>} : vector<32x128xf32>, vector<128x128xf32>, vector<32x128xf32> -> vector<32x128xf32>
    %c0_10 = arith.constant 0 : index
    %c0_11 = arith.constant 0 : index
    %9 = vector.load %arg6[%c0_10, %c0_11] : memref<1x128xf32, #tpu.memory_space<vmem>>, vector<1x128xf32>
    %10 = vector.broadcast %9 : vector<1x128xf32> to vector<32x128xf32>
    %11 = arith.addf %8, %10 : vector<32x128xf32>
    %c0_12 = arith.constant 0 : index
    %c0_13 = arith.constant 0 : index
    %12 = vector.load %arg7[%c0_12, %c0_13] : memref<128x256xf32, #tpu.memory_space<vmem>>, vector<128x256xf32>
    %cst_14 = arith.constant dense<0.000000e+00> : vector<32x256xf32>
    %13 = tpu.matmul %3, %12, %cst_14 {dimension_numbers = #tpu.dot_dimension_numbers<[1], [0], [0], [1], [0, 0, 1, 1], [], []>} : vector<32x128xf32>, vector<128x256xf32>, vector<32x256xf32> -> vector<32x256xf32>
    %c0_15 = arith.constant 0 : index
    %c0_16 = arith.constant 0 : index
    %14 = vector.load %arg8[%c0_15, %c0_16] : memref<1x256xf32, #tpu.memory_space<vmem>>, vector<1x256xf32>
    %15 = vector.broadcast %14 : vector<1x256xf32> to vector<32x256xf32>
    %16 = arith.addf %13, %15 : vector<32x256xf32>
    %17 = vector.extract_strided_slice %16 {offsets = [0, 0], sizes = [32, 128], strides = [1, 1]} : vector<32x256xf32> to vector<32x128xf32>
    %18 = vector.extract_strided_slice %16 {offsets = [0, 128], sizes = [32, 128], strides = [1, 1]} : vector<32x256xf32> to vector<32x128xf32>
    %19 = vector.shape_cast %11 : vector<32x128xf32> to vector<32x8x16xf32>
    %20 = tpu.transpose %19, [1, 0, 2] : vector<32x8x16xf32> -> vector<8x32x16xf32>
    %21 = vector.shape_cast %17 : vector<32x128xf32> to vector<32x8x16xf32>
    %22 = tpu.transpose %21, [1, 0, 2] : vector<32x8x16xf32> -> vector<8x32x16xf32>
    %23 = vector.shape_cast %18 : vector<32x128xf32> to vector<32x8x16xf32>
    %24 = tpu.transpose %23, [1, 0, 2] : vector<32x8x16xf32> -> vector<8x32x16xf32>
    "tpu.trace_start"() <{level = 10 : i32, message = "hqd,hkd->hqk"}> : () -> ()
    %cst_17 = arith.constant dense<0.000000e+00> : vector<8x32x32xf32>
    %25 = tpu.matmul %20, %22, %cst_17 {dimension_numbers = #tpu.dot_dimension_numbers<[2], [2], [1], [1], [0, 0, 0, 1, 1, 1], [0], [0]>} : vector<8x32x16xf32>, vector<8x32x16xf32>, vector<8x32x32xf32> -> vector<8x32x32xf32>
    "tpu.trace_stop"() : () -> ()
    %26 = vector.shape_cast %6 : vector<32x32xf32> to vector<1x32x32xf32>
    %27 = vector.broadcast %26 : vector<1x32x32xf32> to vector<8x32x32xf32>
    %28 = arith.addf %25, %27 : vector<8x32x32xf32>
    %cst_18 = arith.constant dense<0xFF800000> : vector<8x32xf32>
    %29 = vector.multi_reduction <maximumf>, %28, %cst_18 [2] : vector<8x32x32xf32> to vector<8x32xf32>
    %30 = vector.shape_cast %29 : vector<8x32xf32> to vector<8x32x1xf32>
    %31 = vector.broadcast %30 : vector<8x32x1xf32> to vector<8x32x32xf32>
    %32 = arith.subf %28, %31 : vector<8x32x32xf32>
    %33 = math.exp %32 : vector<8x32x32xf32>
    %cst_19 = arith.constant dense<0.000000e+00> : vector<8x32xf32>
    %34 = vector.multi_reduction <add>, %33, %cst_19 [2] : vector<8x32x32xf32> to vector<8x32xf32>
    %35 = vector.shape_cast %34 : vector<8x32xf32> to vector<8x32x1xf32>
    %36 = tpu.reciprocal %35 {approx = true} : vector<8x32x1xf32> -> vector<8x32x1xf32>
    %37 = vector.broadcast %36 : vector<8x32x1xf32> to vector<8x32x32xf32>
    %38 = arith.mulf %33, %37 : vector<8x32x32xf32>
    "tpu.trace_start"() <{level = 10 : i32, message = "hqk,hkd->hqd"}> : () -> ()
    %cst_20 = arith.constant dense<0.000000e+00> : vector<8x32x16xf32>
    %39 = tpu.matmul %38, %24, %cst_20 {dimension_numbers = #tpu.dot_dimension_numbers<[2], [1], [1], [2], [0, 0, 0, 1, 1, 2], [0], [0]>} : vector<8x32x32xf32>, vector<8x32x16xf32>, vector<8x32x16xf32> -> vector<8x32x16xf32>
    "tpu.trace_stop"() : () -> ()
    %c0_21 = arith.constant 0 : index
    %c0_22 = arith.constant 0 : index
    %c0_23 = arith.constant 0 : index
    %40 = vector.load %arg9[%c0_21, %c0_22, %c0_23] : memref<8x16x128xf32, #tpu.memory_space<vmem>>, vector<8x16x128xf32>
    "tpu.trace_start"() <{level = 10 : i32, message = "hqd,hdf->hqf"}> : () -> ()
    %cst_24 = arith.constant dense<0.000000e+00> : vector<8x32x128xf32>
    %41 = tpu.matmul %39, %40, %cst_24 {dimension_numbers = #tpu.dot_dimension_numbers<[2], [1], [1], [2], [0, 0, 0, 1, 1, 2], [0], [0]>} : vector<8x32x16xf32>, vector<8x16x128xf32>, vector<8x32x128xf32> -> vector<8x32x128xf32>
    "tpu.trace_stop"() : () -> ()
    %cst_25 = arith.constant dense<0.000000e+00> : vector<32x128xf32>
    %42 = vector.multi_reduction <add>, %41, %cst_25 [0] : vector<8x32x128xf32> to vector<32x128xf32>
    %c0_26 = arith.constant 0 : index
    %c0_27 = arith.constant 0 : index
    %43 = vector.load %arg10[%c0_26, %c0_27] : memref<1x128xf32, #tpu.memory_space<vmem>>, vector<1x128xf32>
    %44 = vector.broadcast %43 : vector<1x128xf32> to vector<32x128xf32>
    %45 = arith.addf %42, %44 : vector<32x128xf32>
    %46 = arith.addf %45, %1 : vector<32x128xf32>
    %cst_28 = arith.constant dense<0.000000e+00> : vector<32xf32>
    %47 = vector.multi_reduction <add>, %46, %cst_28 [1] : vector<32x128xf32> to vector<32xf32>
    %48 = vector.shape_cast %47 : vector<32xf32> to vector<32x1xf32>
    %cst_29 = arith.constant 1.280000e+02 : f32
    %49 = vector.broadcast %cst_29 : f32 to vector<32x1xf32>
    %50 = arith.divf %48, %49 : vector<32x1xf32>
    %51 = vector.broadcast %50 : vector<32x1xf32> to vector<32x128xf32>
    %52 = arith.subf %46, %51 : vector<32x128xf32>
    %53 = arith.mulf %52, %52 : vector<32x128xf32>
    %cst_30 = arith.constant dense<0.000000e+00> : vector<32xf32>
    %54 = vector.multi_reduction <add>, %53, %cst_30 [1] : vector<32x128xf32> to vector<32xf32>
    %55 = vector.shape_cast %54 : vector<32xf32> to vector<32x1xf32>
    %cst_31 = arith.constant 0.00787401571 : f32
    %56 = vector.broadcast %cst_31 : f32 to vector<32x1xf32>
    %57 = arith.mulf %55, %56 : vector<32x1xf32>
    %cst_32 = arith.constant 9.99999993E-9 : f32
    %58 = vector.broadcast %cst_32 : f32 to vector<32x1xf32>
    %59 = arith.addf %57, %58 : vector<32x1xf32>
    %60 = math.rsqrt %59 : vector<32x1xf32>
    %61 = vector.broadcast %60 : vector<32x1xf32> to vector<32x128xf32>
    %62 = arith.mulf %52, %61 : vector<32x128xf32>
    %c0_33 = arith.constant 0 : index
    %c0_34 = arith.constant 0 : index
    %63 = vector.load %arg11[%c0_33, %c0_34] : memref<2x128xf32, #tpu.memory_space<vmem>>, vector<1x128xf32>
    %64 = vector.broadcast %63 : vector<1x128xf32> to vector<32x128xf32>
    %65 = arith.mulf %64, %62 : vector<32x128xf32>
    %c1 = arith.constant 1 : index
    %c0_35 = arith.constant 0 : index
    %66 = vector.load %arg11[%c1, %c0_35] : memref<2x128xf32, #tpu.memory_space<vmem>>, vector<1x128xf32>
    %67 = vector.broadcast %66 : vector<1x128xf32> to vector<32x128xf32>
    %68 = arith.addf %65, %67 : vector<32x128xf32>
    %c0_36 = arith.constant 0 : index
    %c0_37 = arith.constant 0 : index
    %c0_38 = arith.constant 0 : index
    %69 = vector.load %arg12[%c0_36, %c0_37, %c0_38] : memref<1x32x128xf32, #tpu.memory_space<vmem>>, vector<1x32x128xf32>
    %70 = vector.shape_cast %69 : vector<1x32x128xf32> to vector<32x128xf32>
    %71 = vector.shape_cast %68 : vector<32x128xf32> to vector<1x32x128xf32>
    tpu.vector_store %arg12[%c0_36, %c0_37, %c0_38], %71 {strides = array<i32>} : memref<1x32x128xf32, #tpu.memory_space<vmem>>, vector<1x32x128xf32>,
    return
  }
  func.func @transform_0(%arg0: i32, %arg1: i32) -> (i32, i32, i32) {
    %c0_i32 = arith.constant 0 : i32
    %c0_i32_0 = arith.constant 0 : i32
    return %arg0, %arg1, %c0_i32 : i32, i32, i32
  }
  func.func @transform_1(%arg0: i32, %arg1: i32) -> (i32, i32, i32) {
    %c0_i32 = arith.constant 0 : i32
    %c0_i32_0 = arith.constant 0 : i32
    %c0_i32_1 = arith.constant 0 : i32
    return %arg0, %c0_i32, %c0_i32_0 : i32, i32, i32
  }
  func.func @transform_2(%arg0: i32, %arg1: i32) -> (i32, i32, i32) {
    %c0_i32 = arith.constant 0 : i32
    %c0_i32_0 = arith.constant 0 : i32
    return %arg0, %arg1, %c0_i32 : i32, i32, i32
  }
  func.func @transform_3(%arg0: i32, %arg1: i32) -> (i32, i32) {
    %c0_i32 = arith.constant 0 : i32
    %c0_i32_0 = arith.constant 0 : i32
    %c0_i32_1 = arith.constant 0 : i32
    return %c0_i32, %c0_i32_0 : i32, i32
  }
  func.func @transform_4(%arg0: i32, %arg1: i32) -> (i32, i32) {
    %c0_i32 = arith.constant 0 : i32
    %c0_i32_0 = arith.constant 0 : i32
    %c0_i32_1 = arith.constant 0 : i32
    return %c0_i32, %c0_i32_0 : i32, i32
  }
  func.func @transform_5(%arg0: i32, %arg1: i32) -> (i32, i32) {
    %c0_i32 = arith.constant 0 : i32
    %c0_i32_0 = arith.constant 0 : i32
    %c0_i32_1 = arith.constant 0 : i32
    return %c0_i32, %c0_i32_0 : i32, i32
  }
  func.func @transform_6(%arg0: i32, %arg1: i32) -> (i32, i32) {
    %c0_i32 = arith.constant 0 : i32
    %c0_i32_0 = arith.constant 0 : i32
    %c0_i32_1 = arith.constant 0 : i32
    return %c0_i32, %c0_i32_0 : i32, i32
  }
  func.func @transform_7(%arg0: i32, %arg1: i32) -> (i32, i32, i32) {
    %c0_i32 = arith.constant 0 : i32
    %c0_i32_0 = arith.constant 0 : i32
    %c0_i32_1 = arith.constant 0 : i32
    %c0_i32_2 = arith.constant 0 : i32
    return %c0_i32, %c0_i32_0, %c0_i32_1 : i32, i32, i32
  }
  func.func @transform_8(%arg0: i32, %arg1: i32) -> (i32, i32) {
    %c0_i32 = arith.constant 0 : i32
    %c0_i32_0 = arith.constant 0 : i32
    %c0_i32_1 = arith.constant 0 : i32
    return %c0_i32, %c0_i32_0 : i32, i32
  }
  func.func @transform_9(%arg0: i32, %arg1: i32) -> (i32, i32) {
    %c0_i32 = arith.constant 0 : i32
    %c0_i32_0 = arith.constant 0 : i32
    %c0_i32_1 = arith.constant 0 : i32
    return %c0_i32, %c0_i32_0 : i32, i32
  }
  func.func @transform_10(%arg0: i32, %arg1: i32) -> (i32, i32, i32) {
    %c0_i32 = arith.constant 0 : i32
    %c0_i32_0 = arith.constant 0 : i32
    return %arg0, %arg1, %c0_i32 : i32, i32, i32
  }
}

</mosaic_0001>

<llo_original>
// kernel: tpu_custom_call.1
$region0: #{tpu_custom_call.1}
  #allocation0 [shape = 'u32[]', space=smem, size = 0x4, offset = 0x4, fixed_abs, tag = 'smem constant byte address 0x4 - core index']
  #allocation1 [shape = 'u32[144,128]{1,0:T(1,128)}', space=vmem, size = 0x12000, scoped, tag = 'internal scratch']
  %s0 = inlined_call_operand.hbm [shape: f32[2,32,128], index: 0, kind: input, shape index: {}]
  %s1 = inlined_call_operand.hbm [shape: f32[2,32,128], index: 1, kind: input, shape index: {}]
  %s2 = inlined_call_operand.hbm [shape: bf16[2,32,32], index: 2, kind: input, shape index: {}]
  %s3 = inlined_call_operand.hbm [shape: f32[128,128], index: 3, kind: input, shape index: {}]
  %s4 = inlined_call_operand.vmem [shape: f32[1,128], index: 4, kind: input, shape index: {}]
  %s5 = inlined_call_operand.hbm [shape: f32[128,256], index: 5, kind: input, shape index: {}]
  %s6 = inlined_call_operand.vmem [shape: f32[1,256], index: 6, kind: input, shape index: {}]
  %s7 = inlined_call_operand.hbm [shape: f32[8,16,128], index: 7, kind: input, shape index: {}]
  %s8 = inlined_call_operand.vmem [shape: f32[1,128], index: 8, kind: input, shape index: {}]
  %s9 = inlined_call_operand.vmem [shape: f32[2,128], index: 9, kind: input, shape index: {}]
  %s10 = inlined_call_operand.hbm [shape: f32[2,32,128], index: 10, kind: output, shape index: {}]
  %s11 = sld [smem:[#allocation0]]
  $region97: #{tpu_custom_call.1} parent=0
    _
  %s13 = ssub.s32 1, %s11
  %s14 = scalar_select 0, %s13, %s11
  $region1: #{tpu_custom_call.1} parent=0
    #allocation2 [shape = 'u8[32768]{0}', space=vmem, size = 0x8000, scoped, tag = 'input window, operand 0']
    #allocation3 [shape = 's32[2]{0}', space=sflag, size = 0x8, scoped, tag = 'scoped memory for tpu_custom_call.1']
    #allocation4 [shape = 's32[2]{0}', space=sflag, size = 0x8, scoped, tag = 'scoped memory for tpu_custom_call.1']
    #allocation5 [shape = 'u8[32768]{0}', space=vmem, size = 0x8000, scoped, tag = 'input window, operand 1']
    #allocation6 [shape = 's32[2]{0}', space=sflag, size = 0x8, scoped, tag = 'scoped memory for tpu_custom_call.1']
    #allocation7 [shape = 'u8[16384]{0}', space=vmem, size = 0x4000, scoped, tag = 'input window, operand 2']
    #allocation8 [shape = 'u8[65536]{0}', space=vmem, size = 0x10000, scoped, tag = 'input window, operand 3, single buffered']
    #allocation9 [shape = 's32[1]{0}', space=sflag, size = 0x4, scoped, tag = 'scoped memory for tpu_custom_call.1']
    #allocation10 [shape = 'u8[131072]{0}', space=vmem, size = 0x20000, scoped, tag = 'input window, operand 5, single buffered']
    #allocation11 [shape = 'u8[65536]{0}', space=vmem, size = 0x10000, scoped, tag = 'input window, operand 7, single buffered']
    #allocation12 [shape = 's32[1]{0}', space=sflag, size = 0x4, scoped, tag = 'scoped memory for tpu_custom_call.1']
    #allocation13 [shape = 'u8[32768]{0}', space=vmem, size = 0x8000, scoped, tag = 'output window, operand 0']
    %15 = vsyncpa [#allocation3], 0
    %s16 = scalar_lea.sflag [#allocation3], 1
    %17 = vsyncpa %s16, 0
    %18 = vsyncpa [#allocation6], 0
    %s19 = scalar_lea.sflag [#allocation6], 1
    %20 = vsyncpa %s19, 0
    %21 = vsyncpa [#allocation9], 0
    %22 = vsyncpa [#allocation12], 0
    %23 = vsyncpa [#allocation4], 0
    %s24 = scalar_lea.sflag [#allocation4], 1
    %25 = vsyncpa %s24, 0
    loop: start=0, step=1, limit=4
    $region2: #{tpu_custom_call.1} parent=1 // loop_pre_header
      _
    $region3: #{tpu_custom_call.1} parent=1 // loop_header
      %s27 = sphi 0, %s31
      %p28 = scmp.ge.s32.totalorder %s27, 4
      %s34 = sphi 0, %s46
      %s35 = sphi 0, %s42
      %s36 = sphi 0, %s34
      %s37 = sphi 0, %s35
      %s38 = sphi 0, %s36
      %s39 = sphi 0, %s37
      %s51 = sphi 0, %s53
      %s54 = sphi 0, %s51
      %s55 = sphi 0, %s54
      %s71 = sphi 0, %s55
      %s77 = sphi 0, %s79
      %s80 = sphi 0, %s77
      %s81 = sphi 0, %s80
      %s97 = sphi 0, %s81
      %s105 = sphi 0, %s107
      %s108 = sphi 0, %s105
      %s109 = sphi 0, %s108
      %s125 = sphi 0, %s109
      %s129 = sphi 0, %s129
      %s131 = sphi 0, %s129
      %s132 = sphi 0, %s131
      %s146 = sphi 0, %s132
      %s150 = sphi 0, %s150
      %s152 = sphi 0, %s150
      %s153 = sphi 0, %s152
      %s167 = sphi 0, %s153
      %s171 = sphi 0, %s171
      %s173 = sphi 0, %s171
      %s174 = sphi 0, %s173
      %s188 = sphi 0, %s174
      %s192 = sphi 0, %s192
      %s194 = sphi 0, %s192
      %s195 = sphi 0, %s194
      %s209 = sphi 0, %s195
      %s213 = sphi 0, %s213
      %s215 = sphi 0, %s213
      %s216 = sphi 0, %s215
      %s230 = sphi 0, %s216
      %s234 = sphi 0, %s234
      %s236 = sphi 0, %s234
      %s237 = sphi 0, %s236
      %s251 = sphi 0, %s237
      %s255 = sphi 0, %s255
      %s257 = sphi 0, %s255
      %s258 = sphi 0, %s257
      %s272 = sphi 0, %s258
      %s280 = sphi 0, %s282
      %s283 = sphi 0, %s280
      %s284 = sphi 0, %s283
      %s300 = sphi 0, %s284
    $region4: #{tpu_custom_call.1} parent=1 // loop_header_branch
      %30 = sbr.rel (%p28) target = $region8
    $region5: #{tpu_custom_call.1} parent=1 // loop_body
      %s32 = ssub.s32 %s27, 1
      %s33 = ssub.s32 %s27, 2
      %s40 = sadd.s32 1, %s35
      %p41 = scmp.ge.s32.totalorder %s40, 1
      %s42 = scalar_select %p41, 0, %s40
      %s43 = sadd.s32 1, %s34
      %s44 = scalar_select %p41, %s43, %s34
      %p45 = scmp.ge.s32.totalorder %s44, 2
      %s46 = scalar_select %p45, 0, %s44
      %s47 = ssub.s32 %s34, %s46
      %s48 = ssub.s32 %s35, %s42
      %s49 = sor.u32 %s47, %s48
      %p50 = scmp.eq.s32.totalorder %s49, 0
      %s52 = sadd.s32 %s51, 1
      %s53 = scalar_select %p50, %s51, %s52
      %p56 = pneg %p50
      %p57 = scmp.eq.s32.totalorder %s27, 1
      %p58 = por %p56, %p57
      %p59 = scmp.ne.s32.totalorder %s51, %s54
      %p60 = scmp.eq.s32.totalorder %s27, 0
      %p61 = por %p59, %p60
      %p62 = scmp.ne.s32.totalorder %s51, %s54
      %p63 = scmp.eq.s32.totalorder %s32, 1
      %p64 = por %p62, %p63
      %p65 = scmp.ne.s32.totalorder %s54, %s55
      %p66 = scmp.eq.s32.totalorder %s32, 0
      %p67 = por %p65, %p66
      %p68 = scmp.ne.s32.totalorder %s54, %s55
      %p69 = scmp.eq.s32.totalorder %s33, 1
      %p70 = por %p68, %p69
      %p72 = scmp.ne.s32.totalorder %s55, %s71
      %p73 = scmp.eq.s32.totalorder %s33, 0
      %p74 = por %p72, %p73
      %s75 = ssub.s32 %s34, %s46
      %p76 = scmp.eq.s32.totalorder %s75, 0
      %s78 = sadd.s32 %s77, 1
      %s79 = scalar_select %p76, %s77, %s78
      %p82 = pneg %p76
      %p83 = scmp.eq.s32.totalorder %s27, 1
      %p84 = por %p82, %p83
      %p85 = scmp.ne.s32.totalorder %s77, %s80
      %p86 = scmp.eq.s32.totalorder %s27, 0
      %p87 = por %p85, %p86
      %p88 = scmp.ne.s32.totalorder %s77, %s80
      %p89 = scmp.eq.s32.totalorder %s32, 1
      %p90 = por %p88, %p89
      %p91 = scmp.ne.s32.totalorder %s80, %s81
      %p92 = scmp.eq.s32.totalorder %s32, 0
      %p93 = por %p91, %p92
      %p94 = scmp.ne.s32.totalorder %s80, %s81
      %p95 = scmp.eq.s32.totalorder %s33, 1
      %p96 = por %p94, %p95
      %p98 = scmp.ne.s32.totalorder %s81, %s97
      %p99 = scmp.eq.s32.totalorder %s33, 0
      %p100 = por %p98, %p99
      %s101 = ssub.s32 %s34, %s46
      %s102 = ssub.s32 %s35, %s42
      %s103 = sor.u32 %s101, %s102
      %p104 = scmp.eq.s32.totalorder %s103, 0
      %s106 = sadd.s32 %s105, 1
      %s107 = scalar_select %p104, %s105, %s106
      %p110 = pneg %p104
      %p111 = scmp.eq.s32.totalorder %s27, 1
      %p112 = por %p110, %p111
      %p113 = scmp.ne.s32.totalorder %s105, %s108
      %p114 = scmp.eq.s32.totalorder %s27, 0
      %p115 = por %p113, %p114
      %p116 = scmp.ne.s32.totalorder %s105, %s108
      %p117 = scmp.eq.s32.totalorder %s32, 1
      %p118 = por %p116, %p117
      %p119 = scmp.ne.s32.totalorder %s108, %s109
      %p120 = scmp.eq.s32.totalorder %s32, 0
      %p121 = por %p119, %p120
      %p122 = scmp.ne.s32.totalorder %s108, %s109
      %p123 = scmp.eq.s32.totalorder %s33, 1
      %p124 = por %p122, %p123
      %p126 = scmp.ne.s32.totalorder %s109, %s125
      %p127 = scmp.eq.s32.totalorder %s33, 0
      %p128 = por %p126, %p127
      %s130 = sadd.s32 %s129, 1
      %p133 = scmp.eq.s32.totalorder %s27, 1
      %p134 = scmp.ne.s32.totalorder %s129, %s131
      %p135 = scmp.eq.s32.totalorder %s27, 0
      %p136 = por %p134, %p135
      %p137 = scmp.ne.s32.totalorder %s129, %s131
      %p138 = scmp.eq.s32.totalorder %s32, 1
      %p139 = por %p137, %p138
      %p140 = scmp.ne.s32.totalorder %s131, %s132
      %p141 = scmp.eq.s32.totalorder %s32, 0
      %p142 = por %p140, %p141
      %p143 = scmp.ne.s32.totalorder %s131, %s132
      %p144 = scmp.eq.s32.totalorder %s33, 1
      %p145 = por %p143, %p144
      %p147 = scmp.ne.s32.totalorder %s132, %s146
      %p148 = scmp.eq.s32.totalorder %s33, 0
      %p149 = por %p147, %p148
      %s151 = sadd.s32 %s150, 1
      %p154 = scmp.eq.s32.totalorder %s27, 1
      %p155 = scmp.ne.s32.totalorder %s150, %s152
      %p156 = scmp.eq.s32.totalorder %s27, 0
      %p157 = por %p155, %p156
      %p158 = scmp.ne.s32.totalorder %s150, %s152
      %p159 = scmp.eq.s32.totalorder %s32, 1
      %p160 = por %p158, %p159
      %p161 = scmp.ne.s32.totalorder %s152, %s153
      %p162 = scmp.eq.s32.totalorder %s32, 0
      %p163 = por %p161, %p162
      %p164 = scmp.ne.s32.totalorder %s152, %s153
      %p165 = scmp.eq.s32.totalorder %s33, 1
      %p166 = por %p164, %p165
      %p168 = scmp.ne.s32.totalorder %s153, %s167
      %p169 = scmp.eq.s32.totalorder %s33, 0
      %p170 = por %p168, %p169
      %s172 = sadd.s32 %s171, 1
      %p175 = scmp.eq.s32.totalorder %s27, 1
      %p176 = scmp.ne.s32.totalorder %s171, %s173
      %p177 = scmp.eq.s32.totalorder %s27, 0
      %p178 = por %p176, %p177
      %p179 = scmp.ne.s32.totalorder %s171, %s173
      %p180 = scmp.eq.s32.totalorder %s32, 1
      %p181 = por %p179, %p180
      %p182 = scmp.ne.s32.totalorder %s173, %s174
      %p183 = scmp.eq.s32.totalorder %s32, 0
      %p184 = por %p182, %p183
      %p185 = scmp.ne.s32.totalorder %s173, %s174
      %p186 = scmp.eq.s32.totalorder %s33, 1
      %p187 = por %p185, %p186
      %p189 = scmp.ne.s32.totalorder %s174, %s188
      %p190 = scmp.eq.s32.totalorder %s33, 0
      %p191 = por %p189, %p190
      %s193 = sadd.s32 %s192, 1
      %p196 = scmp.eq.s32.totalorder %s27, 1
      %p197 = scmp.ne.s32.totalorder %s192, %s194
      %p198 = scmp.eq.s32.totalorder %s27, 0
      %p199 = por %p197, %p198
      %p200 = scmp.ne.s32.totalorder %s192, %s194
      %p201 = scmp.eq.s32.totalorder %s32, 1
      %p202 = por %p200, %p201
      %p203 = scmp.ne.s32.totalorder %s194, %s195
      %p204 = scmp.eq.s32.totalorder %s32, 0
      %p205 = por %p203, %p204
      %p206 = scmp.ne.s32.totalorder %s194, %s195
      %p207 = scmp.eq.s32.totalorder %s33, 1
      %p208 = por %p206, %p207
      %p210 = scmp.ne.s32.totalorder %s195, %s209
      %p211 = scmp.eq.s32.totalorder %s33, 0
      %p212 = por %p210, %p211
      %s214 = sadd.s32 %s213, 1
      %p217 = scmp.eq.s32.totalorder %s27, 1
      %p218 = scmp.ne.s32.totalorder %s213, %s215
      %p219 = scmp.eq.s32.totalorder %s27, 0
      %p220 = por %p218, %p219
      %p221 = scmp.ne.s32.totalorder %s213, %s215
      %p222 = scmp.eq.s32.totalorder %s32, 1
      %p223 = por %p221, %p222
      %p224 = scmp.ne.s32.totalorder %s215, %s216
      %p225 = scmp.eq.s32.totalorder %s32, 0
      %p226 = por %p224, %p225
      %p227 = scmp.ne.s32.totalorder %s215, %s216
      %p228 = scmp.eq.s32.totalorder %s33, 1
      %p229 = por %p227, %p228
      %p231 = scmp.ne.s32.totalorder %s216, %s230
      %p232 = scmp.eq.s32.totalorder %s33, 0
      %p233 = por %p231, %p232
      %s235 = sadd.s32 %s234, 1
      %p238 = scmp.eq.s32.totalorder %s27, 1
      %p239 = scmp.ne.s32.totalorder %s234, %s236
      %p240 = scmp.eq.s32.totalorder %s27, 0
      %p241 = por %p239, %p240
      %p242 = scmp.ne.s32.totalorder %s234, %s236
      %p243 = scmp.eq.s32.totalorder %s32, 1
      %p244 = por %p242, %p243
      %p245 = scmp.ne.s32.totalorder %s236, %s237
      %p246 = scmp.eq.s32.totalorder %s32, 0
      %p247 = por %p245, %p246
      %p248 = scmp.ne.s32.totalorder %s236, %s237
      %p249 = scmp.eq.s32.totalorder %s33, 1
      %p250 = por %p248, %p249
      %p252 = scmp.ne.s32.totalorder %s237, %s251
      %p253 = scmp.eq.s32.totalorder %s33, 0
      %p254 = por %p252, %p253
      %s256 = sadd.s32 %s255, 1
      %p259 = scmp.eq.s32.totalorder %s27, 1
      %p260 = scmp.ne.s32.totalorder %s255, %s257
      %p261 = scmp.eq.s32.totalorder %s27, 0
      %p262 = por %p260, %p261
      %p263 = scmp.ne.s32.totalorder %s255, %s257
      %p264 = scmp.eq.s32.totalorder %s32, 1
      %p265 = por %p263, %p264
      %p266 = scmp.ne.s32.totalorder %s257, %s258
      %p267 = scmp.eq.s32.totalorder %s32, 0
      %p268 = por %p266, %p267
      %p269 = scmp.ne.s32.totalorder %s257, %s258
      %p270 = scmp.eq.s32.totalorder %s33, 1
      %p271 = por %p269, %p270
      %p273 = scmp.ne.s32.totalorder %s258, %s272
      %p274 = scmp.eq.s32.totalorder %s33, 0
      %p275 = por %p273, %p274
      %s276 = ssub.s32 %s34, %s46
      %s277 = ssub.s32 %s35, %s42
      %s278 = sor.u32 %s276, %s277
      %p279 = scmp.eq.s32.totalorder %s278, 0
      %s281 = sadd.s32 %s280, 1
      %s282 = scalar_select %p279, %s280, %s281
      %p285 = pneg %p279
      %p286 = scmp.eq.s32.totalorder %s27, 1
      %p287 = por %p285, %p286
      %p288 = scmp.ne.s32.totalorder %s280, %s283
      %p289 = scmp.eq.s32.totalorder %s27, 0
      %p290 = por %p288, %p289
      %p291 = scmp.ne.s32.totalorder %s280, %s283
      %p292 = scmp.eq.s32.totalorder %s32, 1
      %p293 = por %p291, %p292
      %p294 = scmp.ne.s32.totalorder %s283, %s284
      %p295 = scmp.eq.s32.totalorder %s32, 0
      %p296 = por %p294, %p295
      %p297 = scmp.ne.s32.totalorder %s283, %s284
      %p298 = scmp.eq.s32.totalorder %s33, 1
      %p299 = por %p297, %p298
      %p301 = scmp.ne.s32.totalorder %s284, %s300
      %p302 = scmp.eq.s32.totalorder %s33, 0
      %p303 = por %p301, %p302
      %p304 = scmp.le.s32.totalorder 1, %s27
      %p305 = scmp.lt.s32.totalorder %s27, 3
      %p306 = pnand %p304, %p305
      %p307 = pneg %p306
      // Predicated region
      $region9: #{tpu_custom_call.1} parent=5 // pred_check
        _
      $region10: #{tpu_custom_call.1} parent=5 // pred_check_branch
        %309 = sbr.rel (%p306) target = $region12
      $region11: #{tpu_custom_call.1} parent=5 // pred_region
        %s310 = ssub.s32 %s27, 1
        // Predicated region
        $region13: #{tpu_custom_call.1} parent=11 // pred_check
          %p311 = pneg %p142
        $region14: #{tpu_custom_call.1} parent=11 // pred_check_branch
          %313 = sbr.rel (%p311) target = $region16
        $region15: #{tpu_custom_call.1} parent=11 // pred_region
          %s315 = ssub.s32 2048, 2048
          %316 = vsyncadd [#allocation9], %s315
          %s317 = sshll.u32 [#allocation8], 4
          %s318 = int_to_ptr.vmem [resolvable:$true] %s317
          %323 = dma.hbm_to_vmem [thread:$0]  %s3, 2048, %s318, [#allocation9], 128, 128, 8
        $region16: #{tpu_custom_call.1} parent=11 // pred_fallthru
          _
        // Predicated region
        $region17: #{tpu_custom_call.1} parent=11 // pred_check
          %p324 = pneg %p163
        $region18: #{tpu_custom_call.1} parent=11 // pred_check_branch
          %326 = sbr.rel (%p324) target = $region20
        $region19: #{tpu_custom_call.1} parent=11 // pred_region
          _
        $region20: #{tpu_custom_call.1} parent=11 // pred_fallthru
          _
        // Predicated region
        $region21: #{tpu_custom_call.1} parent=11 // pred_check
          %p327 = pneg %p184
        $region22: #{tpu_custom_call.1} parent=11 // pred_check_branch
          %329 = sbr.rel (%p327) target = $region24
        $region23: #{tpu_custom_call.1} parent=11 // pred_region
          %s331 = ssub.s32 4096, 4096
          %332 = vsyncadd [#allocation9], %s331
          %s333 = sshll.u32 [#allocation10], 4
          %s334 = int_to_ptr.vmem [resolvable:$true] %s333
          %339 = dma.hbm_to_vmem [thread:$0]  %s5, 4096, %s334, [#allocation9], 256, 256, 16
        $region24: #{tpu_custom_call.1} parent=11 // pred_fallthru
          _
        // Predicated region
        $region25: #{tpu_custom_call.1} parent=11 // pred_check
          %p340 = pneg %p205
        $region26: #{tpu_custom_call.1} parent=11 // pred_check_branch
          %342 = sbr.rel (%p340) target = $region28
        $region27: #{tpu_custom_call.1} parent=11 // pred_region
          _
        $region28: #{tpu_custom_call.1} parent=11 // pred_fallthru
          _
        // Predicated region
        $region29: #{tpu_custom_call.1} parent=11 // pred_check
          %p343 = pneg %p226
        $region30: #{tpu_custom_call.1} parent=11 // pred_check_branch
          %345 = sbr.rel (%p343) target = $region32
        $region31: #{tpu_custom_call.1} parent=11 // pred_region
          %s347 = ssub.s32 2048, 2048
          %348 = vsyncadd [#allocation12], %s347
          %s349 = sshll.u32 [#allocation11], 4
          %s350 = int_to_ptr.vmem [resolvable:$true] %s349
          %355 = dma.hbm_to_vmem [thread:$0]  %s7, 2048, %s350, [#allocation12], 128, 128, 8
        $region32: #{tpu_custom_call.1} parent=11 // pred_fallthru
          _
        // Predicated region
        $region33: #{tpu_custom_call.1} parent=11 // pred_check
          %p356 = pneg %p247
        $region34: #{tpu_custom_call.1} parent=11 // pred_check_branch
          %358 = sbr.rel (%p356) target = $region36
        $region35: #{tpu_custom_call.1} parent=11 // pred_region
          _
        $region36: #{tpu_custom_call.1} parent=11 // pred_fallthru
          _
        // Predicated region
        $region37: #{tpu_custom_call.1} parent=11 // pred_check
          %p359 = pneg %p268
        $region38: #{tpu_custom_call.1} parent=11 // pred_check_branch
          %361 = sbr.rel (%p359) target = $region40
        $region39: #{tpu_custom_call.1} parent=11 // pred_region
          _
        $region40: #{tpu_custom_call.1} parent=11 // pred_fallthru
          _
      $region12: #{tpu_custom_call.1} parent=5 // pred_fallthru
        _
      %p362 = scmp.lt.s32.totalorder %s27, 2
      // Predicated region
      $region41: #{tpu_custom_call.1} parent=5 // pred_check
        %p363 = pneg %p362
      $region42: #{tpu_custom_call.1} parent=5 // pred_check_branch
        %365 = sbr.rel (%p363) target = $region44
      $region43: #{tpu_custom_call.1} parent=5 // pred_region
        // Predicated region
        $region45: #{tpu_custom_call.1} parent=43 // pred_check
          %p366 = pneg %p61
        $region46: #{tpu_custom_call.1} parent=43 // pred_check_branch
          %368 = sbr.rel (%p366) target = $region48
        $region47: #{tpu_custom_call.1} parent=43 // pred_region
          %s369 = sand.u32 %s51, 1
          %s370 = scalar_lea.sflag [#allocation3], %s369
          %s371 = sand.u32 %s51, 1
          %s372 = smul.addr %s371, 32
          %s373 = scalar_lea.vmem [#allocation2], %s372
          %s374 = smul.u32 4, %s35
          %s376 = ssub.s32 512, 512
          %377 = vsyncadd %s370, %s376
          %s378 = smul.addr %s34, 4
          %s379 = sadd.s32 %s374, %s378
          %s380 = smul.addr %s379, 128
          %s381 = scalar_lea.hbm %s0, %s380
          %s382 = sshll.u32 %s373, 4
          %s383 = int_to_ptr.vmem [resolvable:$true] %s382
          %388 = dma.hbm_to_vmem [thread:$0]  %s381, 512, %s383, %s370, 128, 128, 8
        $region48: #{tpu_custom_call.1} parent=43 // pred_fallthru
          _
        // Predicated region
        $region49: #{tpu_custom_call.1} parent=43 // pred_check
          %p389 = pneg %p87
        $region50: #{tpu_custom_call.1} parent=43 // pred_check_branch
          %391 = sbr.rel (%p389) target = $region52
        $region51: #{tpu_custom_call.1} parent=43 // pred_region
          %s392 = sand.u32 %s27, 1
          %s393 = scalar_lea.sflag [#allocation6], %s392
          %s394 = sand.u32 %s77, 1
          %s395 = smul.addr %s394, 32
          %s396 = scalar_lea.vmem [#allocation5], %s395
          %s398 = ssub.s32 512, 512
          %399 = vsyncadd %s393, %s398
          %s400 = smul.addr %s34, 4
          %s401 = smul.addr %s400, 128
          %s402 = scalar_lea.hbm %s1, %s401
          %s403 = sshll.u32 %s396, 4
          %s404 = int_to_ptr.vmem [resolvable:$true] %s403
          %409 = dma.hbm_to_vmem [thread:$0]  %s402, 512, %s404, %s393, 128, 128, 8
        $region52: #{tpu_custom_call.1} parent=43 // pred_fallthru
          _
        // Predicated region
        $region53: #{tpu_custom_call.1} parent=43 // pred_check
          %p410 = pneg %p115
        $region54: #{tpu_custom_call.1} parent=43 // pred_check_branch
          %412 = sbr.rel (%p410) target = $region56
        $region55: #{tpu_custom_call.1} parent=43 // pred_region
          %s413 = sand.u32 %s27, 1
          %s414 = scalar_lea.sflag [#allocation6], %s413
          %s415 = sand.u32 %s105, 1
          %s416 = smul.addr %s415, 16
          %s417 = scalar_lea.vmem [#allocation7], %s416
          %s418 = smul.u32 4, %s35
          %s420 = ssub.s32 256, 256
          %421 = vsyncadd %s414, %s420
          %s422 = smul.addr %s34, 4
          %s423 = sadd.s32 %s418, %s422
          %s424 = smul.addr %s423, 64
          %s425 = scalar_lea.hbm %s2, %s424
          %s426 = sshll.u32 %s417, 4
          %s427 = int_to_ptr.vmem [resolvable:$true] %s426
          %432 = dma.hbm_to_vmem [thread:$0]  %s425, 256, %s427, %s414, 64, 64, 4
        $region56: #{tpu_custom_call.1} parent=43 // pred_fallthru
          _
      $region44: #{tpu_custom_call.1} parent=5 // pred_fallthru
        _
      %p433 = scmp.le.s32.totalorder 1, %s27
      %p434 = scmp.lt.s32.totalorder %s27, 3
      %p435 = pnand %p433, %p434
      %p436 = pneg %p435
      // Predicated region
      $region57: #{tpu_custom_call.1} parent=5 // pred_check
        _
      $region58: #{tpu_custom_call.1} parent=5 // pred_check_branch
        %438 = sbr.rel (%p435) target = $region60
      $region59: #{tpu_custom_call.1} parent=5 // pred_region
        %s439 = ssub.s32 %s27, 1
        %s440 = sand.u32 %s54, 1
        %s441 = scalar_lea.sflag [#allocation3], %s440
        %s442 = sand.u32 %s54, 1
        %s443 = smul.addr %s442, 32
        %s444 = scalar_lea.vmem [#allocation2], %s443
        // Predicated region
        $region61: #{tpu_custom_call.1} parent=59 // pred_check
          %p445 = pneg %p67
        $region62: #{tpu_custom_call.1} parent=59 // pred_check_branch
          %447 = sbr.rel (%p445) target = $region64
        $region63: #{tpu_custom_call.1} parent=59 // pred_region
          %448 = dma.done %s441, 512
        $region64: #{tpu_custom_call.1} parent=59 // pred_fallthru
          _
        %s449 = sand.u32 %s32, 1
        %s450 = scalar_lea.sflag [#allocation6], %s449
        %s451 = sand.u32 %s80, 1
        %s452 = smul.addr %s451, 32
        %s453 = scalar_lea.vmem [#allocation5], %s452
        // Predicated region
        $region65: #{tpu_custom_call.1} parent=59 // pred_check
          %p454 = pneg %p93
        $region66: #{tpu_custom_call.1} parent=59 // pred_check_branch
          %456 = sbr.rel (%p454) target = $region68
        $region67: #{tpu_custom_call.1} parent=59 // pred_region
          %457 = dma.done %s450, 512
        $region68: #{tpu_custom_call.1} parent=59 // pred_fallthru
          _
        %s458 = sand.u32 %s32, 1
        %s459 = scalar_lea.sflag [#allocation6], %s458
        %s460 = sand.u32 %s108, 1
        %s461 = smul.addr %s460, 16
        %s462 = scalar_lea.vmem [#allocation7], %s461
        // Predicated region
        $region69: #{tpu_custom_call.1} parent=59 // pred_check
          %p463 = pneg %p121
        $region70: #{tpu_custom_call.1} parent=59 // pred_check_branch
          %465 = sbr.rel (%p463) target = $region72
        $region71: #{tpu_custom_call.1} parent=59 // pred_region
          %466 = dma.done %s459, 256
        $region72: #{tpu_custom_call.1} parent=59 // pred_fallthru
          _
        // Predicated region
        $region73: #{tpu_custom_call.1} parent=59 // pred_check
          %p467 = pneg %p142
        $region74: #{tpu_custom_call.1} parent=59 // pred_check_branch
          %469 = sbr.rel (%p467) target = $region76
        $region75: #{tpu_custom_call.1} parent=59 // pred_region
          %470 = dma.done [#allocation9], 2048
        $region76: #{tpu_custom_call.1} parent=59 // pred_fallthru
          _
        // Predicated region
        $region77: #{tpu_custom_call.1} parent=59 // pred_check
          %p471 = pneg %p184
        $region78: #{tpu_custom_call.1} parent=59 // pred_check_branch
          %473 = sbr.rel (%p471) target = $region80
        $region79: #{tpu_custom_call.1} parent=59 // pred_region
          %474 = dma.done [#allocation9], 4096
        $region80: #{tpu_custom_call.1} parent=59 // pred_fallthru
          _
        // Predicated region
        $region81: #{tpu_custom_call.1} parent=59 // pred_check
          %p475 = pneg %p226
        $region82: #{tpu_custom_call.1} parent=59 // pred_check_branch
          %477 = sbr.rel (%p475) target = $region84
        $region83: #{tpu_custom_call.1} parent=59 // pred_region
          %478 = dma.done [#allocation12], 2048
        $region84: #{tpu_custom_call.1} parent=59 // pred_fallthru
          _
        %s479 = sand.u32 %s54, 1
        %s480 = scalar_lea.sflag [#allocation3], %s479
        %s481 = sand.u32 %s54, 1
        %s482 = smul.addr %s481, 32
        %s483 = scalar_lea.vmem [#allocation2], %s482
        %p484 = pneg %p67
        %p485 = pneg %p64
        %s486 = sand.u32 %s32, 1
        %s487 = scalar_lea.sflag [#allocation6], %s486
        %s488 = sand.u32 %s80, 1
        %s489 = smul.addr %s488, 32
        %s490 = scalar_lea.vmem [#allocation5], %s489
        %p491 = pneg %p93
        %p492 = pneg %p90
        %s493 = sand.u32 %s32, 1
        %s494 = scalar_lea.sflag [#allocation6], %s493
        %s495 = sand.u32 %s108, 1
        %s496 = smul.addr %s495, 16
        %s497 = scalar_lea.vmem [#allocation7], %s496
        %p498 = pneg %p121
        %p499 = pneg %p118
        %p500 = pneg %p142
        %p501 = pneg %p139
        %p502 = pneg %p163
        %p503 = pneg %p160
        %p504 = pneg %p184
        %p505 = pneg %p181
        %p506 = pneg %p205
        %p507 = pneg %p202
        %p508 = pneg %p226
        %p509 = pneg %p223
        %p510 = pneg %p247
        %p511 = pneg %p244
        %p512 = pneg %p268
        %p513 = pneg %p265
        %p514 = pneg %p296
        %p515 = pneg %p293
        %s516 = sand.u32 %s283, 1
        %s517 = scalar_lea.sflag [#allocation4], %s516
        %s518 = sand.u32 %s283, 1
        %s519 = smul.addr %s518, 32
        %s520 = scalar_lea.vmem [#allocation13], %s519
        %s521 = smul.u32 4, %s37
        %s522 = smul.u32 4, %s37
        %s523 = smul.u32 4, %s37
        %v524 = vld [vmem:[%s444] sm:$0xff]
        %v525 = vld [vmem:[%s444 + $0x8] sm:$0xff]
        %v526 = vld [vmem:[%s444 + $0x10] sm:$0xff]
        %v527 = vld [vmem:[%s444 + $0x18] sm:$0xff]
        %v528 = vld [vmem:[%s453] sm:$0xff]
        %v529 = vld [vmem:[%s453 + $0x8] sm:$0xff]
        %v530 = vld [vmem:[%s453 + $0x10] sm:$0xff]
        %v531 = vld [vmem:[%s453 + $0x18] sm:$0xff]
        %v532 = vld [vmem:[%s462] sm:$0xf]
        %v533 = vld [vmem:[%s462 + $0x4] sm:$0xf]
        %v534 = vld [vmem:[%s462 + $0x8] sm:$0xf]
        %v535 = vld [vmem:[%s462 + $0xc] sm:$0xf]
        %v536 = vunpack.c.l.bf16 %v532
        %v537 = vunpack.c.l.bf16 %v533
        %v538 = vunpack.c.l.bf16 %v534
        %v539 = vunpack.c.l.bf16 %v535
        %v540 = vld [vmem:[#allocation8] sm:$0xff]
        %v541 = vld [vmem:[#allocation8 + $0x8] sm:$0xff]
        %v542 = vld [vmem:[#allocation8 + $0x10] sm:$0xff]
        %v543 = vld [vmem:[#allocation8 + $0x18] sm:$0xff]
        %v544 = vld [vmem:[#allocation8 + $0x20] sm:$0xff]
        %v545 = vld [vmem:[#allocation8 + $0x28] sm:$0xff]
        %v546 = vld [vmem:[#allocation8 + $0x30] sm:$0xff]
        %v547 = vld [vmem:[#allocation8 + $0x38] sm:$0xff]
        %v548 = vld [vmem:[#allocation8 + $0x40] sm:$0xff]
        %v549 = vld [vmem:[#allocation8 + $0x48] sm:$0xff]
        %v550 = vld [vmem:[#allocation8 + $0x50] sm:$0xff]
        %v551 = vld [vmem:[#allocation8 + $0x58] sm:$0xff]
        %v552 = vld [vmem:[#allocation8 + $0x60] sm:$0xff]
        %v553 = vld [vmem:[#allocation8 + $0x68] sm:$0xff]
        %v554 = vld [vmem:[#allocation8 + $0x70] sm:$0xff]
        %v555 = vld [vmem:[#allocation8 + $0x78] sm:$0xff]
        %v556 = vld [vmem:[%s4] sm:$0x1]
        %v558 = vlaneseq
        %v559 = vshrl.u32 %v558, 7
        %v560 = vsub.s32 0, %v559
        %v561 = vrot.slane %v556, %v560
        %563 = vmatprep.subr.mxu0 0.0
        %564 = vmatpush1.msra.mxu0 %v555
        %565 = vmatprep.subr.mxu0 0.0
        %566 = vmatpush1.msra.mxu0 %v554
        %567 = vmatprep.subr.mxu0 0.0
        %568 = vmatpush1.msra.mxu0 %v553
        %569 = vmatprep.subr.mxu0 0.0
        %570 = vmatpush1.msra.mxu0 %v552
        %571 = vmatprep.subr.mxu0 0.0
        %572 = vmatpush1.msra.mxu0 %v551
        %573 = vmatprep.subr.mxu0 0.0
        %574 = vmatpush1.msra.mxu0 %v550
        %575 = vmatprep.subr.mxu0 0.0
        %576 = vmatpush1.msra.mxu0 %v549
        %577 = vmatprep.subr.mxu0 0.0
        %578 = vmatpush1.msra.mxu0 %v548
        %579 = vmatprep.subr.mxu0 0.0
        %580 = vmatpush1.msra.mxu0 %v547
        %581 = vmatprep.subr.mxu0 0.0
        %582 = vmatpush1.msra.mxu0 %v546
        %583 = vmatprep.subr.mxu0 0.0
        %584 = vmatpush1.msra.mxu0 %v545
        %585 = vmatprep.subr.mxu0 0.0
        %586 = vmatpush1.msra.mxu0 %v544
        %587 = vmatprep.subr.mxu0 0.0
        %588 = vmatpush1.msra.mxu0 %v543
        %589 = vmatprep.subr.mxu0 0.0
        %590 = vmatpush1.msra.mxu0 %v542
        %591 = vmatprep.subr.mxu0 0.0
        %592 = vmatpush1.msra.mxu0 %v541
        %593 = vmatprep.subr.mxu0 0.0
        %594 = vmatpush1.msra.mxu0 %v540
        %595 = vmatprep.subr.mxu0 0.0
        %596 = vmatpush2.msra.mxu0 0.0
        %597 = vmatprep.subr.mxu0 0.0
        %598 = vmatpush2.msra.mxu0 0.0
        %599 = vmatprep.subr.mxu0 0.0
        %600 = vmatpush2.msra.mxu0 0.0
        %601 = vmatprep.subr.mxu0 0.0
        %602 = vmatpush2.msra.mxu0 0.0
        %603 = vmatprep.subr.mxu0 0.0
        %604 = vmatpush2.msra.mxu0 0.0
        %605 = vmatprep.subr.mxu0 0.0
        %606 = vmatpush2.msra.mxu0 0.0
        %607 = vmatprep.subr.mxu0 0.0
        %608 = vmatpush2.msra.mxu0 0.0
        %609 = vmatprep.subr.mxu0 0.0
        %610 = vmatpush2.msra.mxu0 0.0
        %611 = vmatprep.subr.mxu0 0.0
        %612 = vmatpush2.msra.mxu0 0.0
        %613 = vmatprep.subr.mxu0 0.0
        %614 = vmatpush2.msra.mxu0 0.0
        %615 = vmatprep.subr.mxu0 0.0
        %616 = vmatpush2.msra.mxu0 0.0
        %617 = vmatprep.subr.mxu0 0.0
        %618 = vmatpush2.msra.mxu0 0.0
        %619 = vmatprep.subr.mxu0 0.0
        %620 = vmatpush2.msra.mxu0 0.0
        %621 = vmatprep.subr.mxu0 0.0
        %622 = vmatpush2.msra.mxu0 0.0
        %623 = vmatprep.subr.mxu0 0.0
        %624 = vmatpush2.msra.mxu0 0.0
        %625 = vmatprep.subr.mxu0 0.0
        %626 = vmatpush2.msra.mxu0 0.0
        %627 = vmatprep.mubr.f32.mxu0 0.0
        %628 = vmatmul.mubr.f32.gmra.mxu0 %v524
        %v629 = vpop.f32.mrf.mxu0
        %v630 = vadd.f32 %v561, %v629
        %v631 = vpop.f32.mrf.mxu0
        %632 = vmatprep.mubr.f32.mxu0 0.0
        %633 = vmatmul.mubr.f32.gmra.mxu0 %v525
        %v634 = vpop.f32.mrf.mxu0
        %v635 = vadd.f32 %v561, %v634
        %v636 = vpop.f32.mrf.mxu0
        %637 = vmatprep.mubr.f32.mxu0 0.0
        %638 = vmatmul.mubr.f32.gmra.mxu0 %v526
        %v639 = vpop.f32.mrf.mxu0
        %v640 = vadd.f32 %v561, %v639
        %v641 = vpop.f32.mrf.mxu0
        %642 = vmatprep.mubr.f32.mxu0 0.0
        %643 = vmatmul.mubr.f32.gmra.mxu0 %v527
        %v644 = vpop.f32.mrf.mxu0
        %v645 = vadd.f32 %v561, %v644
        %v646 = vpop.f32.mrf.mxu0
        %647 = vdwg.mxu0
        %v648 = vld [vmem:[#allocation10] sm:$0xff]
        %v649 = vld [vmem:[#allocation10 + $0x8] sm:$0xff]
        %v650 = vld [vmem:[#allocation10 + $0x10] sm:$0xff]
        %v651 = vld [vmem:[#allocation10 + $0x18] sm:$0xff]
        %v652 = vld [vmem:[#allocation10 + $0x20] sm:$0xff]
        %v653 = vld [vmem:[#allocation10 + $0x28] sm:$0xff]
        %v654 = vld [vmem:[#allocation10 + $0x30] sm:$0xff]
        %v655 = vld [vmem:[#allocation10 + $0x38] sm:$0xff]
        %v656 = vld [vmem:[#allocation10 + $0x40] sm:$0xff]
        %v657 = vld [vmem:[#allocation10 + $0x48] sm:$0xff]
        %v658 = vld [vmem:[#allocation10 + $0x50] sm:$0xff]
        %v659 = vld [vmem:[#allocation10 + $0x58] sm:$0xff]
        %v660 = vld [vmem:[#allocation10 + $0x60] sm:$0xff]
        %v661 = vld [vmem:[#allocation10 + $0x68] sm:$0xff]
        %v662 = vld [vmem:[#allocation10 + $0x70] sm:$0xff]
        %v663 = vld [vmem:[#allocation10 + $0x78] sm:$0xff]
        %v664 = vld [vmem:[#allocation10 + $0x80] sm:$0xff]
        %v665 = vld [vmem:[#allocation10 + $0x88] sm:$0xff]
        %v666 = vld [vmem:[#allocation10 + $0x90] sm:$0xff]
        %v667 = vld [vmem:[#allocation10 + $0x98] sm:$0xff]
        %v668 = vld [vmem:[#allocation10 + $0xa0] sm:$0xff]
        %v669 = vld [vmem:[#allocation10 + $0xa8] sm:$0xff]
        %v670 = vld [vmem:[#allocation10 + $0xb0] sm:$0xff]
        %v671 = vld [vmem:[#allocation10 + $0xb8] sm:$0xff]
        %v672 = vld [vmem:[#allocation10 + $0xc0] sm:$0xff]
        %v673 = vld [vmem:[#allocation10 + $0xc8] sm:$0xff]
        %v674 = vld [vmem:[#allocation10 + $0xd0] sm:$0xff]
        %v675 = vld [vmem:[#allocation10 + $0xd8] sm:$0xff]
        %v676 = vld [vmem:[#allocation10 + $0xe0] sm:$0xff]
        %v677 = vld [vmem:[#allocation10 + $0xe8] sm:$0xff]
        %v678 = vld [vmem:[#allocation10 + $0xf0] sm:$0xff]
        %v679 = vld [vmem:[#allocation10 + $0xf8] sm:$0xff]
        %v680 = vld [vmem:[%s6] sm:$0x3]
        %v682 = vlaneseq
        %v683 = vshrl.u32 %v682, 7
        %v684 = vsub.s32 0, %v683
        %v685 = vrot.slane %v680, %v684
        %v686 = vlaneseq
        %v687 = vshrl.u32 %v686, 7
        %v688 = vsub.s32 1, %v687
        %v689 = vrot.slane %v680, %v688
        %692 = vmatprep.subr.mxu0 %v679
        %693 = vmatpush1.msra.mxu0 %v678
        %694 = vmatprep.subr.mxu0 %v677
        %695 = vmatpush1.msra.mxu0 %v676
        %696 = vmatprep.subr.mxu0 %v675
        %697 = vmatpush1.msra.mxu0 %v674
        %698 = vmatprep.subr.mxu0 %v673
        %699 = vmatpush1.msra.mxu0 %v672
        %700 = vmatprep.subr.mxu0 %v671
        %701 = vmatpush1.msra.mxu0 %v670
        %702 = vmatprep.subr.mxu0 %v669
        %703 = vmatpush1.msra.mxu0 %v668
        %704 = vmatprep.subr.mxu0 %v667
        %705 = vmatpush1.msra.mxu0 %v666
        %706 = vmatprep.subr.mxu0 %v665
        %707 = vmatpush1.msra.mxu0 %v664
        %708 = vmatprep.subr.mxu0 %v663
        %709 = vmatpush1.msra.mxu0 %v662
        %710 = vmatprep.subr.mxu0 %v661
        %711 = vmatpush1.msra.mxu0 %v660
        %712 = vmatprep.subr.mxu0 %v659
        %713 = vmatpush1.msra.mxu0 %v658
        %714 = vmatprep.subr.mxu0 %v657
        %715 = vmatpush1.msra.mxu0 %v656
        %716 = vmatprep.subr.mxu0 %v655
        %717 = vmatpush1.msra.mxu0 %v654
        %718 = vmatprep.subr.mxu0 %v653
        %719 = vmatpush1.msra.mxu0 %v652
        %720 = vmatprep.subr.mxu0 %v651
        %721 = vmatpush1.msra.mxu0 %v650
        %722 = vmatprep.subr.mxu0 %v649
        %723 = vmatpush1.msra.mxu0 %v648
        %724 = vmatprep.subr.mxu0 0.0
        %725 = vmatpush2.msra.mxu0 0.0
        %726 = vmatprep.subr.mxu0 0.0
        %727 = vmatpush2.msra.mxu0 0.0
        %728 = vmatprep.subr.mxu0 0.0
        %729 = vmatpush2.msra.mxu0 0.0
        %730 = vmatprep.subr.mxu0 0.0
        %731 = vmatpush2.msra.mxu0 0.0
        %732 = vmatprep.subr.mxu0 0.0
        %733 = vmatpush2.msra.mxu0 0.0
        %734 = vmatprep.subr.mxu0 0.0
        %735 = vmatpush2.msra.mxu0 0.0
        %736 = vmatprep.subr.mxu0 0.0
        %737 = vmatpush2.msra.mxu0 0.0
        %738 = vmatprep.subr.mxu0 0.0
        %739 = vmatpush2.msra.mxu0 0.0
        %740 = vmatprep.subr.mxu0 0.0
        %741 = vmatpush2.msra.mxu0 0.0
        %742 = vmatprep.subr.mxu0 0.0
        %743 = vmatpush2.msra.mxu0 0.0
        %744 = vmatprep.subr.mxu0 0.0
        %745 = vmatpush2.msra.mxu0 0.0
        %746 = vmatprep.subr.mxu0 0.0
        %747 = vmatpush2.msra.mxu0 0.0
        %748 = vmatprep.subr.mxu0 0.0
        %749 = vmatpush2.msra.mxu0 0.0
        %750 = vmatprep.subr.mxu0 0.0
        %751 = vmatpush2.msra.mxu0 0.0
        %752 = vmatprep.subr.mxu0 0.0
        %753 = vmatpush2.msra.mxu0 0.0
        %754 = vmatprep.subr.mxu0 0.0
        %755 = vmatpush2.msra.mxu0 0.0
        %756 = vmatprep.mubr.f32.mxu0 0.0
        %757 = vmatmul.mubr.f32.gmra.mxu0 %v528
        %v758 = vpop.f32.mrf.mxu0
        %v759 = vadd.f32 %v685, %v758
        %v760 = vpop.f32.mrf.mxu0
        %v761 = vadd.f32 %v689, %v760
        %762 = vmatprep.mubr.f32.mxu0 0.0
        %763 = vmatmul.mubr.f32.gmra.mxu0 %v529
        %v764 = vpop.f32.mrf.mxu0
        %v765 = vadd.f32 %v685, %v764
        %v766 = vpop.f32.mrf.mxu0
        %v767 = vadd.f32 %v689, %v766
        %768 = vmatprep.mubr.f32.mxu0 0.0
        %769 = vmatmul.mubr.f32.gmra.mxu0 %v530
        %v770 = vpop.f32.mrf.mxu0
        %v771 = vadd.f32 %v685, %v770
        %v772 = vpop.f32.mrf.mxu0
        %v773 = vadd.f32 %v689, %v772
        %774 = vmatprep.mubr.f32.mxu0 0.0
        %775 = vmatmul.mubr.f32.gmra.mxu0 %v531
        %v776 = vpop.f32.mrf.mxu0
        %v777 = vadd.f32 %v685, %v776
        %v778 = vpop.f32.mrf.mxu0
        %v779 = vadd.f32 %v689, %v778
        %780 = vdwg.mxu0
        %785 = vrot.lane.b32.xlu0 %v630, 112
        %v786 = vpop.permute.xlu0 %785
        %787 = vrot.lane.b32.xlu0 %v635, 112
        %v788 = vpop.permute.xlu0 %787
        %789 = vrot.lane.b32.xlu0 %v640, 112
        %v790 = vpop.permute.xlu0 %789
        %791 = vrot.lane.b32.xlu0 %v645, 112
        %v792 = vpop.permute.xlu0 %791
        %797 = vrot.lane.b32.xlu0 %v630, 96
        %v798 = vpop.permute.xlu0 %797
        %799 = vrot.lane.b32.xlu0 %v635, 96
        %v800 = vpop.permute.xlu0 %799
        %801 = vrot.lane.b32.xlu0 %v640, 96
        %v802 = vpop.permute.xlu0 %801
        %803 = vrot.lane.b32.xlu0 %v645, 96
        %v804 = vpop.permute.xlu0 %803
        %809 = vrot.lane.b32.xlu0 %v630, 80
        %v810 = vpop.permute.xlu0 %809
        %811 = vrot.lane.b32.xlu0 %v635, 80
        %v812 = vpop.permute.xlu0 %811
        %813 = vrot.lane.b32.xlu0 %v640, 80
        %v814 = vpop.permute.xlu0 %813
        %815 = vrot.lane.b32.xlu0 %v645, 80
        %v816 = vpop.permute.xlu0 %815
        %821 = vrot.lane.b32.xlu0 %v630, 64
        %v822 = vpop.permute.xlu0 %821
        %823 = vrot.lane.b32.xlu0 %v635, 64
        %v824 = vpop.permute.xlu0 %823
        %825 = vrot.lane.b32.xlu0 %v640, 64
        %v826 = vpop.permute.xlu0 %825
        %827 = vrot.lane.b32.xlu0 %v645, 64
        %v828 = vpop.permute.xlu0 %827
        %833 = vrot.lane.b32.xlu0 %v630, 48
        %v834 = vpop.permute.xlu0 %833
        %835 = vrot.lane.b32.xlu0 %v635, 48
        %v836 = vpop.permute.xlu0 %835
        %837 = vrot.lane.b32.xlu0 %v640, 48
        %v838 = vpop.permute.xlu0 %837
        %839 = vrot.lane.b32.xlu0 %v645, 48
        %v840 = vpop.permute.xlu0 %839
        %845 = vrot.lane.b32.xlu0 %v630, 32
        %v846 = vpop.permute.xlu0 %845
        %847 = vrot.lane.b32.xlu0 %v635, 32
        %v848 = vpop.permute.xlu0 %847
        %849 = vrot.lane.b32.xlu0 %v640, 32
        %v850 = vpop.permute.xlu0 %849
        %851 = vrot.lane.b32.xlu0 %v645, 32
        %v852 = vpop.permute.xlu0 %851
        %857 = vrot.lane.b32.xlu0 %v630, 16
        %v858 = vpop.permute.xlu0 %857
        %859 = vrot.lane.b32.xlu0 %v635, 16
        %v860 = vpop.permute.xlu0 %859
        %861 = vrot.lane.b32.xlu0 %v640, 16
        %v862 = vpop.permute.xlu0 %861
        %863 = vrot.lane.b32.xlu0 %v645, 16
        %v864 = vpop.permute.xlu0 %863
        %v869 = vcombine.low %v630, %v798
        %v870 = vcombine.high %v630, %v798
        %v872 = vunpack.c.l.s4 1983009808
        %v873 = vunpack.c.0.s8 %v872
        %v874 = vlaneseq
        %v875 = vshrl.u32 %v874, 7
        %v876 = vsub.s32 %v873, %v875
        %v877 = vrot.slane %v869, %v876
        %v879 = vunpack.c.l.s4 1983009808
        %v880 = vunpack.c.0.s8 %v879
        %v881 = vlaneseq
        %v882 = vshrl.u32 %v881, 7
        %v883 = vsub.s32 %v880, %v882
        %v884 = vrot.slane %v870, %v883
        %v885 = vcombine.low %v786, %v810
        %v886 = vcombine.high %v786, %v810
        %v888 = vunpack.c.l.s4 1983009808
        %v889 = vunpack.c.0.s8 %v888
        %v890 = vlaneseq
        %v891 = vshrl.u32 %v890, 7
        %v892 = vsub.s32 %v889, %v891
        %v893 = vrot.slane %v885, %v892
        %v895 = vunpack.c.l.s4 1983009808
        %v896 = vunpack.c.0.s8 %v895
        %v897 = vlaneseq
        %v898 = vshrl.u32 %v897, 7
        %v899 = vsub.s32 %v896, %v898
        %v900 = vrot.slane %v886, %v899
        %v901 = vcombine.low %v822, %v846
        %v902 = vcombine.high %v822, %v846
        %v904 = vunpack.c.l.s4 1983009808
        %v905 = vunpack.c.0.s8 %v904
        %v906 = vlaneseq
        %v907 = vshrl.u32 %v906, 7
        %v908 = vsub.s32 %v905, %v907
        %v909 = vrot.slane %v901, %v908
        %v911 = vunpack.c.l.s4 1983009808
        %v912 = vunpack.c.0.s8 %v911
        %v913 = vlaneseq
        %v914 = vshrl.u32 %v913, 7
        %v915 = vsub.s32 %v912, %v914
        %v916 = vrot.slane %v902, %v915
        %v917 = vcombine.low %v834, %v858
        %v918 = vcombine.high %v834, %v858
        %v920 = vunpack.c.l.s4 1983009808
        %v921 = vunpack.c.0.s8 %v920
        %v922 = vlaneseq
        %v923 = vshrl.u32 %v922, 7
        %v924 = vsub.s32 %v921, %v923
        %v925 = vrot.slane %v917, %v924
        %v927 = vunpack.c.l.s4 1983009808
        %v928 = vunpack.c.0.s8 %v927
        %v929 = vlaneseq
        %v930 = vshrl.u32 %v929, 7
        %v931 = vsub.s32 %v928, %v930
        %v932 = vrot.slane %v918, %v931
        %v933 = vcombine.low %v877, %v893
        %v934 = vcombine.high %v877, %v893
        %v936 = vunpack.c.l.s4 1934713408
        %v937 = vunpack.c.0.s8 %v936
        %v938 = vlaneseq
        %v939 = vshrl.u32 %v938, 7
        %v940 = vsub.s32 %v937, %v939
        %v941 = vrot.slane %v933, %v940
        %v943 = vunpack.c.l.s4 1934713408
        %v944 = vunpack.c.0.s8 %v943
        %v945 = vlaneseq
        %v946 = vshrl.u32 %v945, 7
        %v947 = vsub.s32 %v944, %v946
        %v948 = vrot.slane %v934, %v947
        %v949 = vcombine.low %v884, %v900
        %v950 = vcombine.high %v884, %v900
        %v952 = vunpack.c.l.s4 1934713408
        %v953 = vunpack.c.0.s8 %v952
        %v954 = vlaneseq
        %v955 = vshrl.u32 %v954, 7
        %v956 = vsub.s32 %v953, %v955
        %v957 = vrot.slane %v949, %v956
        %v959 = vunpack.c.l.s4 1934713408
        %v960 = vunpack.c.0.s8 %v959
        %v961 = vlaneseq
        %v962 = vshrl.u32 %v961, 7
        %v963 = vsub.s32 %v960, %v962
        %v964 = vrot.slane %v950, %v963
        %v965 = vcombine.low %v909, %v925
        %v966 = vcombine.high %v909, %v925
        %v968 = vunpack.c.l.s4 1934713408
        %v969 = vunpack.c.0.s8 %v968
        %v970 = vlaneseq
        %v971 = vshrl.u32 %v970, 7
        %v972 = vsub.s32 %v969, %v971
        %v973 = vrot.slane %v965, %v972
        %v975 = vunpack.c.l.s4 1934713408
        %v976 = vunpack.c.0.s8 %v975
        %v977 = vlaneseq
        %v978 = vshrl.u32 %v977, 7
        %v979 = vsub.s32 %v976, %v978
        %v980 = vrot.slane %v966, %v979
        %v981 = vcombine.low %v916, %v932
        %v982 = vcombine.high %v916, %v932
        %v984 = vunpack.c.l.s4 1934713408
        %v985 = vunpack.c.0.s8 %v984
        %v986 = vlaneseq
        %v987 = vshrl.u32 %v986, 7
        %v988 = vsub.s32 %v985, %v987
        %v989 = vrot.slane %v981, %v988
        %v991 = vunpack.c.l.s4 1934713408
        %v992 = vunpack.c.0.s8 %v991
        %v993 = vlaneseq
        %v994 = vshrl.u32 %v993, 7
        %v995 = vsub.s32 %v992, %v994
        %v996 = vrot.slane %v982, %v995
        %v997 = vcombine.low %v941, %v973
        %v998 = vcombine.high %v941, %v973
        %v999 = vcombine.low %v948, %v980
        %v1000 = vcombine.high %v948, %v980
        %v1001 = vcombine.low %v957, %v989
        %v1002 = vcombine.high %v957, %v989
        %v1003 = vcombine.low %v964, %v996
        %v1004 = vcombine.high %v964, %v996
        %v1005 = vcombine.low %v635, %v800
        %v1006 = vcombine.high %v635, %v800
        %v1008 = vunpack.c.l.s4 1983009808
        %v1009 = vunpack.c.0.s8 %v1008
        %v1010 = vlaneseq
        %v1011 = vshrl.u32 %v1010, 7
        %v1012 = vsub.s32 %v1009, %v1011
        %v1013 = vrot.slane %v1005, %v1012
        %v1015 = vunpack.c.l.s4 1983009808
        %v1016 = vunpack.c.0.s8 %v1015
        %v1017 = vlaneseq
        %v1018 = vshrl.u32 %v1017, 7
        %v1019 = vsub.s32 %v1016, %v1018
        %v1020 = vrot.slane %v1006, %v1019
        %v1021 = vcombine.low %v788, %v812
        %v1022 = vcombine.high %v788, %v812
        %v1024 = vunpack.c.l.s4 1983009808
        %v1025 = vunpack.c.0.s8 %v1024
        %v1026 = vlaneseq
        %v1027 = vshrl.u32 %v1026, 7
        %v1028 = vsub.s32 %v1025, %v1027
        %v1029 = vrot.slane %v1021, %v1028
        %v1031 = vunpack.c.l.s4 1983009808
        %v1032 = vunpack.c.0.s8 %v1031
        %v1033 = vlaneseq
        %v1034 = vshrl.u32 %v1033, 7
        %v1035 = vsub.s32 %v1032, %v1034
        %v1036 = vrot.slane %v1022, %v1035
        %v1037 = vcombine.low %v824, %v848
        %v1038 = vcombine.high %v824, %v848
        %v1040 = vunpack.c.l.s4 1983009808
        %v1041 = vunpack.c.0.s8 %v1040
        %v1042 = vlaneseq
        %v1043 = vshrl.u32 %v1042, 7
        %v1044 = vsub.s32 %v1041, %v1043
        %v1045 = vrot.slane %v1037, %v1044
        %v1047 = vunpack.c.l.s4 1983009808
        %v1048 = vunpack.c.0.s8 %v1047
        %v1049 = vlaneseq
        %v1050 = vshrl.u32 %v1049, 7
        %v1051 = vsub.s32 %v1048, %v1050
        %v1052 = vrot.slane %v1038, %v1051
        %v1053 = vcombine.low %v836, %v860
        %v1054 = vcombine.high %v836, %v860
        %v1056 = vunpack.c.l.s4 1983009808
        %v1057 = vunpack.c.0.s8 %v1056
        %v1058 = vlaneseq
        %v1059 = vshrl.u32 %v1058, 7
        %v1060 = vsub.s32 %v1057, %v1059
        %v1061 = vrot.slane %v1053, %v1060
        %v1063 = vunpack.c.l.s4 1983009808
        %v1064 = vunpack.c.0.s8 %v1063
        %v1065 = vlaneseq
        %v1066 = vshrl.u32 %v1065, 7
        %v1067 = vsub.s32 %v1064, %v1066
        %v1068 = vrot.slane %v1054, %v1067
        %v1069 = vcombine.low %v1013, %v1029
        %v1070 = vcombine.high %v1013, %v1029
        %v1072 = vunpack.c.l.s4 1934713408
        %v1073 = vunpack.c.0.s8 %v1072
        %v1074 = vlaneseq
        %v1075 = vshrl.u32 %v1074, 7
        %v1076 = vsub.s32 %v1073, %v1075
        %v1077 = vrot.slane %v1069, %v1076
        %v1079 = vunpack.c.l.s4 1934713408
        %v1080 = vunpack.c.0.s8 %v1079
        %v1081 = vlaneseq
        %v1082 = vshrl.u32 %v1081, 7
        %v1083 = vsub.s32 %v1080, %v1082
        %v1084 = vrot.slane %v1070, %v1083
        %v1085 = vcombine.low %v1020, %v1036
        %v1086 = vcombine.high %v1020, %v1036
        %v1088 = vunpack.c.l.s4 1934713408
        %v1089 = vunpack.c.0.s8 %v1088
        %v1090 = vlaneseq
        %v1091 = vshrl.u32 %v1090, 7
        %v1092 = vsub.s32 %v1089, %v1091
        %v1093 = vrot.slane %v1085, %v1092
        %v1095 = vunpack.c.l.s4 1934713408
        %v1096 = vunpack.c.0.s8 %v1095
        %v1097 = vlaneseq
        %v1098 = vshrl.u32 %v1097, 7
        %v1099 = vsub.s32 %v1096, %v1098
        %v1100 = vrot.slane %v1086, %v1099
        %v1101 = vcombine.low %v1045, %v1061
        %v1102 = vcombine.high %v1045, %v1061
        %v1104 = vunpack.c.l.s4 1934713408
        %v1105 = vunpack.c.0.s8 %v1104
        %v1106 = vlaneseq
        %v1107 = vshrl.u32 %v1106, 7
        %v1108 = vsub.s32 %v1105, %v1107
        %v1109 = vrot.slane %v1101, %v1108
        %v1111 = vunpack.c.l.s4 1934713408
        %v1112 = vunpack.c.0.s8 %v1111
        %v1113 = vlaneseq
        %v1114 = vshrl.u32 %v1113, 7
        %v1115 = vsub.s32 %v1112, %v1114
        %v1116 = vrot.slane %v1102, %v1115
        %v1117 = vcombine.low %v1052, %v1068
        %v1118 = vcombine.high %v1052, %v1068
        %v1120 = vunpack.c.l.s4 1934713408
        %v1121 = vunpack.c.0.s8 %v1120
        %v1122 = vlaneseq
        %v1123 = vshrl.u32 %v1122, 7
        %v1124 = vsub.s32 %v1121, %v1123
        %v1125 = vrot.slane %v1117, %v1124
        %v1127 = vunpack.c.l.s4 1934713408
        %v1128 = vunpack.c.0.s8 %v1127
        %v1129 = vlaneseq
        %v1130 = vshrl.u32 %v1129, 7
        %v1131 = vsub.s32 %v1128, %v1130
        %v1132 = vrot.slane %v1118, %v1131
        %v1133 = vcombine.low %v1077, %v1109
        %v1134 = vcombine.high %v1077, %v1109
        %v1135 = vcombine.low %v1084, %v1116
        %v1136 = vcombine.high %v1084, %v1116
        %v1137 = vcombine.low %v1093, %v1125
        %v1138 = vcombine.high %v1093, %v1125
        %v1139 = vcombine.low %v1100, %v1132
        %v1140 = vcombine.high %v1100, %v1132
        %v1141 = vcombine.low %v640, %v802
        %v1142 = vcombine.high %v640, %v802
        %v1144 = vunpack.c.l.s4 1983009808
        %v1145 = vunpack.c.0.s8 %v1144
        %v1146 = vlaneseq
        %v1147 = vshrl.u32 %v1146, 7
        %v1148 = vsub.s32 %v1145, %v1147
        %v1149 = vrot.slane %v1141, %v1148
        %v1151 = vunpack.c.l.s4 1983009808
        %v1152 = vunpack.c.0.s8 %v1151
        %v1153 = vlaneseq
        %v1154 = vshrl.u32 %v1153, 7
        %v1155 = vsub.s32 %v1152, %v1154
        %v1156 = vrot.slane %v1142, %v1155
        %v1157 = vcombine.low %v790, %v814
        %v1158 = vcombine.high %v790, %v814
        %v1160 = vunpack.c.l.s4 1983009808
        %v1161 = vunpack.c.0.s8 %v1160
        %v1162 = vlaneseq
        %v1163 = vshrl.u32 %v1162, 7
        %v1164 = vsub.s32 %v1161, %v1163
        %v1165 = vrot.slane %v1157, %v1164
        %v1167 = vunpack.c.l.s4 1983009808
        %v1168 = vunpack.c.0.s8 %v1167
        %v1169 = vlaneseq
        %v1170 = vshrl.u32 %v1169, 7
        %v1171 = vsub.s32 %v1168, %v1170
        %v1172 = vrot.slane %v1158, %v1171
        %v1173 = vcombine.low %v826, %v850
        %v1174 = vcombine.high %v826, %v850
        %v1176 = vunpack.c.l.s4 1983009808
        %v1177 = vunpack.c.0.s8 %v1176
        %v1178 = vlaneseq
        %v1179 = vshrl.u32 %v1178, 7
        %v1180 = vsub.s32 %v1177, %v1179
        %v1181 = vrot.slane %v1173, %v1180
        %v1183 = vunpack.c.l.s4 1983009808
        %v1184 = vunpack.c.0.s8 %v1183
        %v1185 = vlaneseq
        %v1186 = vshrl.u32 %v1185, 7
        %v1187 = vsub.s32 %v1184, %v1186
        %v1188 = vrot.slane %v1174, %v1187
        %v1189 = vcombine.low %v838, %v862
        %v1190 = vcombine.high %v838, %v862
        %v1192 = vunpack.c.l.s4 1983009808
        %v1193 = vunpack.c.0.s8 %v1192
        %v1194 = vlaneseq
        %v1195 = vshrl.u32 %v1194, 7
        %v1196 = vsub.s32 %v1193, %v1195
        %v1197 = vrot.slane %v1189, %v1196
        %v1199 = vunpack.c.l.s4 1983009808
        %v1200 = vunpack.c.0.s8 %v1199
        %v1201 = vlaneseq
        %v1202 = vshrl.u32 %v1201, 7
        %v1203 = vsub.s32 %v1200, %v1202
        %v1204 = vrot.slane %v1190, %v1203
        %v1205 = vcombine.low %v1149, %v1165
        %v1206 = vcombine.high %v1149, %v1165
        %v1208 = vunpack.c.l.s4 1934713408
        %v1209 = vunpack.c.0.s8 %v1208
        %v1210 = vlaneseq
        %v1211 = vshrl.u32 %v1210, 7
        %v1212 = vsub.s32 %v1209, %v1211
        %v1213 = vrot.slane %v1205, %v1212
        %v1215 = vunpack.c.l.s4 1934713408
        %v1216 = vunpack.c.0.s8 %v1215
        %v1217 = vlaneseq
        %v1218 = vshrl.u32 %v1217, 7
        %v1219 = vsub.s32 %v1216, %v1218
        %v1220 = vrot.slane %v1206, %v1219
        %v1221 = vcombine.low %v1156, %v1172
        %v1222 = vcombine.high %v1156, %v1172
        %v1224 = vunpack.c.l.s4 1934713408
        %v1225 = vunpack.c.0.s8 %v1224
        %v1226 = vlaneseq
        %v1227 = vshrl.u32 %v1226, 7
        %v1228 = vsub.s32 %v1225, %v1227
        %v1229 = vrot.slane %v1221, %v1228
        %v1231 = vunpack.c.l.s4 1934713408
        %v1232 = vunpack.c.0.s8 %v1231
        %v1233 = vlaneseq
        %v1234 = vshrl.u32 %v1233, 7
        %v1235 = vsub.s32 %v1232, %v1234
        %v1236 = vrot.slane %v1222, %v1235
        %v1237 = vcombine.low %v1181, %v1197
        %v1238 = vcombine.high %v1181, %v1197
        %v1240 = vunpack.c.l.s4 1934713408
        %v1241 = vunpack.c.0.s8 %v1240
        %v1242 = vlaneseq
        %v1243 = vshrl.u32 %v1242, 7
        %v1244 = vsub.s32 %v1241, %v1243
        %v1245 = vrot.slane %v1237, %v1244
        %v1247 = vunpack.c.l.s4 1934713408
        %v1248 = vunpack.c.0.s8 %v1247
        %v1249 = vlaneseq
        %v1250 = vshrl.u32 %v1249, 7
        %v1251 = vsub.s32 %v1248, %v1250
        %v1252 = vrot.slane %v1238, %v1251
        %v1253 = vcombine.low %v1188, %v1204
        %v1254 = vcombine.high %v1188, %v1204
        %v1256 = vunpack.c.l.s4 1934713408
        %v1257 = vunpack.c.0.s8 %v1256
        %v1258 = vlaneseq
        %v1259 = vshrl.u32 %v1258, 7
        %v1260 = vsub.s32 %v1257, %v1259
        %v1261 = vrot.slane %v1253, %v1260
        %v1263 = vunpack.c.l.s4 1934713408
        %v1264 = vunpack.c.0.s8 %v1263
        %v1265 = vlaneseq
        %v1266 = vshrl.u32 %v1265, 7
        %v1267 = vsub.s32 %v1264, %v1266
        %v1268 = vrot.slane %v1254, %v1267
        %v1269 = vcombine.low %v1213, %v1245
        %v1270 = vcombine.high %v1213, %v1245
        %v1271 = vcombine.low %v1220, %v1252
        %v1272 = vcombine.high %v1220, %v1252
        %v1273 = vcombine.low %v1229, %v1261
        %v1274 = vcombine.high %v1229, %v1261
        %v1275 = vcombine.low %v1236, %v1268
        %v1276 = vcombine.high %v1236, %v1268
        %v1277 = vcombine.low %v645, %v804
        %v1278 = vcombine.high %v645, %v804
        %v1280 = vunpack.c.l.s4 1983009808
        %v1281 = vunpack.c.0.s8 %v1280
        %v1282 = vlaneseq
        %v1283 = vshrl.u32 %v1282, 7
        %v1284 = vsub.s32 %v1281, %v1283
        %v1285 = vrot.slane %v1277, %v1284
        %v1287 = vunpack.c.l.s4 1983009808
        %v1288 = vunpack.c.0.s8 %v1287
        %v1289 = vlaneseq
        %v1290 = vshrl.u32 %v1289, 7
        %v1291 = vsub.s32 %v1288, %v1290
        %v1292 = vrot.slane %v1278, %v1291
        %v1293 = vcombine.low %v792, %v816
        %v1294 = vcombine.high %v792, %v816
        %v1296 = vunpack.c.l.s4 1983009808
        %v1297 = vunpack.c.0.s8 %v1296
        %v1298 = vlaneseq
        %v1299 = vshrl.u32 %v1298, 7
        %v1300 = vsub.s32 %v1297, %v1299
        %v1301 = vrot.slane %v1293, %v1300
        %v1303 = vunpack.c.l.s4 1983009808
        %v1304 = vunpack.c.0.s8 %v1303
        %v1305 = vlaneseq
        %v1306 = vshrl.u32 %v1305, 7
        %v1307 = vsub.s32 %v1304, %v1306
        %v1308 = vrot.slane %v1294, %v1307
        %v1309 = vcombine.low %v828, %v852
        %v1310 = vcombine.high %v828, %v852
        %v1312 = vunpack.c.l.s4 1983009808
        %v1313 = vunpack.c.0.s8 %v1312
        %v1314 = vlaneseq
        %v1315 = vshrl.u32 %v1314, 7
        %v1316 = vsub.s32 %v1313, %v1315
        %v1317 = vrot.slane %v1309, %v1316
        %v1319 = vunpack.c.l.s4 1983009808
        %v1320 = vunpack.c.0.s8 %v1319
        %v1321 = vlaneseq
        %v1322 = vshrl.u32 %v1321, 7
        %v1323 = vsub.s32 %v1320, %v1322
        %v1324 = vrot.slane %v1310, %v1323
        %v1325 = vcombine.low %v840, %v864
        %v1326 = vcombine.high %v840, %v864
        %v1328 = vunpack.c.l.s4 1983009808
        %v1329 = vunpack.c.0.s8 %v1328
        %v1330 = vlaneseq
        %v1331 = vshrl.u32 %v1330, 7
        %v1332 = vsub.s32 %v1329, %v1331
        %v1333 = vrot.slane %v1325, %v1332
        %v1335 = vunpack.c.l.s4 1983009808
        %v1336 = vunpack.c.0.s8 %v1335
        %v1337 = vlaneseq
        %v1338 = vshrl.u32 %v1337, 7
        %v1339 = vsub.s32 %v1336, %v1338
        %v1340 = vrot.slane %v1326, %v1339
        %v1341 = vcombine.low %v1285, %v1301
        %v1342 = vcombine.high %v1285, %v1301
        %v1344 = vunpack.c.l.s4 1934713408
        %v1345 = vunpack.c.0.s8 %v1344
        %v1346 = vlaneseq
        %v1347 = vshrl.u32 %v1346, 7
        %v1348 = vsub.s32 %v1345, %v1347
        %v1349 = vrot.slane %v1341, %v1348
        %v1351 = vunpack.c.l.s4 1934713408
        %v1352 = vunpack.c.0.s8 %v1351
        %v1353 = vlaneseq
        %v1354 = vshrl.u32 %v1353, 7
        %v1355 = vsub.s32 %v1352, %v1354
        %v1356 = vrot.slane %v1342, %v1355
        %v1357 = vcombine.low %v1292, %v1308
        %v1358 = vcombine.high %v1292, %v1308
        %v1360 = vunpack.c.l.s4 1934713408
        %v1361 = vunpack.c.0.s8 %v1360
        %v1362 = vlaneseq
        %v1363 = vshrl.u32 %v1362, 7
        %v1364 = vsub.s32 %v1361, %v1363
        %v1365 = vrot.slane %v1357, %v1364
        %v1367 = vunpack.c.l.s4 1934713408
        %v1368 = vunpack.c.0.s8 %v1367
        %v1369 = vlaneseq
        %v1370 = vshrl.u32 %v1369, 7
        %v1371 = vsub.s32 %v1368, %v1370
        %v1372 = vrot.slane %v1358, %v1371
        %v1373 = vcombine.low %v1317, %v1333
        %v1374 = vcombine.high %v1317, %v1333
        %v1376 = vunpack.c.l.s4 1934713408
        %v1377 = vunpack.c.0.s8 %v1376
        %v1378 = vlaneseq
        %v1379 = vshrl.u32 %v1378, 7
        %v1380 = vsub.s32 %v1377, %v1379
        %v1381 = vrot.slane %v1373, %v1380
        %v1383 = vunpack.c.l.s4 1934713408
        %v1384 = vunpack.c.0.s8 %v1383
        %v1385 = vlaneseq
        %v1386 = vshrl.u32 %v1385, 7
        %v1387 = vsub.s32 %v1384, %v1386
        %v1388 = vrot.slane %v1374, %v1387
        %v1389 = vcombine.low %v1324, %v1340
        %v1390 = vcombine.high %v1324, %v1340
        %v1392 = vunpack.c.l.s4 1934713408
        %v1393 = vunpack.c.0.s8 %v1392
        %v1394 = vlaneseq
        %v1395 = vshrl.u32 %v1394, 7
        %v1396 = vsub.s32 %v1393, %v1395
        %v1397 = vrot.slane %v1389, %v1396
        %v1399 = vunpack.c.l.s4 1934713408
        %v1400 = vunpack.c.0.s8 %v1399
        %v1401 = vlaneseq
        %v1402 = vshrl.u32 %v1401, 7
        %v1403 = vsub.s32 %v1400, %v1402
        %v1404 = vrot.slane %v1390, %v1403
        %v1405 = vcombine.low %v1349, %v1381
        %v1406 = vcombine.high %v1349, %v1381
        %v1407 = vcombine.low %v1356, %v1388
        %v1408 = vcombine.high %v1356, %v1388
        %v1409 = vcombine.low %v1365, %v1397
        %v1410 = vcombine.high %v1365, %v1397
        %v1411 = vcombine.low %v1372, %v1404
        %v1412 = vcombine.high %v1372, %v1404
        %v1413 = vcombine.low %v997, %v999
        %v1414 = vcombine.high %v997, %v999
        %v1416 = vunpack.c.l.s4 1983009808
        %v1417 = vunpack.c.0.s8 %v1416
        %v1418 = vlaneseq
        %v1419 = vshrl.u32 %v1418, 7
        %v1420 = vsub.s32 %v1417, %v1419
        %v1421 = vrot.slane %v1413, %v1420
        %v1423 = vunpack.c.l.s4 1983009808
        %v1424 = vunpack.c.0.s8 %v1423
        %v1425 = vlaneseq
        %v1426 = vshrl.u32 %v1425, 7
        %v1427 = vsub.s32 %v1424, %v1426
        %v1428 = vrot.slane %v1414, %v1427
        %v1429 = vcombine.low %v998, %v1000
        %v1430 = vcombine.high %v998, %v1000
        %v1432 = vunpack.c.l.s4 1983009808
        %v1433 = vunpack.c.0.s8 %v1432
        %v1434 = vlaneseq
        %v1435 = vshrl.u32 %v1434, 7
        %v1436 = vsub.s32 %v1433, %v1435
        %v1437 = vrot.slane %v1429, %v1436
        %v1439 = vunpack.c.l.s4 1983009808
        %v1440 = vunpack.c.0.s8 %v1439
        %v1441 = vlaneseq
        %v1442 = vshrl.u32 %v1441, 7
        %v1443 = vsub.s32 %v1440, %v1442
        %v1444 = vrot.slane %v1430, %v1443
        %v1445 = vcombine.low %v1001, %v1003
        %v1446 = vcombine.high %v1001, %v1003
        %v1448 = vunpack.c.l.s4 1983009808
        %v1449 = vunpack.c.0.s8 %v1448
        %v1450 = vlaneseq
        %v1451 = vshrl.u32 %v1450, 7
        %v1452 = vsub.s32 %v1449, %v1451
        %v1453 = vrot.slane %v1445, %v1452
        %v1455 = vunpack.c.l.s4 1983009808
        %v1456 = vunpack.c.0.s8 %v1455
        %v1457 = vlaneseq
        %v1458 = vshrl.u32 %v1457, 7
        %v1459 = vsub.s32 %v1456, %v1458
        %v1460 = vrot.slane %v1446, %v1459
        %v1461 = vcombine.low %v1002, %v1004
        %v1462 = vcombine.high %v1002, %v1004
        %v1464 = vunpack.c.l.s4 1983009808
        %v1465 = vunpack.c.0.s8 %v1464
        %v1466 = vlaneseq
        %v1467 = vshrl.u32 %v1466, 7
        %v1468 = vsub.s32 %v1465, %v1467
        %v1469 = vrot.slane %v1461, %v1468
        %v1471 = vunpack.c.l.s4 1983009808
        %v1472 = vunpack.c.0.s8 %v1471
        %v1473 = vlaneseq
        %v1474 = vshrl.u32 %v1473, 7
        %v1475 = vsub.s32 %v1472, %v1474
        %v1476 = vrot.slane %v1462, %v1475
        %v1477 = vcombine.low %v1421, %v1437
        %v1478 = vcombine.high %v1421, %v1437
        %v1480 = vunpack.c.l.s4 1934713408
        %v1481 = vunpack.c.0.s8 %v1480
        %v1482 = vlaneseq
        %v1483 = vshrl.u32 %v1482, 7
        %v1484 = vsub.s32 %v1481, %v1483
        %v1485 = vrot.slane %v1477, %v1484
        %v1487 = vunpack.c.l.s4 1934713408
        %v1488 = vunpack.c.0.s8 %v1487
        %v1489 = vlaneseq
        %v1490 = vshrl.u32 %v1489, 7
        %v1491 = vsub.s32 %v1488, %v1490
        %v1492 = vrot.slane %v1478, %v1491
        %v1493 = vcombine.low %v1428, %v1444
        %v1494 = vcombine.high %v1428, %v1444
        %v1496 = vunpack.c.l.s4 1934713408
        %v1497 = vunpack.c.0.s8 %v1496
        %v1498 = vlaneseq
        %v1499 = vshrl.u32 %v1498, 7
        %v1500 = vsub.s32 %v1497, %v1499
        %v1501 = vrot.slane %v1493, %v1500
        %v1503 = vunpack.c.l.s4 1934713408
        %v1504 = vunpack.c.0.s8 %v1503
        %v1505 = vlaneseq
        %v1506 = vshrl.u32 %v1505, 7
        %v1507 = vsub.s32 %v1504, %v1506
        %v1508 = vrot.slane %v1494, %v1507
        %v1509 = vcombine.low %v1453, %v1469
        %v1510 = vcombine.high %v1453, %v1469
        %v1512 = vunpack.c.l.s4 1934713408
        %v1513 = vunpack.c.0.s8 %v1512
        %v1514 = vlaneseq
        %v1515 = vshrl.u32 %v1514, 7
        %v1516 = vsub.s32 %v1513, %v1515
        %v1517 = vrot.slane %v1509, %v1516
        %v1519 = vunpack.c.l.s4 1934713408
        %v1520 = vunpack.c.0.s8 %v1519
        %v1521 = vlaneseq
        %v1522 = vshrl.u32 %v1521, 7
        %v1523 = vsub.s32 %v1520, %v1522
        %v1524 = vrot.slane %v1510, %v1523
        %v1525 = vcombine.low %v1460, %v1476
        %v1526 = vcombine.high %v1460, %v1476
        %v1528 = vunpack.c.l.s4 1934713408
        %v1529 = vunpack.c.0.s8 %v1528
        %v1530 = vlaneseq
        %v1531 = vshrl.u32 %v1530, 7
        %v1532 = vsub.s32 %v1529, %v1531
        %v1533 = vrot.slane %v1525, %v1532
        %v1535 = vunpack.c.l.s4 1934713408
        %v1536 = vunpack.c.0.s8 %v1535
        %v1537 = vlaneseq
        %v1538 = vshrl.u32 %v1537, 7
        %v1539 = vsub.s32 %v1536, %v1538
        %v1540 = vrot.slane %v1526, %v1539
        %v1541 = vcombine.low %v1485, %v1517
        %v1542 = vcombine.high %v1485, %v1517
        %v1543 = vcombine.low %v1492, %v1524
        %v1544 = vcombine.high %v1492, %v1524
        %v1545 = vcombine.low %v1501, %v1533
        %v1546 = vcombine.high %v1501, %v1533
        %v1547 = vcombine.low %v1508, %v1540
        %v1548 = vcombine.high %v1508, %v1540
        %v1549 = vcombine.low %v1133, %v1135
        %v1550 = vcombine.high %v1133, %v1135
        %v1552 = vunpack.c.l.s4 1983009808
        %v1553 = vunpack.c.0.s8 %v1552
        %v1554 = vlaneseq
        %v1555 = vshrl.u32 %v1554, 7
        %v1556 = vsub.s32 %v1553, %v1555
        %v1557 = vrot.slane %v1549, %v1556
        %v1559 = vunpack.c.l.s4 1983009808
        %v1560 = vunpack.c.0.s8 %v1559
        %v1561 = vlaneseq
        %v1562 = vshrl.u32 %v1561, 7
        %v1563 = vsub.s32 %v1560, %v1562
        %v1564 = vrot.slane %v1550, %v1563
        %v1565 = vcombine.low %v1134, %v1136
        %v1566 = vcombine.high %v1134, %v1136
        %v1568 = vunpack.c.l.s4 1983009808
        %v1569 = vunpack.c.0.s8 %v1568
        %v1570 = vlaneseq
        %v1571 = vshrl.u32 %v1570, 7
        %v1572 = vsub.s32 %v1569, %v1571
        %v1573 = vrot.slane %v1565, %v1572
        %v1575 = vunpack.c.l.s4 1983009808
        %v1576 = vunpack.c.0.s8 %v1575
        %v1577 = vlaneseq
        %v1578 = vshrl.u32 %v1577, 7
        %v1579 = vsub.s32 %v1576, %v1578
        %v1580 = vrot.slane %v1566, %v1579
        %v1581 = vcombine.low %v1137, %v1139
        %v1582 = vcombine.high %v1137, %v1139
        %v1584 = vunpack.c.l.s4 1983009808
        %v1585 = vunpack.c.0.s8 %v1584
        %v1586 = vlaneseq
        %v1587 = vshrl.u32 %v1586, 7
        %v1588 = vsub.s32 %v1585, %v1587
        %v1589 = vrot.slane %v1581, %v1588
        %v1591 = vunpack.c.l.s4 1983009808
        %v1592 = vunpack.c.0.s8 %v1591
        %v1593 = vlaneseq
        %v1594 = vshrl.u32 %v1593, 7
        %v1595 = vsub.s32 %v1592, %v1594
        %v1596 = vrot.slane %v1582, %v1595
        %v1597 = vcombine.low %v1138, %v1140
        %v1598 = vcombine.high %v1138, %v1140
        %v1600 = vunpack.c.l.s4 1983009808
        %v1601 = vunpack.c.0.s8 %v1600
        %v1602 = vlaneseq
        %v1603 = vshrl.u32 %v1602, 7
        %v1604 = vsub.s32 %v1601, %v1603
        %v1605 = vrot.slane %v1597, %v1604
        %v1607 = vunpack.c.l.s4 1983009808
        %v1608 = vunpack.c.0.s8 %v1607
        %v1609 = vlaneseq
        %v1610 = vshrl.u32 %v1609, 7
        %v1611 = vsub.s32 %v1608, %v1610
        %v1612 = vrot.slane %v1598, %v1611
        %v1613 = vcombine.low %v1557, %v1573
        %v1614 = vcombine.high %v1557, %v1573
        %v1616 = vunpack.c.l.s4 1934713408
        %v1617 = vunpack.c.0.s8 %v1616
        %v1618 = vlaneseq
        %v1619 = vshrl.u32 %v1618, 7
        %v1620 = vsub.s32 %v1617, %v1619
        %v1621 = vrot.slane %v1613, %v1620
        %v1623 = vunpack.c.l.s4 1934713408
        %v1624 = vunpack.c.0.s8 %v1623
        %v1625 = vlaneseq
        %v1626 = vshrl.u32 %v1625, 7
        %v1627 = vsub.s32 %v1624, %v1626
        %v1628 = vrot.slane %v1614, %v1627
        %v1629 = vcombine.low %v1564, %v1580
        %v1630 = vcombine.high %v1564, %v1580
        %v1632 = vunpack.c.l.s4 1934713408
        %v1633 = vunpack.c.0.s8 %v1632
        %v1634 = vlaneseq
        %v1635 = vshrl.u32 %v1634, 7
        %v1636 = vsub.s32 %v1633, %v1635
        %v1637 = vrot.slane %v1629, %v1636
        %v1639 = vunpack.c.l.s4 1934713408
        %v1640 = vunpack.c.0.s8 %v1639
        %v1641 = vlaneseq
        %v1642 = vshrl.u32 %v1641, 7
        %v1643 = vsub.s32 %v1640, %v1642
        %v1644 = vrot.slane %v1630, %v1643
        %v1645 = vcombine.low %v1589, %v1605
        %v1646 = vcombine.high %v1589, %v1605
        %v1648 = vunpack.c.l.s4 1934713408
        %v1649 = vunpack.c.0.s8 %v1648
        %v1650 = vlaneseq
        %v1651 = vshrl.u32 %v1650, 7
        %v1652 = vsub.s32 %v1649, %v1651
        %v1653 = vrot.slane %v1645, %v1652
        %v1655 = vunpack.c.l.s4 1934713408
        %v1656 = vunpack.c.0.s8 %v1655
        %v1657 = vlaneseq
        %v1658 = vshrl.u32 %v1657, 7
        %v1659 = vsub.s32 %v1656, %v1658
        %v1660 = vrot.slane %v1646, %v1659
        %v1661 = vcombine.low %v1596, %v1612
        %v1662 = vcombine.high %v1596, %v1612
        %v1664 = vunpack.c.l.s4 1934713408
        %v1665 = vunpack.c.0.s8 %v1664
        %v1666 = vlaneseq
        %v1667 = vshrl.u32 %v1666, 7
        %v1668 = vsub.s32 %v1665, %v1667
        %v1669 = vrot.slane %v1661, %v1668
        %v1671 = vunpack.c.l.s4 1934713408
        %v1672 = vunpack.c.0.s8 %v1671
        %v1673 = vlaneseq
        %v1674 = vshrl.u32 %v1673, 7
        %v1675 = vsub.s32 %v1672, %v1674
        %v1676 = vrot.slane %v1662, %v1675
        %v1677 = vcombine.low %v1621, %v1653
        %v1678 = vcombine.high %v1621, %v1653
        %v1679 = vcombine.low %v1628, %v1660
        %v1680 = vcombine.high %v1628, %v1660
        %v1681 = vcombine.low %v1637, %v1669
        %v1682 = vcombine.high %v1637, %v1669
        %v1683 = vcombine.low %v1644, %v1676
        %v1684 = vcombine.high %v1644, %v1676
        %v1685 = vcombine.low %v1269, %v1271
        %v1686 = vcombine.high %v1269, %v1271
        %v1688 = vunpack.c.l.s4 1983009808
        %v1689 = vunpack.c.0.s8 %v1688
        %v1690 = vlaneseq
        %v1691 = vshrl.u32 %v1690, 7
        %v1692 = vsub.s32 %v1689, %v1691
        %v1693 = vrot.slane %v1685, %v1692
        %v1695 = vunpack.c.l.s4 1983009808
        %v1696 = vunpack.c.0.s8 %v1695
        %v1697 = vlaneseq
        %v1698 = vshrl.u32 %v1697, 7
        %v1699 = vsub.s32 %v1696, %v1698
        %v1700 = vrot.slane %v1686, %v1699
        %v1701 = vcombine.low %v1270, %v1272
        %v1702 = vcombine.high %v1270, %v1272
        %v1704 = vunpack.c.l.s4 1983009808
        %v1705 = vunpack.c.0.s8 %v1704
        %v1706 = vlaneseq
        %v1707 = vshrl.u32 %v1706, 7
        %v1708 = vsub.s32 %v1705, %v1707
        %v1709 = vrot.slane %v1701, %v1708
        %v1711 = vunpack.c.l.s4 1983009808
        %v1712 = vunpack.c.0.s8 %v1711
        %v1713 = vlaneseq
        %v1714 = vshrl.u32 %v1713, 7
        %v1715 = vsub.s32 %v1712, %v1714
        %v1716 = vrot.slane %v1702, %v1715
        %v1717 = vcombine.low %v1273, %v1275
        %v1718 = vcombine.high %v1273, %v1275
        %v1720 = vunpack.c.l.s4 1983009808
        %v1721 = vunpack.c.0.s8 %v1720
        %v1722 = vlaneseq
        %v1723 = vshrl.u32 %v1722, 7
        %v1724 = vsub.s32 %v1721, %v1723
        %v1725 = vrot.slane %v1717, %v1724
        %v1727 = vunpack.c.l.s4 1983009808
        %v1728 = vunpack.c.0.s8 %v1727
        %v1729 = vlaneseq
        %v1730 = vshrl.u32 %v1729, 7
        %v1731 = vsub.s32 %v1728, %v1730
        %v1732 = vrot.slane %v1718, %v1731
        %v1733 = vcombine.low %v1274, %v1276
        %v1734 = vcombine.high %v1274, %v1276
        %v1736 = vunpack.c.l.s4 1983009808
        %v1737 = vunpack.c.0.s8 %v1736
        %v1738 = vlaneseq
        %v1739 = vshrl.u32 %v1738, 7
        %v1740 = vsub.s32 %v1737, %v1739
        %v1741 = vrot.slane %v1733, %v1740
        %v1743 = vunpack.c.l.s4 1983009808
        %v1744 = vunpack.c.0.s8 %v1743
        %v1745 = vlaneseq
        %v1746 = vshrl.u32 %v1745, 7
        %v1747 = vsub.s32 %v1744, %v1746
        %v1748 = vrot.slane %v1734, %v1747
        %v1749 = vcombine.low %v1693, %v1709
        %v1750 = vcombine.high %v1693, %v1709
        %v1752 = vunpack.c.l.s4 1934713408
        %v1753 = vunpack.c.0.s8 %v1752
        %v1754 = vlaneseq
        %v1755 = vshrl.u32 %v1754, 7
        %v1756 = vsub.s32 %v1753, %v1755
        %v1757 = vrot.slane %v1749, %v1756
        %v1759 = vunpack.c.l.s4 1934713408
        %v1760 = vunpack.c.0.s8 %v1759
        %v1761 = vlaneseq
        %v1762 = vshrl.u32 %v1761, 7
        %v1763 = vsub.s32 %v1760, %v1762
        %v1764 = vrot.slane %v1750, %v1763
        %v1765 = vcombine.low %v1700, %v1716
        %v1766 = vcombine.high %v1700, %v1716
        %v1768 = vunpack.c.l.s4 1934713408
        %v1769 = vunpack.c.0.s8 %v1768
        %v1770 = vlaneseq
        %v1771 = vshrl.u32 %v1770, 7
        %v1772 = vsub.s32 %v1769, %v1771
        %v1773 = vrot.slane %v1765, %v1772
        %v1775 = vunpack.c.l.s4 1934713408
        %v1776 = vunpack.c.0.s8 %v1775
        %v1777 = vlaneseq
        %v1778 = vshrl.u32 %v1777, 7
        %v1779 = vsub.s32 %v1776, %v1778
        %v1780 = vrot.slane %v1766, %v1779
        %v1781 = vcombine.low %v1725, %v1741
        %v1782 = vcombine.high %v1725, %v1741
        %v1784 = vunpack.c.l.s4 1934713408
        %v1785 = vunpack.c.0.s8 %v1784
        %v1786 = vlaneseq
        %v1787 = vshrl.u32 %v1786, 7
        %v1788 = vsub.s32 %v1785, %v1787
        %v1789 = vrot.slane %v1781, %v1788
        %v1791 = vunpack.c.l.s4 1934713408
        %v1792 = vunpack.c.0.s8 %v1791
        %v1793 = vlaneseq
        %v1794 = vshrl.u32 %v1793, 7
        %v1795 = vsub.s32 %v1792, %v1794
        %v1796 = vrot.slane %v1782, %v1795
        %v1797 = vcombine.low %v1732, %v1748
        %v1798 = vcombine.high %v1732, %v1748
        %v1800 = vunpack.c.l.s4 1934713408
        %v1801 = vunpack.c.0.s8 %v1800
        %v1802 = vlaneseq
        %v1803 = vshrl.u32 %v1802, 7
        %v1804 = vsub.s32 %v1801, %v1803
        %v1805 = vrot.slane %v1797, %v1804
        %v1807 = vunpack.c.l.s4 1934713408
        %v1808 = vunpack.c.0.s8 %v1807
        %v1809 = vlaneseq
        %v1810 = vshrl.u32 %v1809, 7
        %v1811 = vsub.s32 %v1808, %v1810
        %v1812 = vrot.slane %v1798, %v1811
        %v1813 = vcombine.low %v1757, %v1789
        %v1814 = vcombine.high %v1757, %v1789
        %v1815 = vcombine.low %v1764, %v1796
        %v1816 = vcombine.high %v1764, %v1796
        %v1817 = vcombine.low %v1773, %v1805
        %v1818 = vcombine.high %v1773, %v1805
        %v1819 = vcombine.low %v1780, %v1812
        %v1820 = vcombine.high %v1780, %v1812
        %v1821 = vcombine.low %v1405, %v1407
        %v1822 = vcombine.high %v1405, %v1407
        %v1824 = vunpack.c.l.s4 1983009808
        %v1825 = vunpack.c.0.s8 %v1824
        %v1826 = vlaneseq
        %v1827 = vshrl.u32 %v1826, 7
        %v1828 = vsub.s32 %v1825, %v1827
        %v1829 = vrot.slane %v1821, %v1828
        %v1831 = vunpack.c.l.s4 1983009808
        %v1832 = vunpack.c.0.s8 %v1831
        %v1833 = vlaneseq
        %v1834 = vshrl.u32 %v1833, 7
        %v1835 = vsub.s32 %v1832, %v1834
        %v1836 = vrot.slane %v1822, %v1835
        %v1837 = vcombine.low %v1406, %v1408
        %v1838 = vcombine.high %v1406, %v1408
        %v1840 = vunpack.c.l.s4 1983009808
        %v1841 = vunpack.c.0.s8 %v1840
        %v1842 = vlaneseq
        %v1843 = vshrl.u32 %v1842, 7
        %v1844 = vsub.s32 %v1841, %v1843
        %v1845 = vrot.slane %v1837, %v1844
        %v1847 = vunpack.c.l.s4 1983009808
        %v1848 = vunpack.c.0.s8 %v1847
        %v1849 = vlaneseq
        %v1850 = vshrl.u32 %v1849, 7
        %v1851 = vsub.s32 %v1848, %v1850
        %v1852 = vrot.slane %v1838, %v1851
        %v1853 = vcombine.low %v1409, %v1411
        %v1854 = vcombine.high %v1409, %v1411
        %v1856 = vunpack.c.l.s4 1983009808
        %v1857 = vunpack.c.0.s8 %v1856
        %v1858 = vlaneseq
        %v1859 = vshrl.u32 %v1858, 7
        %v1860 = vsub.s32 %v1857, %v1859
        %v1861 = vrot.slane %v1853, %v1860
        %v1863 = vunpack.c.l.s4 1983009808
        %v1864 = vunpack.c.0.s8 %v1863
        %v1865 = vlaneseq
        %v1866 = vshrl.u32 %v1865, 7
        %v1867 = vsub.s32 %v1864, %v1866
        %v1868 = vrot.slane %v1854, %v1867
        %v1869 = vcombine.low %v1410, %v1412
        %v1870 = vcombine.high %v1410, %v1412
        %v1872 = vunpack.c.l.s4 1983009808
        %v1873 = vunpack.c.0.s8 %v1872
        %v1874 = vlaneseq
        %v1875 = vshrl.u32 %v1874, 7
        %v1876 = vsub.s32 %v1873, %v1875
        %v1877 = vrot.slane %v1869, %v1876
        %v1879 = vunpack.c.l.s4 1983009808
        %v1880 = vunpack.c.0.s8 %v1879
        %v1881 = vlaneseq
        %v1882 = vshrl.u32 %v1881, 7
        %v1883 = vsub.s32 %v1880, %v1882
        %v1884 = vrot.slane %v1870, %v1883
        %v1885 = vcombine.low %v1829, %v1845
        %v1886 = vcombine.high %v1829, %v1845
        %v1888 = vunpack.c.l.s4 1934713408
        %v1889 = vunpack.c.0.s8 %v1888
        %v1890 = vlaneseq
        %v1891 = vshrl.u32 %v1890, 7
        %v1892 = vsub.s32 %v1889, %v1891
        %v1893 = vrot.slane %v1885, %v1892
        %v1895 = vunpack.c.l.s4 1934713408
        %v1896 = vunpack.c.0.s8 %v1895
        %v1897 = vlaneseq
        %v1898 = vshrl.u32 %v1897, 7
        %v1899 = vsub.s32 %v1896, %v1898
        %v1900 = vrot.slane %v1886, %v1899
        %v1901 = vcombine.low %v1836, %v1852
        %v1902 = vcombine.high %v1836, %v1852
        %v1904 = vunpack.c.l.s4 1934713408
        %v1905 = vunpack.c.0.s8 %v1904
        %v1906 = vlaneseq
        %v1907 = vshrl.u32 %v1906, 7
        %v1908 = vsub.s32 %v1905, %v1907
        %v1909 = vrot.slane %v1901, %v1908
        %v1911 = vunpack.c.l.s4 1934713408
        %v1912 = vunpack.c.0.s8 %v1911
        %v1913 = vlaneseq
        %v1914 = vshrl.u32 %v1913, 7
        %v1915 = vsub.s32 %v1912, %v1914
        %v1916 = vrot.slane %v1902, %v1915
        %v1917 = vcombine.low %v1861, %v1877
        %v1918 = vcombine.high %v1861, %v1877
        %v1920 = vunpack.c.l.s4 1934713408
        %v1921 = vunpack.c.0.s8 %v1920
        %v1922 = vlaneseq
        %v1923 = vshrl.u32 %v1922, 7
        %v1924 = vsub.s32 %v1921, %v1923
        %v1925 = vrot.slane %v1917, %v1924
        %v1927 = vunpack.c.l.s4 1934713408
        %v1928 = vunpack.c.0.s8 %v1927
        %v1929 = vlaneseq
        %v1930 = vshrl.u32 %v1929, 7
        %v1931 = vsub.s32 %v1928, %v1930
        %v1932 = vrot.slane %v1918, %v1931
        %v1933 = vcombine.low %v1868, %v1884
        %v1934 = vcombine.high %v1868, %v1884
        %v1936 = vunpack.c.l.s4 1934713408
        %v1937 = vunpack.c.0.s8 %v1936
        %v1938 = vlaneseq
        %v1939 = vshrl.u32 %v1938, 7
        %v1940 = vsub.s32 %v1937, %v1939
        %v1941 = vrot.slane %v1933, %v1940
        %v1943 = vunpack.c.l.s4 1934713408
        %v1944 = vunpack.c.0.s8 %v1943
        %v1945 = vlaneseq
        %v1946 = vshrl.u32 %v1945, 7
        %v1947 = vsub.s32 %v1944, %v1946
        %v1948 = vrot.slane %v1934, %v1947
        %v1949 = vcombine.low %v1893, %v1925
        %v1950 = vcombine.high %v1893, %v1925
        %v1951 = vcombine.low %v1900, %v1932
        %v1952 = vcombine.high %v1900, %v1932
        %v1953 = vcombine.low %v1909, %v1941
        %v1954 = vcombine.high %v1909, %v1941
        %v1955 = vcombine.low %v1916, %v1948
        %v1956 = vcombine.high %v1916, %v1948
        %1961 = vrot.lane.b32.xlu0 %v759, 112
        %v1962 = vpop.permute.xlu0 %1961
        %1963 = vrot.lane.b32.xlu0 %v765, 112
        %v1964 = vpop.permute.xlu0 %1963
        %1965 = vrot.lane.b32.xlu0 %v771, 112
        %v1966 = vpop.permute.xlu0 %1965
        %1967 = vrot.lane.b32.xlu0 %v777, 112
        %v1968 = vpop.permute.xlu0 %1967
        %1973 = vrot.lane.b32.xlu0 %v759, 96
        %v1974 = vpop.permute.xlu0 %1973
        %1975 = vrot.lane.b32.xlu0 %v765, 96
        %v1976 = vpop.permute.xlu0 %1975
        %1977 = vrot.lane.b32.xlu0 %v771, 96
        %v1978 = vpop.permute.xlu0 %1977
        %1979 = vrot.lane.b32.xlu0 %v777, 96
        %v1980 = vpop.permute.xlu0 %1979
        %1985 = vrot.lane.b32.xlu0 %v759, 80
        %v1986 = vpop.permute.xlu0 %1985
        %1987 = vrot.lane.b32.xlu0 %v765, 80
        %v1988 = vpop.permute.xlu0 %1987
        %1989 = vrot.lane.b32.xlu0 %v771, 80
        %v1990 = vpop.permute.xlu0 %1989
        %1991 = vrot.lane.b32.xlu0 %v777, 80
        %v1992 = vpop.permute.xlu0 %1991
        %1997 = vrot.lane.b32.xlu0 %v759, 64
        %v1998 = vpop.permute.xlu0 %1997
        %1999 = vrot.lane.b32.xlu0 %v765, 64
        %v2000 = vpop.permute.xlu0 %1999
        %2001 = vrot.lane.b32.xlu0 %v771, 64
        %v2002 = vpop.permute.xlu0 %2001
        %2003 = vrot.lane.b32.xlu0 %v777, 64
        %v2004 = vpop.permute.xlu0 %2003
        %2009 = vrot.lane.b32.xlu0 %v759, 48
        %v2010 = vpop.permute.xlu0 %2009
        %2011 = vrot.lane.b32.xlu0 %v765, 48
        %v2012 = vpop.permute.xlu0 %2011
        %2013 = vrot.lane.b32.xlu0 %v771, 48
        %v2014 = vpop.permute.xlu0 %2013
        %2015 = vrot.lane.b32.xlu0 %v777, 48
        %v2016 = vpop.permute.xlu0 %2015
        %2021 = vrot.lane.b32.xlu0 %v759, 32
        %v2022 = vpop.permute.xlu0 %2021
        %2023 = vrot.lane.b32.xlu0 %v765, 32
        %v2024 = vpop.permute.xlu0 %2023
        %2025 = vrot.lane.b32.xlu0 %v771, 32
        %v2026 = vpop.permute.xlu0 %2025
        %2027 = vrot.lane.b32.xlu0 %v777, 32
        %v2028 = vpop.permute.xlu0 %2027
        %2033 = vrot.lane.b32.xlu0 %v759, 16
        %v2034 = vpop.permute.xlu0 %2033
        %2035 = vrot.lane.b32.xlu0 %v765, 16
        %v2036 = vpop.permute.xlu0 %2035
        %2037 = vrot.lane.b32.xlu0 %v771, 16
        %v2038 = vpop.permute.xlu0 %2037
        %2039 = vrot.lane.b32.xlu0 %v777, 16
        %v2040 = vpop.permute.xlu0 %2039
        %v2045 = vcombine.low %v759, %v1974
        %v2046 = vcombine.high %v759, %v1974
        %v2048 = vunpack.c.l.s4 1983009808
        %v2049 = vunpack.c.0.s8 %v2048
        %v2050 = vlaneseq
        %v2051 = vshrl.u32 %v2050, 7
        %v2052 = vsub.s32 %v2049, %v2051
        %v2053 = vrot.slane %v2045, %v2052
        %v2055 = vunpack.c.l.s4 1983009808
        %v2056 = vunpack.c.0.s8 %v2055
        %v2057 = vlaneseq
        %v2058 = vshrl.u32 %v2057, 7
        %v2059 = vsub.s32 %v2056, %v2058
        %v2060 = vrot.slane %v2046, %v2059
        %v2061 = vcombine.low %v1962, %v1986
        %v2062 = vcombine.high %v1962, %v1986
        %v2064 = vunpack.c.l.s4 1983009808
        %v2065 = vunpack.c.0.s8 %v2064
        %v2066 = vlaneseq
        %v2067 = vshrl.u32 %v2066, 7
        %v2068 = vsub.s32 %v2065, %v2067
        %v2069 = vrot.slane %v2061, %v2068
        %v2071 = vunpack.c.l.s4 1983009808
        %v2072 = vunpack.c.0.s8 %v2071
        %v2073 = vlaneseq
        %v2074 = vshrl.u32 %v2073, 7
        %v2075 = vsub.s32 %v2072, %v2074
        %v2076 = vrot.slane %v2062, %v2075
        %v2077 = vcombine.low %v1998, %v2022
        %v2078 = vcombine.high %v1998, %v2022
        %v2080 = vunpack.c.l.s4 1983009808
        %v2081 = vunpack.c.0.s8 %v2080
        %v2082 = vlaneseq
        %v2083 = vshrl.u32 %v2082, 7
        %v2084 = vsub.s32 %v2081, %v2083
        %v2085 = vrot.slane %v2077, %v2084
        %v2087 = vunpack.c.l.s4 1983009808
        %v2088 = vunpack.c.0.s8 %v2087
        %v2089 = vlaneseq
        %v2090 = vshrl.u32 %v2089, 7
        %v2091 = vsub.s32 %v2088, %v2090
        %v2092 = vrot.slane %v2078, %v2091
        %v2093 = vcombine.low %v2010, %v2034
        %v2094 = vcombine.high %v2010, %v2034
        %v2096 = vunpack.c.l.s4 1983009808
        %v2097 = vunpack.c.0.s8 %v2096
        %v2098 = vlaneseq
        %v2099 = vshrl.u32 %v2098, 7
        %v2100 = vsub.s32 %v2097, %v2099
        %v2101 = vrot.slane %v2093, %v2100
        %v2103 = vunpack.c.l.s4 1983009808
        %v2104 = vunpack.c.0.s8 %v2103
        %v2105 = vlaneseq
        %v2106 = vshrl.u32 %v2105, 7
        %v2107 = vsub.s32 %v2104, %v2106
        %v2108 = vrot.slane %v2094, %v2107
        %v2109 = vcombine.low %v2053, %v2069
        %v2110 = vcombine.high %v2053, %v2069
        %v2112 = vunpack.c.l.s4 1934713408
        %v2113 = vunpack.c.0.s8 %v2112
        %v2114 = vlaneseq
        %v2115 = vshrl.u32 %v2114, 7
        %v2116 = vsub.s32 %v2113, %v2115
        %v2117 = vrot.slane %v2109, %v2116
        %v2119 = vunpack.c.l.s4 1934713408
        %v2120 = vunpack.c.0.s8 %v2119
        %v2121 = vlaneseq
        %v2122 = vshrl.u32 %v2121, 7
        %v2123 = vsub.s32 %v2120, %v2122
        %v2124 = vrot.slane %v2110, %v2123
        %v2125 = vcombine.low %v2060, %v2076
        %v2126 = vcombine.high %v2060, %v2076
        %v2128 = vunpack.c.l.s4 1934713408
        %v2129 = vunpack.c.0.s8 %v2128
        %v2130 = vlaneseq
        %v2131 = vshrl.u32 %v2130, 7
        %v2132 = vsub.s32 %v2129, %v2131
        %v2133 = vrot.slane %v2125, %v2132
        %v2135 = vunpack.c.l.s4 1934713408
        %v2136 = vunpack.c.0.s8 %v2135
        %v2137 = vlaneseq
        %v2138 = vshrl.u32 %v2137, 7
        %v2139 = vsub.s32 %v2136, %v2138
        %v2140 = vrot.slane %v2126, %v2139
        %v2141 = vcombine.low %v2085, %v2101
        %v2142 = vcombine.high %v2085, %v2101
        %v2144 = vunpack.c.l.s4 1934713408
        %v2145 = vunpack.c.0.s8 %v2144
        %v2146 = vlaneseq
        %v2147 = vshrl.u32 %v2146, 7
        %v2148 = vsub.s32 %v2145, %v2147
        %v2149 = vrot.slane %v2141, %v2148
        %v2151 = vunpack.c.l.s4 1934713408
        %v2152 = vunpack.c.0.s8 %v2151
        %v2153 = vlaneseq
        %v2154 = vshrl.u32 %v2153, 7
        %v2155 = vsub.s32 %v2152, %v2154
        %v2156 = vrot.slane %v2142, %v2155
        %v2157 = vcombine.low %v2092, %v2108
        %v2158 = vcombine.high %v2092, %v2108
        %v2160 = vunpack.c.l.s4 1934713408
        %v2161 = vunpack.c.0.s8 %v2160
        %v2162 = vlaneseq
        %v2163 = vshrl.u32 %v2162, 7
        %v2164 = vsub.s32 %v2161, %v2163
        %v2165 = vrot.slane %v2157, %v2164
        %v2167 = vunpack.c.l.s4 1934713408
        %v2168 = vunpack.c.0.s8 %v2167
        %v2169 = vlaneseq
        %v2170 = vshrl.u32 %v2169, 7
        %v2171 = vsub.s32 %v2168, %v2170
        %v2172 = vrot.slane %v2158, %v2171
        %v2173 = vcombine.low %v2117, %v2149
        %v2174 = vcombine.high %v2117, %v2149
        %v2175 = vcombine.low %v2124, %v2156
        %v2176 = vcombine.high %v2124, %v2156
        %v2177 = vcombine.low %v2133, %v2165
        %v2178 = vcombine.high %v2133, %v2165
        %v2179 = vcombine.low %v2140, %v2172
        %v2180 = vcombine.high %v2140, %v2172
        %v2181 = vcombine.low %v765, %v1976
        %v2182 = vcombine.high %v765, %v1976
        %v2184 = vunpack.c.l.s4 1983009808
        %v2185 = vunpack.c.0.s8 %v2184
        %v2186 = vlaneseq
        %v2187 = vshrl.u32 %v2186, 7
        %v2188 = vsub.s32 %v2185, %v2187
        %v2189 = vrot.slane %v2181, %v2188
        %v2191 = vunpack.c.l.s4 1983009808
        %v2192 = vunpack.c.0.s8 %v2191
        %v2193 = vlaneseq
        %v2194 = vshrl.u32 %v2193, 7
        %v2195 = vsub.s32 %v2192, %v2194
        %v2196 = vrot.slane %v2182, %v2195
        %v2197 = vcombine.low %v1964, %v1988
        %v2198 = vcombine.high %v1964, %v1988
        %v2200 = vunpack.c.l.s4 1983009808
        %v2201 = vunpack.c.0.s8 %v2200
        %v2202 = vlaneseq
        %v2203 = vshrl.u32 %v2202, 7
        %v2204 = vsub.s32 %v2201, %v2203
        %v2205 = vrot.slane %v2197, %v2204
        %v2207 = vunpack.c.l.s4 1983009808
        %v2208 = vunpack.c.0.s8 %v2207
        %v2209 = vlaneseq
        %v2210 = vshrl.u32 %v2209, 7
        %v2211 = vsub.s32 %v2208, %v2210
        %v2212 = vrot.slane %v2198, %v2211
        %v2213 = vcombine.low %v2000, %v2024
        %v2214 = vcombine.high %v2000, %v2024
        %v2216 = vunpack.c.l.s4 1983009808
        %v2217 = vunpack.c.0.s8 %v2216
        %v2218 = vlaneseq
        %v2219 = vshrl.u32 %v2218, 7
        %v2220 = vsub.s32 %v2217, %v2219
        %v2221 = vrot.slane %v2213, %v2220
        %v2223 = vunpack.c.l.s4 1983009808
        %v2224 = vunpack.c.0.s8 %v2223
        %v2225 = vlaneseq
        %v2226 = vshrl.u32 %v2225, 7
        %v2227 = vsub.s32 %v2224, %v2226
        %v2228 = vrot.slane %v2214, %v2227
        %v2229 = vcombine.low %v2012, %v2036
        %v2230 = vcombine.high %v2012, %v2036
        %v2232 = vunpack.c.l.s4 1983009808
        %v2233 = vunpack.c.0.s8 %v2232
        %v2234 = vlaneseq
        %v2235 = vshrl.u32 %v2234, 7
        %v2236 = vsub.s32 %v2233, %v2235
        %v2237 = vrot.slane %v2229, %v2236
        %v2239 = vunpack.c.l.s4 1983009808
        %v2240 = vunpack.c.0.s8 %v2239
        %v2241 = vlaneseq
        %v2242 = vshrl.u32 %v2241, 7
        %v2243 = vsub.s32 %v2240, %v2242
        %v2244 = vrot.slane %v2230, %v2243
        %v2245 = vcombine.low %v2189, %v2205
        %v2246 = vcombine.high %v2189, %v2205
        %v2248 = vunpack.c.l.s4 1934713408
        %v2249 = vunpack.c.0.s8 %v2248
        %v2250 = vlaneseq
        %v2251 = vshrl.u32 %v2250, 7
        %v2252 = vsub.s32 %v2249, %v2251
        %v2253 = vrot.slane %v2245, %v2252
        %v2255 = vunpack.c.l.s4 1934713408
        %v2256 = vunpack.c.0.s8 %v2255
        %v2257 = vlaneseq
        %v2258 = vshrl.u32 %v2257, 7
        %v2259 = vsub.s32 %v2256, %v2258
        %v2260 = vrot.slane %v2246, %v2259
        %v2261 = vcombine.low %v2196, %v2212
        %v2262 = vcombine.high %v2196, %v2212
        %v2264 = vunpack.c.l.s4 1934713408
        %v2265 = vunpack.c.0.s8 %v2264
        %v2266 = vlaneseq
        %v2267 = vshrl.u32 %v2266, 7
        %v2268 = vsub.s32 %v2265, %v2267
        %v2269 = vrot.slane %v2261, %v2268
        %v2271 = vunpack.c.l.s4 1934713408
        %v2272 = vunpack.c.0.s8 %v2271
        %v2273 = vlaneseq
        %v2274 = vshrl.u32 %v2273, 7
        %v2275 = vsub.s32 %v2272, %v2274
        %v2276 = vrot.slane %v2262, %v2275
        %v2277 = vcombine.low %v2221, %v2237
        %v2278 = vcombine.high %v2221, %v2237
        %v2280 = vunpack.c.l.s4 1934713408
        %v2281 = vunpack.c.0.s8 %v2280
        %v2282 = vlaneseq
        %v2283 = vshrl.u32 %v2282, 7
        %v2284 = vsub.s32 %v2281, %v2283
        %v2285 = vrot.slane %v2277, %v2284
        %v2287 = vunpack.c.l.s4 1934713408
        %v2288 = vunpack.c.0.s8 %v2287
        %v2289 = vlaneseq
        %v2290 = vshrl.u32 %v2289, 7
        %v2291 = vsub.s32 %v2288, %v2290
        %v2292 = vrot.slane %v2278, %v2291
        %v2293 = vcombine.low %v2228, %v2244
        %v2294 = vcombine.high %v2228, %v2244
        %v2296 = vunpack.c.l.s4 1934713408
        %v2297 = vunpack.c.0.s8 %v2296
        %v2298 = vlaneseq
        %v2299 = vshrl.u32 %v2298, 7
        %v2300 = vsub.s32 %v2297, %v2299
        %v2301 = vrot.slane %v2293, %v2300
        %v2303 = vunpack.c.l.s4 1934713408
        %v2304 = vunpack.c.0.s8 %v2303
        %v2305 = vlaneseq
        %v2306 = vshrl.u32 %v2305, 7
        %v2307 = vsub.s32 %v2304, %v2306
        %v2308 = vrot.slane %v2294, %v2307
        %v2309 = vcombine.low %v2253, %v2285
        %v2310 = vcombine.high %v2253, %v2285
        %v2311 = vcombine.low %v2260, %v2292
        %v2312 = vcombine.high %v2260, %v2292
        %v2313 = vcombine.low %v2269, %v2301
        %v2314 = vcombine.high %v2269, %v2301
        %v2315 = vcombine.low %v2276, %v2308
        %v2316 = vcombine.high %v2276, %v2308
        %v2317 = vcombine.low %v771, %v1978
        %v2318 = vcombine.high %v771, %v1978
        %v2320 = vunpack.c.l.s4 1983009808
        %v2321 = vunpack.c.0.s8 %v2320
        %v2322 = vlaneseq
        %v2323 = vshrl.u32 %v2322, 7
        %v2324 = vsub.s32 %v2321, %v2323
        %v2325 = vrot.slane %v2317, %v2324
        %v2327 = vunpack.c.l.s4 1983009808
        %v2328 = vunpack.c.0.s8 %v2327
        %v2329 = vlaneseq
        %v2330 = vshrl.u32 %v2329, 7
        %v2331 = vsub.s32 %v2328, %v2330
        %v2332 = vrot.slane %v2318, %v2331
        %v2333 = vcombine.low %v1966, %v1990
        %v2334 = vcombine.high %v1966, %v1990
        %v2336 = vunpack.c.l.s4 1983009808
        %v2337 = vunpack.c.0.s8 %v2336
        %v2338 = vlaneseq
        %v2339 = vshrl.u32 %v2338, 7
        %v2340 = vsub.s32 %v2337, %v2339
        %v2341 = vrot.slane %v2333, %v2340
        %v2343 = vunpack.c.l.s4 1983009808
        %v2344 = vunpack.c.0.s8 %v2343
        %v2345 = vlaneseq
        %v2346 = vshrl.u32 %v2345, 7
        %v2347 = vsub.s32 %v2344, %v2346
        %v2348 = vrot.slane %v2334, %v2347
        %v2349 = vcombine.low %v2002, %v2026
        %v2350 = vcombine.high %v2002, %v2026
        %v2352 = vunpack.c.l.s4 1983009808
        %v2353 = vunpack.c.0.s8 %v2352
        %v2354 = vlaneseq
        %v2355 = vshrl.u32 %v2354, 7
        %v2356 = vsub.s32 %v2353, %v2355
        %v2357 = vrot.slane %v2349, %v2356
        %v2359 = vunpack.c.l.s4 1983009808
        %v2360 = vunpack.c.0.s8 %v2359
        %v2361 = vlaneseq
        %v2362 = vshrl.u32 %v2361, 7
        %v2363 = vsub.s32 %v2360, %v2362
        %v2364 = vrot.slane %v2350, %v2363
        %v2365 = vcombine.low %v2014, %v2038
        %v2366 = vcombine.high %v2014, %v2038
        %v2368 = vunpack.c.l.s4 1983009808
        %v2369 = vunpack.c.0.s8 %v2368
        %v2370 = vlaneseq
        %v2371 = vshrl.u32 %v2370, 7
        %v2372 = vsub.s32 %v2369, %v2371
        %v2373 = vrot.slane %v2365, %v2372
        %v2375 = vunpack.c.l.s4 1983009808
        %v2376 = vunpack.c.0.s8 %v2375
        %v2377 = vlaneseq
        %v2378 = vshrl.u32 %v2377, 7
        %v2379 = vsub.s32 %v2376, %v2378
        %v2380 = vrot.slane %v2366, %v2379
        %v2381 = vcombine.low %v2325, %v2341
        %v2382 = vcombine.high %v2325, %v2341
        %v2384 = vunpack.c.l.s4 1934713408
        %v2385 = vunpack.c.0.s8 %v2384
        %v2386 = vlaneseq
        %v2387 = vshrl.u32 %v2386, 7
        %v2388 = vsub.s32 %v2385, %v2387
        %v2389 = vrot.slane %v2381, %v2388
        %v2391 = vunpack.c.l.s4 1934713408
        %v2392 = vunpack.c.0.s8 %v2391
        %v2393 = vlaneseq
        %v2394 = vshrl.u32 %v2393, 7
        %v2395 = vsub.s32 %v2392, %v2394
        %v2396 = vrot.slane %v2382, %v2395
        %v2397 = vcombine.low %v2332, %v2348
        %v2398 = vcombine.high %v2332, %v2348
        %v2400 = vunpack.c.l.s4 1934713408
        %v2401 = vunpack.c.0.s8 %v2400
        %v2402 = vlaneseq
        %v2403 = vshrl.u32 %v2402, 7
        %v2404 = vsub.s32 %v2401, %v2403
        %v2405 = vrot.slane %v2397, %v2404
        %v2407 = vunpack.c.l.s4 1934713408
        %v2408 = vunpack.c.0.s8 %v2407
        %v2409 = vlaneseq
        %v2410 = vshrl.u32 %v2409, 7
        %v2411 = vsub.s32 %v2408, %v2410
        %v2412 = vrot.slane %v2398, %v2411
        %v2413 = vcombine.low %v2357, %v2373
        %v2414 = vcombine.high %v2357, %v2373
        %v2416 = vunpack.c.l.s4 1934713408
        %v2417 = vunpack.c.0.s8 %v2416
        %v2418 = vlaneseq
        %v2419 = vshrl.u32 %v2418, 7
        %v2420 = vsub.s32 %v2417, %v2419
        %v2421 = vrot.slane %v2413, %v2420
        %v2423 = vunpack.c.l.s4 1934713408
        %v2424 = vunpack.c.0.s8 %v2423
        %v2425 = vlaneseq
        %v2426 = vshrl.u32 %v2425, 7
        %v2427 = vsub.s32 %v2424, %v2426
        %v2428 = vrot.slane %v2414, %v2427
        %v2429 = vcombine.low %v2364, %v2380
        %v2430 = vcombine.high %v2364, %v2380
        %v2432 = vunpack.c.l.s4 1934713408
        %v2433 = vunpack.c.0.s8 %v2432
        %v2434 = vlaneseq
        %v2435 = vshrl.u32 %v2434, 7
        %v2436 = vsub.s32 %v2433, %v2435
        %v2437 = vrot.slane %v2429, %v2436
        %v2439 = vunpack.c.l.s4 1934713408
        %v2440 = vunpack.c.0.s8 %v2439
        %v2441 = vlaneseq
        %v2442 = vshrl.u32 %v2441, 7
        %v2443 = vsub.s32 %v2440, %v2442
        %v2444 = vrot.slane %v2430, %v2443
        %v2445 = vcombine.low %v2389, %v2421
        %v2446 = vcombine.high %v2389, %v2421
        %v2447 = vcombine.low %v2396, %v2428
        %v2448 = vcombine.high %v2396, %v2428
        %v2449 = vcombine.low %v2405, %v2437
        %v2450 = vcombine.high %v2405, %v2437
        %v2451 = vcombine.low %v2412, %v2444
        %v2452 = vcombine.high %v2412, %v2444
        %v2453 = vcombine.low %v777, %v1980
        %v2454 = vcombine.high %v777, %v1980
        %v2456 = vunpack.c.l.s4 1983009808
        %v2457 = vunpack.c.0.s8 %v2456
        %v2458 = vlaneseq
        %v2459 = vshrl.u32 %v2458, 7
        %v2460 = vsub.s32 %v2457, %v2459
        %v2461 = vrot.slane %v2453, %v2460
        %v2463 = vunpack.c.l.s4 1983009808
        %v2464 = vunpack.c.0.s8 %v2463
        %v2465 = vlaneseq
        %v2466 = vshrl.u32 %v2465, 7
        %v2467 = vsub.s32 %v2464, %v2466
        %v2468 = vrot.slane %v2454, %v2467
        %v2469 = vcombine.low %v1968, %v1992
        %v2470 = vcombine.high %v1968, %v1992
        %v2472 = vunpack.c.l.s4 1983009808
        %v2473 = vunpack.c.0.s8 %v2472
        %v2474 = vlaneseq
        %v2475 = vshrl.u32 %v2474, 7
        %v2476 = vsub.s32 %v2473, %v2475
        %v2477 = vrot.slane %v2469, %v2476
        %v2479 = vunpack.c.l.s4 1983009808
        %v2480 = vunpack.c.0.s8 %v2479
        %v2481 = vlaneseq
        %v2482 = vshrl.u32 %v2481, 7
        %v2483 = vsub.s32 %v2480, %v2482
        %v2484 = vrot.slane %v2470, %v2483
        %v2485 = vcombine.low %v2004, %v2028
        %v2486 = vcombine.high %v2004, %v2028
        %v2488 = vunpack.c.l.s4 1983009808
        %v2489 = vunpack.c.0.s8 %v2488
        %v2490 = vlaneseq
        %v2491 = vshrl.u32 %v2490, 7
        %v2492 = vsub.s32 %v2489, %v2491
        %v2493 = vrot.slane %v2485, %v2492
        %v2495 = vunpack.c.l.s4 1983009808
        %v2496 = vunpack.c.0.s8 %v2495
        %v2497 = vlaneseq
        %v2498 = vshrl.u32 %v2497, 7
        %v2499 = vsub.s32 %v2496, %v2498
        %v2500 = vrot.slane %v2486, %v2499
        %v2501 = vcombine.low %v2016, %v2040
        %v2502 = vcombine.high %v2016, %v2040
        %v2504 = vunpack.c.l.s4 1983009808
        %v2505 = vunpack.c.0.s8 %v2504
        %v2506 = vlaneseq
        %v2507 = vshrl.u32 %v2506, 7
        %v2508 = vsub.s32 %v2505, %v2507
        %v2509 = vrot.slane %v2501, %v2508
        %v2511 = vunpack.c.l.s4 1983009808
        %v2512 = vunpack.c.0.s8 %v2511
        %v2513 = vlaneseq
        %v2514 = vshrl.u32 %v2513, 7
        %v2515 = vsub.s32 %v2512, %v2514
        %v2516 = vrot.slane %v2502, %v2515
        %v2517 = vcombine.low %v2461, %v2477
        %v2518 = vcombine.high %v2461, %v2477
        %v2520 = vunpack.c.l.s4 1934713408
        %v2521 = vunpack.c.0.s8 %v2520
        %v2522 = vlaneseq
        %v2523 = vshrl.u32 %v2522, 7
        %v2524 = vsub.s32 %v2521, %v2523
        %v2525 = vrot.slane %v2517, %v2524
        %v2527 = vunpack.c.l.s4 1934713408
        %v2528 = vunpack.c.0.s8 %v2527
        %v2529 = vlaneseq
        %v2530 = vshrl.u32 %v2529, 7
        %v2531 = vsub.s32 %v2528, %v2530
        %v2532 = vrot.slane %v2518, %v2531
        %v2533 = vcombine.low %v2468, %v2484
        %v2534 = vcombine.high %v2468, %v2484
        %v2536 = vunpack.c.l.s4 1934713408
        %v2537 = vunpack.c.0.s8 %v2536
        %v2538 = vlaneseq
        %v2539 = vshrl.u32 %v2538, 7
        %v2540 = vsub.s32 %v2537, %v2539
        %v2541 = vrot.slane %v2533, %v2540
        %v2543 = vunpack.c.l.s4 1934713408
        %v2544 = vunpack.c.0.s8 %v2543
        %v2545 = vlaneseq
        %v2546 = vshrl.u32 %v2545, 7
        %v2547 = vsub.s32 %v2544, %v2546
        %v2548 = vrot.slane %v2534, %v2547
        %v2549 = vcombine.low %v2493, %v2509
        %v2550 = vcombine.high %v2493, %v2509
        %v2552 = vunpack.c.l.s4 1934713408
        %v2553 = vunpack.c.0.s8 %v2552
        %v2554 = vlaneseq
        %v2555 = vshrl.u32 %v2554, 7
        %v2556 = vsub.s32 %v2553, %v2555
        %v2557 = vrot.slane %v2549, %v2556
        %v2559 = vunpack.c.l.s4 1934713408
        %v2560 = vunpack.c.0.s8 %v2559
        %v2561 = vlaneseq
        %v2562 = vshrl.u32 %v2561, 7
        %v2563 = vsub.s32 %v2560, %v2562
        %v2564 = vrot.slane %v2550, %v2563
        %v2565 = vcombine.low %v2500, %v2516
        %v2566 = vcombine.high %v2500, %v2516
        %v2568 = vunpack.c.l.s4 1934713408
        %v2569 = vunpack.c.0.s8 %v2568
        %v2570 = vlaneseq
        %v2571 = vshrl.u32 %v2570, 7
        %v2572 = vsub.s32 %v2569, %v2571
        %v2573 = vrot.slane %v2565, %v2572
        %v2575 = vunpack.c.l.s4 1934713408
        %v2576 = vunpack.c.0.s8 %v2575
        %v2577 = vlaneseq
        %v2578 = vshrl.u32 %v2577, 7
        %v2579 = vsub.s32 %v2576, %v2578
        %v2580 = vrot.slane %v2566, %v2579
        %v2581 = vcombine.low %v2525, %v2557
        %v2582 = vcombine.high %v2525, %v2557
        %v2583 = vcombine.low %v2532, %v2564
        %v2584 = vcombine.high %v2532, %v2564
        %v2585 = vcombine.low %v2541, %v2573
        %v2586 = vcombine.high %v2541, %v2573
        %v2587 = vcombine.low %v2548, %v2580
        %v2588 = vcombine.high %v2548, %v2580
        %v2589 = vcombine.low %v2173, %v2175
        %v2590 = vcombine.high %v2173, %v2175
        %v2592 = vunpack.c.l.s4 1983009808
        %v2593 = vunpack.c.0.s8 %v2592
        %v2594 = vlaneseq
        %v2595 = vshrl.u32 %v2594, 7
        %v2596 = vsub.s32 %v2593, %v2595
        %v2597 = vrot.slane %v2589, %v2596
        %v2599 = vunpack.c.l.s4 1983009808
        %v2600 = vunpack.c.0.s8 %v2599
        %v2601 = vlaneseq
        %v2602 = vshrl.u32 %v2601, 7
        %v2603 = vsub.s32 %v2600, %v2602
        %v2604 = vrot.slane %v2590, %v2603
        %v2605 = vcombine.low %v2174, %v2176
        %v2606 = vcombine.high %v2174, %v2176
        %v2608 = vunpack.c.l.s4 1983009808
        %v2609 = vunpack.c.0.s8 %v2608
        %v2610 = vlaneseq
        %v2611 = vshrl.u32 %v2610, 7
        %v2612 = vsub.s32 %v2609, %v2611
        %v2613 = vrot.slane %v2605, %v2612
        %v2615 = vunpack.c.l.s4 1983009808
        %v2616 = vunpack.c.0.s8 %v2615
        %v2617 = vlaneseq
        %v2618 = vshrl.u32 %v2617, 7
        %v2619 = vsub.s32 %v2616, %v2618
        %v2620 = vrot.slane %v2606, %v2619
        %v2621 = vcombine.low %v2177, %v2179
        %v2622 = vcombine.high %v2177, %v2179
        %v2624 = vunpack.c.l.s4 1983009808
        %v2625 = vunpack.c.0.s8 %v2624
        %v2626 = vlaneseq
        %v2627 = vshrl.u32 %v2626, 7
        %v2628 = vsub.s32 %v2625, %v2627
        %v2629 = vrot.slane %v2621, %v2628
        %v2631 = vunpack.c.l.s4 1983009808
        %v2632 = vunpack.c.0.s8 %v2631
        %v2633 = vlaneseq
        %v2634 = vshrl.u32 %v2633, 7
        %v2635 = vsub.s32 %v2632, %v2634
        %v2636 = vrot.slane %v2622, %v2635
        %v2637 = vcombine.low %v2178, %v2180
        %v2638 = vcombine.high %v2178, %v2180
        %v2640 = vunpack.c.l.s4 1983009808
        %v2641 = vunpack.c.0.s8 %v2640
        %v2642 = vlaneseq
        %v2643 = vshrl.u32 %v2642, 7
        %v2644 = vsub.s32 %v2641, %v2643
        %v2645 = vrot.slane %v2637, %v2644
        %v2647 = vunpack.c.l.s4 1983009808
        %v2648 = vunpack.c.0.s8 %v2647
        %v2649 = vlaneseq
        %v2650 = vshrl.u32 %v2649, 7
        %v2651 = vsub.s32 %v2648, %v2650
        %v2652 = vrot.slane %v2638, %v2651
        %v2653 = vcombine.low %v2597, %v2613
        %v2654 = vcombine.high %v2597, %v2613
        %v2656 = vunpack.c.l.s4 1934713408
        %v2657 = vunpack.c.0.s8 %v2656
        %v2658 = vlaneseq
        %v2659 = vshrl.u32 %v2658, 7
        %v2660 = vsub.s32 %v2657, %v2659
        %v2661 = vrot.slane %v2653, %v2660
        %v2663 = vunpack.c.l.s4 1934713408
        %v2664 = vunpack.c.0.s8 %v2663
        %v2665 = vlaneseq
        %v2666 = vshrl.u32 %v2665, 7
        %v2667 = vsub.s32 %v2664, %v2666
        %v2668 = vrot.slane %v2654, %v2667
        %v2669 = vcombine.low %v2604, %v2620
        %v2670 = vcombine.high %v2604, %v2620
        %v2672 = vunpack.c.l.s4 1934713408
        %v2673 = vunpack.c.0.s8 %v2672
        %v2674 = vlaneseq
        %v2675 = vshrl.u32 %v2674, 7
        %v2676 = vsub.s32 %v2673, %v2675
        %v2677 = vrot.slane %v2669, %v2676
        %v2679 = vunpack.c.l.s4 1934713408
        %v2680 = vunpack.c.0.s8 %v2679
        %v2681 = vlaneseq
        %v2682 = vshrl.u32 %v2681, 7
        %v2683 = vsub.s32 %v2680, %v2682
        %v2684 = vrot.slane %v2670, %v2683
        %v2685 = vcombine.low %v2629, %v2645
        %v2686 = vcombine.high %v2629, %v2645
        %v2688 = vunpack.c.l.s4 1934713408
        %v2689 = vunpack.c.0.s8 %v2688
        %v2690 = vlaneseq
        %v2691 = vshrl.u32 %v2690, 7
        %v2692 = vsub.s32 %v2689, %v2691
        %v2693 = vrot.slane %v2685, %v2692
        %v2695 = vunpack.c.l.s4 1934713408
        %v2696 = vunpack.c.0.s8 %v2695
        %v2697 = vlaneseq
        %v2698 = vshrl.u32 %v2697, 7
        %v2699 = vsub.s32 %v2696, %v2698
        %v2700 = vrot.slane %v2686, %v2699
        %v2701 = vcombine.low %v2636, %v2652
        %v2702 = vcombine.high %v2636, %v2652
        %v2704 = vunpack.c.l.s4 1934713408
        %v2705 = vunpack.c.0.s8 %v2704
        %v2706 = vlaneseq
        %v2707 = vshrl.u32 %v2706, 7
        %v2708 = vsub.s32 %v2705, %v2707
        %v2709 = vrot.slane %v2701, %v2708
        %v2711 = vunpack.c.l.s4 1934713408
        %v2712 = vunpack.c.0.s8 %v2711
        %v2713 = vlaneseq
        %v2714 = vshrl.u32 %v2713, 7
        %v2715 = vsub.s32 %v2712, %v2714
        %v2716 = vrot.slane %v2702, %v2715
        %v2717 = vcombine.low %v2661, %v2693
        %v2718 = vcombine.high %v2661, %v2693
        %v2719 = vcombine.low %v2668, %v2700
        %v2720 = vcombine.high %v2668, %v2700
        %v2721 = vcombine.low %v2677, %v2709
        %v2722 = vcombine.high %v2677, %v2709
        %v2723 = vcombine.low %v2684, %v2716
        %v2724 = vcombine.high %v2684, %v2716
        %v2725 = vcombine.low %v2309, %v2311
        %v2726 = vcombine.high %v2309, %v2311
        %v2728 = vunpack.c.l.s4 1983009808
        %v2729 = vunpack.c.0.s8 %v2728
        %v2730 = vlaneseq
        %v2731 = vshrl.u32 %v2730, 7
        %v2732 = vsub.s32 %v2729, %v2731
        %v2733 = vrot.slane %v2725, %v2732
        %v2735 = vunpack.c.l.s4 1983009808
        %v2736 = vunpack.c.0.s8 %v2735
        %v2737 = vlaneseq
        %v2738 = vshrl.u32 %v2737, 7
        %v2739 = vsub.s32 %v2736, %v2738
        %v2740 = vrot.slane %v2726, %v2739
        %v2741 = vcombine.low %v2310, %v2312
        %v2742 = vcombine.high %v2310, %v2312
        %v2744 = vunpack.c.l.s4 1983009808
        %v2745 = vunpack.c.0.s8 %v2744
        %v2746 = vlaneseq
        %v2747 = vshrl.u32 %v2746, 7
        %v2748 = vsub.s32 %v2745, %v2747
        %v2749 = vrot.slane %v2741, %v2748
        %v2751 = vunpack.c.l.s4 1983009808
        %v2752 = vunpack.c.0.s8 %v2751
        %v2753 = vlaneseq
        %v2754 = vshrl.u32 %v2753, 7
        %v2755 = vsub.s32 %v2752, %v2754
        %v2756 = vrot.slane %v2742, %v2755
        %v2757 = vcombine.low %v2313, %v2315
        %v2758 = vcombine.high %v2313, %v2315
        %v2760 = vunpack.c.l.s4 1983009808
        %v2761 = vunpack.c.0.s8 %v2760
        %v2762 = vlaneseq
        %v2763 = vshrl.u32 %v2762, 7
        %v2764 = vsub.s32 %v2761, %v2763
        %v2765 = vrot.slane %v2757, %v2764
        %v2767 = vunpack.c.l.s4 1983009808
        %v2768 = vunpack.c.0.s8 %v2767
        %v2769 = vlaneseq
        %v2770 = vshrl.u32 %v2769, 7
        %v2771 = vsub.s32 %v2768, %v2770
        %v2772 = vrot.slane %v2758, %v2771
        %v2773 = vcombine.low %v2314, %v2316
        %v2774 = vcombine.high %v2314, %v2316
        %v2776 = vunpack.c.l.s4 1983009808
        %v2777 = vunpack.c.0.s8 %v2776
        %v2778 = vlaneseq
        %v2779 = vshrl.u32 %v2778, 7
        %v2780 = vsub.s32 %v2777, %v2779
        %v2781 = vrot.slane %v2773, %v2780
        %v2783 = vunpack.c.l.s4 1983009808
        %v2784 = vunpack.c.0.s8 %v2783
        %v2785 = vlaneseq
        %v2786 = vshrl.u32 %v2785, 7
        %v2787 = vsub.s32 %v2784, %v2786
        %v2788 = vrot.slane %v2774, %v2787
        %v2789 = vcombine.low %v2733, %v2749
        %v2790 = vcombine.high %v2733, %v2749
        %v2792 = vunpack.c.l.s4 1934713408
        %v2793 = vunpack.c.0.s8 %v2792
        %v2794 = vlaneseq
        %v2795 = vshrl.u32 %v2794, 7
        %v2796 = vsub.s32 %v2793, %v2795
        %v2797 = vrot.slane %v2789, %v2796
        %v2799 = vunpack.c.l.s4 1934713408
        %v2800 = vunpack.c.0.s8 %v2799
        %v2801 = vlaneseq
        %v2802 = vshrl.u32 %v2801, 7
        %v2803 = vsub.s32 %v2800, %v2802
        %v2804 = vrot.slane %v2790, %v2803
        %v2805 = vcombine.low %v2740, %v2756
        %v2806 = vcombine.high %v2740, %v2756
        %v2808 = vunpack.c.l.s4 1934713408
        %v2809 = vunpack.c.0.s8 %v2808
        %v2810 = vlaneseq
        %v2811 = vshrl.u32 %v2810, 7
        %v2812 = vsub.s32 %v2809, %v2811
        %v2813 = vrot.slane %v2805, %v2812
        %v2815 = vunpack.c.l.s4 1934713408
        %v2816 = vunpack.c.0.s8 %v2815
        %v2817 = vlaneseq
        %v2818 = vshrl.u32 %v2817, 7
        %v2819 = vsub.s32 %v2816, %v2818
        %v2820 = vrot.slane %v2806, %v2819
        %v2821 = vcombine.low %v2765, %v2781
        %v2822 = vcombine.high %v2765, %v2781
        %v2824 = vunpack.c.l.s4 1934713408
        %v2825 = vunpack.c.0.s8 %v2824
        %v2826 = vlaneseq
        %v2827 = vshrl.u32 %v2826, 7
        %v2828 = vsub.s32 %v2825, %v2827
        %v2829 = vrot.slane %v2821, %v2828
        %v2831 = vunpack.c.l.s4 1934713408
        %v2832 = vunpack.c.0.s8 %v2831
        %v2833 = vlaneseq
        %v2834 = vshrl.u32 %v2833, 7
        %v2835 = vsub.s32 %v2832, %v2834
        %v2836 = vrot.slane %v2822, %v2835
        %v2837 = vcombine.low %v2772, %v2788
        %v2838 = vcombine.high %v2772, %v2788
        %v2840 = vunpack.c.l.s4 1934713408
        %v2841 = vunpack.c.0.s8 %v2840
        %v2842 = vlaneseq
        %v2843 = vshrl.u32 %v2842, 7
        %v2844 = vsub.s32 %v2841, %v2843
        %v2845 = vrot.slane %v2837, %v2844
        %v2847 = vunpack.c.l.s4 1934713408
        %v2848 = vunpack.c.0.s8 %v2847
        %v2849 = vlaneseq
        %v2850 = vshrl.u32 %v2849, 7
        %v2851 = vsub.s32 %v2848, %v2850
        %v2852 = vrot.slane %v2838, %v2851
        %v2853 = vcombine.low %v2797, %v2829
        %v2854 = vcombine.high %v2797, %v2829
        %v2855 = vcombine.low %v2804, %v2836
        %v2856 = vcombine.high %v2804, %v2836
        %v2857 = vcombine.low %v2813, %v2845
        %v2858 = vcombine.high %v2813, %v2845
        %v2859 = vcombine.low %v2820, %v2852
        %v2860 = vcombine.high %v2820, %v2852
        %v2861 = vcombine.low %v2445, %v2447
        %v2862 = vcombine.high %v2445, %v2447
        %v2864 = vunpack.c.l.s4 1983009808
        %v2865 = vunpack.c.0.s8 %v2864
        %v2866 = vlaneseq
        %v2867 = vshrl.u32 %v2866, 7
        %v2868 = vsub.s32 %v2865, %v2867
        %v2869 = vrot.slane %v2861, %v2868
        %v2871 = vunpack.c.l.s4 1983009808
        %v2872 = vunpack.c.0.s8 %v2871
        %v2873 = vlaneseq
        %v2874 = vshrl.u32 %v2873, 7
        %v2875 = vsub.s32 %v2872, %v2874
        %v2876 = vrot.slane %v2862, %v2875
        %v2877 = vcombine.low %v2446, %v2448
        %v2878 = vcombine.high %v2446, %v2448
        %v2880 = vunpack.c.l.s4 1983009808
        %v2881 = vunpack.c.0.s8 %v2880
        %v2882 = vlaneseq
        %v2883 = vshrl.u32 %v2882, 7
        %v2884 = vsub.s32 %v2881, %v2883
        %v2885 = vrot.slane %v2877, %v2884
        %v2887 = vunpack.c.l.s4 1983009808
        %v2888 = vunpack.c.0.s8 %v2887
        %v2889 = vlaneseq
        %v2890 = vshrl.u32 %v2889, 7
        %v2891 = vsub.s32 %v2888, %v2890
        %v2892 = vrot.slane %v2878, %v2891
        %v2893 = vcombine.low %v2449, %v2451
        %v2894 = vcombine.high %v2449, %v2451
        %v2896 = vunpack.c.l.s4 1983009808
        %v2897 = vunpack.c.0.s8 %v2896
        %v2898 = vlaneseq
        %v2899 = vshrl.u32 %v2898, 7
        %v2900 = vsub.s32 %v2897, %v2899
        %v2901 = vrot.slane %v2893, %v2900
        %v2903 = vunpack.c.l.s4 1983009808
        %v2904 = vunpack.c.0.s8 %v2903
        %v2905 = vlaneseq
        %v2906 = vshrl.u32 %v2905, 7
        %v2907 = vsub.s32 %v2904, %v2906
        %v2908 = vrot.slane %v2894, %v2907
        %v2909 = vcombine.low %v2450, %v2452
        %v2910 = vcombine.high %v2450, %v2452
        %v2912 = vunpack.c.l.s4 1983009808
        %v2913 = vunpack.c.0.s8 %v2912
        %v2914 = vlaneseq
        %v2915 = vshrl.u32 %v2914, 7
        %v2916 = vsub.s32 %v2913, %v2915
        %v2917 = vrot.slane %v2909, %v2916
        %v2919 = vunpack.c.l.s4 1983009808
        %v2920 = vunpack.c.0.s8 %v2919
        %v2921 = vlaneseq
        %v2922 = vshrl.u32 %v2921, 7
        %v2923 = vsub.s32 %v2920, %v2922
        %v2924 = vrot.slane %v2910, %v2923
        %v2925 = vcombine.low %v2869, %v2885
        %v2926 = vcombine.high %v2869, %v2885
        %v2928 = vunpack.c.l.s4 1934713408
        %v2929 = vunpack.c.0.s8 %v2928
        %v2930 = vlaneseq
        %v2931 = vshrl.u32 %v2930, 7
        %v2932 = vsub.s32 %v2929, %v2931
        %v2933 = vrot.slane %v2925, %v2932
        %v2935 = vunpack.c.l.s4 1934713408
        %v2936 = vunpack.c.0.s8 %v2935
        %v2937 = vlaneseq
        %v2938 = vshrl.u32 %v2937, 7
        %v2939 = vsub.s32 %v2936, %v2938
        %v2940 = vrot.slane %v2926, %v2939
        %v2941 = vcombine.low %v2876, %v2892
        %v2942 = vcombine.high %v2876, %v2892
        %v2944 = vunpack.c.l.s4 1934713408
        %v2945 = vunpack.c.0.s8 %v2944
        %v2946 = vlaneseq
        %v2947 = vshrl.u32 %v2946, 7
        %v2948 = vsub.s32 %v2945, %v2947
        %v2949 = vrot.slane %v2941, %v2948
        %v2951 = vunpack.c.l.s4 1934713408
        %v2952 = vunpack.c.0.s8 %v2951
        %v2953 = vlaneseq
        %v2954 = vshrl.u32 %v2953, 7
        %v2955 = vsub.s32 %v2952, %v2954
        %v2956 = vrot.slane %v2942, %v2955
        %v2957 = vcombine.low %v2901, %v2917
        %v2958 = vcombine.high %v2901, %v2917
        %v2960 = vunpack.c.l.s4 1934713408
        %v2961 = vunpack.c.0.s8 %v2960
        %v2962 = vlaneseq
        %v2963 = vshrl.u32 %v2962, 7
        %v2964 = vsub.s32 %v2961, %v2963
        %v2965 = vrot.slane %v2957, %v2964
        %v2967 = vunpack.c.l.s4 1934713408
        %v2968 = vunpack.c.0.s8 %v2967
        %v2969 = vlaneseq
        %v2970 = vshrl.u32 %v2969, 7
        %v2971 = vsub.s32 %v2968, %v2970
        %v2972 = vrot.slane %v2958, %v2971
        %v2973 = vcombine.low %v2908, %v2924
        %v2974 = vcombine.high %v2908, %v2924
        %v2976 = vunpack.c.l.s4 1934713408
        %v2977 = vunpack.c.0.s8 %v2976
        %v2978 = vlaneseq
        %v2979 = vshrl.u32 %v2978, 7
        %v2980 = vsub.s32 %v2977, %v2979
        %v2981 = vrot.slane %v2973, %v2980
        %v2983 = vunpack.c.l.s4 1934713408
        %v2984 = vunpack.c.0.s8 %v2983
        %v2985 = vlaneseq
        %v2986 = vshrl.u32 %v2985, 7
        %v2987 = vsub.s32 %v2984, %v2986
        %v2988 = vrot.slane %v2974, %v2987
        %v2989 = vcombine.low %v2933, %v2965
        %v2990 = vcombine.high %v2933, %v2965
        %v2991 = vcombine.low %v2940, %v2972
        %v2992 = vcombine.high %v2940, %v2972
        %v2993 = vcombine.low %v2949, %v2981
        %v2994 = vcombine.high %v2949, %v2981
        %v2995 = vcombine.low %v2956, %v2988
        %v2996 = vcombine.high %v2956, %v2988
        %v2997 = vcombine.low %v2581, %v2583
        %v2998 = vcombine.high %v2581, %v2583
        %v3000 = vunpack.c.l.s4 1983009808
        %v3001 = vunpack.c.0.s8 %v3000
        %v3002 = vlaneseq
        %v3003 = vshrl.u32 %v3002, 7
        %v3004 = vsub.s32 %v3001, %v3003
        %v3005 = vrot.slane %v2997, %v3004
        %v3007 = vunpack.c.l.s4 1983009808
        %v3008 = vunpack.c.0.s8 %v3007
        %v3009 = vlaneseq
        %v3010 = vshrl.u32 %v3009, 7
        %v3011 = vsub.s32 %v3008, %v3010
        %v3012 = vrot.slane %v2998, %v3011
        %v3013 = vcombine.low %v2582, %v2584
        %v3014 = vcombine.high %v2582, %v2584
        %v3016 = vunpack.c.l.s4 1983009808
        %v3017 = vunpack.c.0.s8 %v3016
        %v3018 = vlaneseq
        %v3019 = vshrl.u32 %v3018, 7
        %v3020 = vsub.s32 %v3017, %v3019
        %v3021 = vrot.slane %v3013, %v3020
        %v3023 = vunpack.c.l.s4 1983009808
        %v3024 = vunpack.c.0.s8 %v3023
        %v3025 = vlaneseq
        %v3026 = vshrl.u32 %v3025, 7
        %v3027 = vsub.s32 %v3024, %v3026
        %v3028 = vrot.slane %v3014, %v3027
        %v3029 = vcombine.low %v2585, %v2587
        %v3030 = vcombine.high %v2585, %v2587
        %v3032 = vunpack.c.l.s4 1983009808
        %v3033 = vunpack.c.0.s8 %v3032
        %v3034 = vlaneseq
        %v3035 = vshrl.u32 %v3034, 7
        %v3036 = vsub.s32 %v3033, %v3035
        %v3037 = vrot.slane %v3029, %v3036
        %v3039 = vunpack.c.l.s4 1983009808
        %v3040 = vunpack.c.0.s8 %v3039
        %v3041 = vlaneseq
        %v3042 = vshrl.u32 %v3041, 7
        %v3043 = vsub.s32 %v3040, %v3042
        %v3044 = vrot.slane %v3030, %v3043
        %v3045 = vcombine.low %v2586, %v2588
        %v3046 = vcombine.high %v2586, %v2588
        %v3048 = vunpack.c.l.s4 1983009808
        %v3049 = vunpack.c.0.s8 %v3048
        %v3050 = vlaneseq
        %v3051 = vshrl.u32 %v3050, 7
        %v3052 = vsub.s32 %v3049, %v3051
        %v3053 = vrot.slane %v3045, %v3052
        %v3055 = vunpack.c.l.s4 1983009808
        %v3056 = vunpack.c.0.s8 %v3055
        %v3057 = vlaneseq
        %v3058 = vshrl.u32 %v3057, 7
        %v3059 = vsub.s32 %v3056, %v3058
        %v3060 = vrot.slane %v3046, %v3059
        %v3061 = vcombine.low %v3005, %v3021
        %v3062 = vcombine.high %v3005, %v3021
        %v3064 = vunpack.c.l.s4 1934713408
        %v3065 = vunpack.c.0.s8 %v3064
        %v3066 = vlaneseq
        %v3067 = vshrl.u32 %v3066, 7
        %v3068 = vsub.s32 %v3065, %v3067
        %v3069 = vrot.slane %v3061, %v3068
        %v3071 = vunpack.c.l.s4 1934713408
        %v3072 = vunpack.c.0.s8 %v3071
        %v3073 = vlaneseq
        %v3074 = vshrl.u32 %v3073, 7
        %v3075 = vsub.s32 %v3072, %v3074
        %v3076 = vrot.slane %v3062, %v3075
        %v3077 = vcombine.low %v3012, %v3028
        %v3078 = vcombine.high %v3012, %v3028
        %v3080 = vunpack.c.l.s4 1934713408
        %v3081 = vunpack.c.0.s8 %v3080
        %v3082 = vlaneseq
        %v3083 = vshrl.u32 %v3082, 7
        %v3084 = vsub.s32 %v3081, %v3083
        %v3085 = vrot.slane %v3077, %v3084
        %v3087 = vunpack.c.l.s4 1934713408
        %v3088 = vunpack.c.0.s8 %v3087
        %v3089 = vlaneseq
        %v3090 = vshrl.u32 %v3089, 7
        %v3091 = vsub.s32 %v3088, %v3090
        %v3092 = vrot.slane %v3078, %v3091
        %v3093 = vcombine.low %v3037, %v3053
        %v3094 = vcombine.high %v3037, %v3053
        %v3096 = vunpack.c.l.s4 1934713408
        %v3097 = vunpack.c.0.s8 %v3096
        %v3098 = vlaneseq
        %v3099 = vshrl.u32 %v3098, 7
        %v3100 = vsub.s32 %v3097, %v3099
        %v3101 = vrot.slane %v3093, %v3100
        %v3103 = vunpack.c.l.s4 1934713408
        %v3104 = vunpack.c.0.s8 %v3103
        %v3105 = vlaneseq
        %v3106 = vshrl.u32 %v3105, 7
        %v3107 = vsub.s32 %v3104, %v3106
        %v3108 = vrot.slane %v3094, %v3107
        %v3109 = vcombine.low %v3044, %v3060
        %v3110 = vcombine.high %v3044, %v3060
        %v3112 = vunpack.c.l.s4 1934713408
        %v3113 = vunpack.c.0.s8 %v3112
        %v3114 = vlaneseq
        %v3115 = vshrl.u32 %v3114, 7
        %v3116 = vsub.s32 %v3113, %v3115
        %v3117 = vrot.slane %v3109, %v3116
        %v3119 = vunpack.c.l.s4 1934713408
        %v3120 = vunpack.c.0.s8 %v3119
        %v3121 = vlaneseq
        %v3122 = vshrl.u32 %v3121, 7
        %v3123 = vsub.s32 %v3120, %v3122
        %v3124 = vrot.slane %v3110, %v3123
        %v3125 = vcombine.low %v3069, %v3101
        %v3126 = vcombine.high %v3069, %v3101
        %v3127 = vcombine.low %v3076, %v3108
        %v3128 = vcombine.high %v3076, %v3108
        %v3129 = vcombine.low %v3085, %v3117
        %v3130 = vcombine.high %v3085, %v3117
        %v3131 = vcombine.low %v3092, %v3124
        %v3132 = vcombine.high %v3092, %v3124
        %3137 = vrot.lane.b32.xlu0 %v761, 112
        %v3138 = vpop.permute.xlu0 %3137
        %3139 = vrot.lane.b32.xlu0 %v767, 112
        %v3140 = vpop.permute.xlu0 %3139
        %3141 = vrot.lane.b32.xlu0 %v773, 112
        %v3142 = vpop.permute.xlu0 %3141
        %3143 = vrot.lane.b32.xlu0 %v779, 112
        %v3144 = vpop.permute.xlu0 %3143
        %3149 = vrot.lane.b32.xlu0 %v761, 96
        %v3150 = vpop.permute.xlu0 %3149
        %3151 = vrot.lane.b32.xlu0 %v767, 96
        %v3152 = vpop.permute.xlu0 %3151
        %3153 = vrot.lane.b32.xlu0 %v773, 96
        %v3154 = vpop.permute.xlu0 %3153
        %3155 = vrot.lane.b32.xlu0 %v779, 96
        %v3156 = vpop.permute.xlu0 %3155
        %3161 = vrot.lane.b32.xlu0 %v761, 80
        %v3162 = vpop.permute.xlu0 %3161
        %3163 = vrot.lane.b32.xlu0 %v767, 80
        %v3164 = vpop.permute.xlu0 %3163
        %3165 = vrot.lane.b32.xlu0 %v773, 80
        %v3166 = vpop.permute.xlu0 %3165
        %3167 = vrot.lane.b32.xlu0 %v779, 80
        %v3168 = vpop.permute.xlu0 %3167
        %3173 = vrot.lane.b32.xlu0 %v761, 64
        %v3174 = vpop.permute.xlu0 %3173
        %3175 = vrot.lane.b32.xlu0 %v767, 64
        %v3176 = vpop.permute.xlu0 %3175
        %3177 = vrot.lane.b32.xlu0 %v773, 64
        %v3178 = vpop.permute.xlu0 %3177
        %3179 = vrot.lane.b32.xlu0 %v779, 64
        %v3180 = vpop.permute.xlu0 %3179
        %3185 = vrot.lane.b32.xlu0 %v761, 48
        %v3186 = vpop.permute.xlu0 %3185
        %3187 = vrot.lane.b32.xlu0 %v767, 48
        %v3188 = vpop.permute.xlu0 %3187
        %3189 = vrot.lane.b32.xlu0 %v773, 48
        %v3190 = vpop.permute.xlu0 %3189
        %3191 = vrot.lane.b32.xlu0 %v779, 48
        %v3192 = vpop.permute.xlu0 %3191
        %3197 = vrot.lane.b32.xlu0 %v761, 32
        %v3198 = vpop.permute.xlu0 %3197
        %3199 = vrot.lane.b32.xlu0 %v767, 32
        %v3200 = vpop.permute.xlu0 %3199
        %3201 = vrot.lane.b32.xlu0 %v773, 32
        %v3202 = vpop.permute.xlu0 %3201
        %3203 = vrot.lane.b32.xlu0 %v779, 32
        %v3204 = vpop.permute.xlu0 %3203
        %3209 = vrot.lane.b32.xlu0 %v761, 16
        %v3210 = vpop.permute.xlu0 %3209
        %3211 = vrot.lane.b32.xlu0 %v767, 16
        %v3212 = vpop.permute.xlu0 %3211
        %3213 = vrot.lane.b32.xlu0 %v773, 16
        %v3214 = vpop.permute.xlu0 %3213
        %3215 = vrot.lane.b32.xlu0 %v779, 16
        %v3216 = vpop.permute.xlu0 %3215
        %v3221 = vcombine.low %v761, %v3150
        %v3222 = vcombine.high %v761, %v3150
        %v3224 = vunpack.c.l.s4 1983009808
        %v3225 = vunpack.c.0.s8 %v3224
        %v3226 = vlaneseq
        %v3227 = vshrl.u32 %v3226, 7
        %v3228 = vsub.s32 %v3225, %v3227
        %v3229 = vrot.slane %v3221, %v3228
        %v3231 = vunpack.c.l.s4 1983009808
        %v3232 = vunpack.c.0.s8 %v3231
        %v3233 = vlaneseq
        %v3234 = vshrl.u32 %v3233, 7
        %v3235 = vsub.s32 %v3232, %v3234
        %v3236 = vrot.slane %v3222, %v3235
        %v3237 = vcombine.low %v3138, %v3162
        %v3238 = vcombine.high %v3138, %v3162
        %v3240 = vunpack.c.l.s4 1983009808
        %v3241 = vunpack.c.0.s8 %v3240
        %v3242 = vlaneseq
        %v3243 = vshrl.u32 %v3242, 7
        %v3244 = vsub.s32 %v3241, %v3243
        %v3245 = vrot.slane %v3237, %v3244
        %v3247 = vunpack.c.l.s4 1983009808
        %v3248 = vunpack.c.0.s8 %v3247
        %v3249 = vlaneseq
        %v3250 = vshrl.u32 %v3249, 7
        %v3251 = vsub.s32 %v3248, %v3250
        %v3252 = vrot.slane %v3238, %v3251
        %v3253 = vcombine.low %v3174, %v3198
        %v3254 = vcombine.high %v3174, %v3198
        %v3256 = vunpack.c.l.s4 1983009808
        %v3257 = vunpack.c.0.s8 %v3256
        %v3258 = vlaneseq
        %v3259 = vshrl.u32 %v3258, 7
        %v3260 = vsub.s32 %v3257, %v3259
        %v3261 = vrot.slane %v3253, %v3260
        %v3263 = vunpack.c.l.s4 1983009808
        %v3264 = vunpack.c.0.s8 %v3263
        %v3265 = vlaneseq
        %v3266 = vshrl.u32 %v3265, 7
        %v3267 = vsub.s32 %v3264, %v3266
        %v3268 = vrot.slane %v3254, %v3267
        %v3269 = vcombine.low %v3186, %v3210
        %v3270 = vcombine.high %v3186, %v3210
        %v3272 = vunpack.c.l.s4 1983009808
        %v3273 = vunpack.c.0.s8 %v3272
        %v3274 = vlaneseq
        %v3275 = vshrl.u32 %v3274, 7
        %v3276 = vsub.s32 %v3273, %v3275
        %v3277 = vrot.slane %v3269, %v3276
        %v3279 = vunpack.c.l.s4 1983009808
        %v3280 = vunpack.c.0.s8 %v3279
        %v3281 = vlaneseq
        %v3282 = vshrl.u32 %v3281, 7
        %v3283 = vsub.s32 %v3280, %v3282
        %v3284 = vrot.slane %v3270, %v3283
        %v3285 = vcombine.low %v3229, %v3245
        %v3286 = vcombine.high %v3229, %v3245
        %v3288 = vunpack.c.l.s4 1934713408
        %v3289 = vunpack.c.0.s8 %v3288
        %v3290 = vlaneseq
        %v3291 = vshrl.u32 %v3290, 7
        %v3292 = vsub.s32 %v3289, %v3291
        %v3293 = vrot.slane %v3285, %v3292
        %v3295 = vunpack.c.l.s4 1934713408
        %v3296 = vunpack.c.0.s8 %v3295
        %v3297 = vlaneseq
        %v3298 = vshrl.u32 %v3297, 7
        %v3299 = vsub.s32 %v3296, %v3298
        %v3300 = vrot.slane %v3286, %v3299
        %v3301 = vcombine.low %v3236, %v3252
        %v3302 = vcombine.high %v3236, %v3252
        %v3304 = vunpack.c.l.s4 1934713408
        %v3305 = vunpack.c.0.s8 %v3304
        %v3306 = vlaneseq
        %v3307 = vshrl.u32 %v3306, 7
        %v3308 = vsub.s32 %v3305, %v3307
        %v3309 = vrot.slane %v3301, %v3308
        %v3311 = vunpack.c.l.s4 1934713408
        %v3312 = vunpack.c.0.s8 %v3311
        %v3313 = vlaneseq
        %v3314 = vshrl.u32 %v3313, 7
        %v3315 = vsub.s32 %v3312, %v3314
        %v3316 = vrot.slane %v3302, %v3315
        %v3317 = vcombine.low %v3261, %v3277
        %v3318 = vcombine.high %v3261, %v3277
        %v3320 = vunpack.c.l.s4 1934713408
        %v3321 = vunpack.c.0.s8 %v3320
        %v3322 = vlaneseq
        %v3323 = vshrl.u32 %v3322, 7
        %v3324 = vsub.s32 %v3321, %v3323
        %v3325 = vrot.slane %v3317, %v3324
        %v3327 = vunpack.c.l.s4 1934713408
        %v3328 = vunpack.c.0.s8 %v3327
        %v3329 = vlaneseq
        %v3330 = vshrl.u32 %v3329, 7
        %v3331 = vsub.s32 %v3328, %v3330
        %v3332 = vrot.slane %v3318, %v3331
        %v3333 = vcombine.low %v3268, %v3284
        %v3334 = vcombine.high %v3268, %v3284
        %v3336 = vunpack.c.l.s4 1934713408
        %v3337 = vunpack.c.0.s8 %v3336
        %v3338 = vlaneseq
        %v3339 = vshrl.u32 %v3338, 7
        %v3340 = vsub.s32 %v3337, %v3339
        %v3341 = vrot.slane %v3333, %v3340
        %v3343 = vunpack.c.l.s4 1934713408
        %v3344 = vunpack.c.0.s8 %v3343
        %v3345 = vlaneseq
        %v3346 = vshrl.u32 %v3345, 7
        %v3347 = vsub.s32 %v3344, %v3346
        %v3348 = vrot.slane %v3334, %v3347
        %v3349 = vcombine.low %v3293, %v3325
        %v3350 = vcombine.high %v3293, %v3325
        %v3351 = vcombine.low %v3300, %v3332
        %v3352 = vcombine.high %v3300, %v3332
        %v3353 = vcombine.low %v3309, %v3341
        %v3354 = vcombine.high %v3309, %v3341
        %v3355 = vcombine.low %v3316, %v3348
        %v3356 = vcombine.high %v3316, %v3348
        %v3357 = vcombine.low %v767, %v3152
        %v3358 = vcombine.high %v767, %v3152
        %v3360 = vunpack.c.l.s4 1983009808
        %v3361 = vunpack.c.0.s8 %v3360
        %v3362 = vlaneseq
        %v3363 = vshrl.u32 %v3362, 7
        %v3364 = vsub.s32 %v3361, %v3363
        %v3365 = vrot.slane %v3357, %v3364
        %v3367 = vunpack.c.l.s4 1983009808
        %v3368 = vunpack.c.0.s8 %v3367
        %v3369 = vlaneseq
        %v3370 = vshrl.u32 %v3369, 7
        %v3371 = vsub.s32 %v3368, %v3370
        %v3372 = vrot.slane %v3358, %v3371
        %v3373 = vcombine.low %v3140, %v3164
        %v3374 = vcombine.high %v3140, %v3164
        %v3376 = vunpack.c.l.s4 1983009808
        %v3377 = vunpack.c.0.s8 %v3376
        %v3378 = vlaneseq
        %v3379 = vshrl.u32 %v3378, 7
        %v3380 = vsub.s32 %v3377, %v3379
        %v3381 = vrot.slane %v3373, %v3380
        %v3383 = vunpack.c.l.s4 1983009808
        %v3384 = vunpack.c.0.s8 %v3383
        %v3385 = vlaneseq
        %v3386 = vshrl.u32 %v3385, 7
        %v3387 = vsub.s32 %v3384, %v3386
        %v3388 = vrot.slane %v3374, %v3387
        %v3389 = vcombine.low %v3176, %v3200
        %v3390 = vcombine.high %v3176, %v3200
        %v3392 = vunpack.c.l.s4 1983009808
        %v3393 = vunpack.c.0.s8 %v3392
        %v3394 = vlaneseq
        %v3395 = vshrl.u32 %v3394, 7
        %v3396 = vsub.s32 %v3393, %v3395
        %v3397 = vrot.slane %v3389, %v3396
        %v3399 = vunpack.c.l.s4 1983009808
        %v3400 = vunpack.c.0.s8 %v3399
        %v3401 = vlaneseq
        %v3402 = vshrl.u32 %v3401, 7
        %v3403 = vsub.s32 %v3400, %v3402
        %v3404 = vrot.slane %v3390, %v3403
        %v3405 = vcombine.low %v3188, %v3212
        %v3406 = vcombine.high %v3188, %v3212
        %v3408 = vunpack.c.l.s4 1983009808
        %v3409 = vunpack.c.0.s8 %v3408
        %v3410 = vlaneseq
        %v3411 = vshrl.u32 %v3410, 7
        %v3412 = vsub.s32 %v3409, %v3411
        %v3413 = vrot.slane %v3405, %v3412
        %v3415 = vunpack.c.l.s4 1983009808
        %v3416 = vunpack.c.0.s8 %v3415
        %v3417 = vlaneseq
        %v3418 = vshrl.u32 %v3417, 7
        %v3419 = vsub.s32 %v3416, %v3418
        %v3420 = vrot.slane %v3406, %v3419
        %v3421 = vcombine.low %v3365, %v3381
        %v3422 = vcombine.high %v3365, %v3381
        %v3424 = vunpack.c.l.s4 1934713408
        %v3425 = vunpack.c.0.s8 %v3424
        %v3426 = vlaneseq
        %v3427 = vshrl.u32 %v3426, 7
        %v3428 = vsub.s32 %v3425, %v3427
        %v3429 = vrot.slane %v3421, %v3428
        %v3431 = vunpack.c.l.s4 1934713408
        %v3432 = vunpack.c.0.s8 %v3431
        %v3433 = vlaneseq
        %v3434 = vshrl.u32 %v3433, 7
        %v3435 = vsub.s32 %v3432, %v3434
        %v3436 = vrot.slane %v3422, %v3435
        %v3437 = vcombine.low %v3372, %v3388
        %v3438 = vcombine.high %v3372, %v3388
        %v3440 = vunpack.c.l.s4 1934713408
        %v3441 = vunpack.c.0.s8 %v3440
        %v3442 = vlaneseq
        %v3443 = vshrl.u32 %v3442, 7
        %v3444 = vsub.s32 %v3441, %v3443
        %v3445 = vrot.slane %v3437, %v3444
        %v3447 = vunpack.c.l.s4 1934713408
        %v3448 = vunpack.c.0.s8 %v3447
        %v3449 = vlaneseq
        %v3450 = vshrl.u32 %v3449, 7
        %v3451 = vsub.s32 %v3448, %v3450
        %v3452 = vrot.slane %v3438, %v3451
        %v3453 = vcombine.low %v3397, %v3413
        %v3454 = vcombine.high %v3397, %v3413
        %v3456 = vunpack.c.l.s4 1934713408
        %v3457 = vunpack.c.0.s8 %v3456
        %v3458 = vlaneseq
        %v3459 = vshrl.u32 %v3458, 7
        %v3460 = vsub.s32 %v3457, %v3459
        %v3461 = vrot.slane %v3453, %v3460
        %v3463 = vunpack.c.l.s4 1934713408
        %v3464 = vunpack.c.0.s8 %v3463
        %v3465 = vlaneseq
        %v3466 = vshrl.u32 %v3465, 7
        %v3467 = vsub.s32 %v3464, %v3466
        %v3468 = vrot.slane %v3454, %v3467
        %v3469 = vcombine.low %v3404, %v3420
        %v3470 = vcombine.high %v3404, %v3420
        %v3472 = vunpack.c.l.s4 1934713408
        %v3473 = vunpack.c.0.s8 %v3472
        %v3474 = vlaneseq
        %v3475 = vshrl.u32 %v3474, 7
        %v3476 = vsub.s32 %v3473, %v3475
        %v3477 = vrot.slane %v3469, %v3476
        %v3479 = vunpack.c.l.s4 1934713408
        %v3480 = vunpack.c.0.s8 %v3479
        %v3481 = vlaneseq
        %v3482 = vshrl.u32 %v3481, 7
        %v3483 = vsub.s32 %v3480, %v3482
        %v3484 = vrot.slane %v3470, %v3483
        %v3485 = vcombine.low %v3429, %v3461
        %v3486 = vcombine.high %v3429, %v3461
        %v3487 = vcombine.low %v3436, %v3468
        %v3488 = vcombine.high %v3436, %v3468
        %v3489 = vcombine.low %v3445, %v3477
        %v3490 = vcombine.high %v3445, %v3477
        %v3491 = vcombine.low %v3452, %v3484
        %v3492 = vcombine.high %v3452, %v3484
        %v3493 = vcombine.low %v773, %v3154
        %v3494 = vcombine.high %v773, %v3154
        %v3496 = vunpack.c.l.s4 1983009808
        %v3497 = vunpack.c.0.s8 %v3496
        %v3498 = vlaneseq
        %v3499 = vshrl.u32 %v3498, 7
        %v3500 = vsub.s32 %v3497, %v3499
        %v3501 = vrot.slane %v3493, %v3500
        %v3503 = vunpack.c.l.s4 1983009808
        %v3504 = vunpack.c.0.s8 %v3503
        %v3505 = vlaneseq
        %v3506 = vshrl.u32 %v3505, 7
        %v3507 = vsub.s32 %v3504, %v3506
        %v3508 = vrot.slane %v3494, %v3507
        %v3509 = vcombine.low %v3142, %v3166
        %v3510 = vcombine.high %v3142, %v3166
        %v3512 = vunpack.c.l.s4 1983009808
        %v3513 = vunpack.c.0.s8 %v3512
        %v3514 = vlaneseq
        %v3515 = vshrl.u32 %v3514, 7
        %v3516 = vsub.s32 %v3513, %v3515
        %v3517 = vrot.slane %v3509, %v3516
        %v3519 = vunpack.c.l.s4 1983009808
        %v3520 = vunpack.c.0.s8 %v3519
        %v3521 = vlaneseq
        %v3522 = vshrl.u32 %v3521, 7
        %v3523 = vsub.s32 %v3520, %v3522
        %v3524 = vrot.slane %v3510, %v3523
        %v3525 = vcombine.low %v3178, %v3202
        %v3526 = vcombine.high %v3178, %v3202
        %v3528 = vunpack.c.l.s4 1983009808
        %v3529 = vunpack.c.0.s8 %v3528
        %v3530 = vlaneseq
        %v3531 = vshrl.u32 %v3530, 7
        %v3532 = vsub.s32 %v3529, %v3531
        %v3533 = vrot.slane %v3525, %v3532
        %v3535 = vunpack.c.l.s4 1983009808
        %v3536 = vunpack.c.0.s8 %v3535
        %v3537 = vlaneseq
        %v3538 = vshrl.u32 %v3537, 7
        %v3539 = vsub.s32 %v3536, %v3538
        %v3540 = vrot.slane %v3526, %v3539
        %v3541 = vcombine.low %v3190, %v3214
        %v3542 = vcombine.high %v3190, %v3214
        %v3544 = vunpack.c.l.s4 1983009808
        %v3545 = vunpack.c.0.s8 %v3544
        %v3546 = vlaneseq
        %v3547 = vshrl.u32 %v3546, 7
        %v3548 = vsub.s32 %v3545, %v3547
        %v3549 = vrot.slane %v3541, %v3548
        %v3551 = vunpack.c.l.s4 1983009808
        %v3552 = vunpack.c.0.s8 %v3551
        %v3553 = vlaneseq
        %v3554 = vshrl.u32 %v3553, 7
        %v3555 = vsub.s32 %v3552, %v3554
        %v3556 = vrot.slane %v3542, %v3555
        %v3557 = vcombine.low %v3501, %v3517
        %v3558 = vcombine.high %v3501, %v3517
        %v3560 = vunpack.c.l.s4 1934713408
        %v3561 = vunpack.c.0.s8 %v3560
        %v3562 = vlaneseq
        %v3563 = vshrl.u32 %v3562, 7
        %v3564 = vsub.s32 %v3561, %v3563
        %v3565 = vrot.slane %v3557, %v3564
        %v3567 = vunpack.c.l.s4 1934713408
        %v3568 = vunpack.c.0.s8 %v3567
        %v3569 = vlaneseq
        %v3570 = vshrl.u32 %v3569, 7
        %v3571 = vsub.s32 %v3568, %v3570
        %v3572 = vrot.slane %v3558, %v3571
        %v3573 = vcombine.low %v3508, %v3524
        %v3574 = vcombine.high %v3508, %v3524
        %v3576 = vunpack.c.l.s4 1934713408
        %v3577 = vunpack.c.0.s8 %v3576
        %v3578 = vlaneseq
        %v3579 = vshrl.u32 %v3578, 7
        %v3580 = vsub.s32 %v3577, %v3579
        %v3581 = vrot.slane %v3573, %v3580
        %v3583 = vunpack.c.l.s4 1934713408
        %v3584 = vunpack.c.0.s8 %v3583
        %v3585 = vlaneseq
        %v3586 = vshrl.u32 %v3585, 7
        %v3587 = vsub.s32 %v3584, %v3586
        %v3588 = vrot.slane %v3574, %v3587
        %v3589 = vcombine.low %v3533, %v3549
        %v3590 = vcombine.high %v3533, %v3549
        %v3592 = vunpack.c.l.s4 1934713408
        %v3593 = vunpack.c.0.s8 %v3592
        %v3594 = vlaneseq
        %v3595 = vshrl.u32 %v3594, 7
        %v3596 = vsub.s32 %v3593, %v3595
        %v3597 = vrot.slane %v3589, %v3596
        %v3599 = vunpack.c.l.s4 1934713408
        %v3600 = vunpack.c.0.s8 %v3599
        %v3601 = vlaneseq
        %v3602 = vshrl.u32 %v3601, 7
        %v3603 = vsub.s32 %v3600, %v3602
        %v3604 = vrot.slane %v3590, %v3603
        %v3605 = vcombine.low %v3540, %v3556
        %v3606 = vcombine.high %v3540, %v3556
        %v3608 = vunpack.c.l.s4 1934713408
        %v3609 = vunpack.c.0.s8 %v3608
        %v3610 = vlaneseq
        %v3611 = vshrl.u32 %v3610, 7
        %v3612 = vsub.s32 %v3609, %v3611
        %v3613 = vrot.slane %v3605, %v3612
        %v3615 = vunpack.c.l.s4 1934713408
        %v3616 = vunpack.c.0.s8 %v3615
        %v3617 = vlaneseq
        %v3618 = vshrl.u32 %v3617, 7
        %v3619 = vsub.s32 %v3616, %v3618
        %v3620 = vrot.slane %v3606, %v3619
        %v3621 = vcombine.low %v3565, %v3597
        %v3622 = vcombine.high %v3565, %v3597
        %v3623 = vcombine.low %v3572, %v3604
        %v3624 = vcombine.high %v3572, %v3604
        %v3625 = vcombine.low %v3581, %v3613
        %v3626 = vcombine.high %v3581, %v3613
        %v3627 = vcombine.low %v3588, %v3620
        %v3628 = vcombine.high %v3588, %v3620
        %v3629 = vcombine.low %v779, %v3156
        %v3630 = vcombine.high %v779, %v3156
        %v3632 = vunpack.c.l.s4 1983009808
        %v3633 = vunpack.c.0.s8 %v3632
        %v3634 = vlaneseq
        %v3635 = vshrl.u32 %v3634, 7
        %v3636 = vsub.s32 %v3633, %v3635
        %v3637 = vrot.slane %v3629, %v3636
        %v3639 = vunpack.c.l.s4 1983009808
        %v3640 = vunpack.c.0.s8 %v3639
        %v3641 = vlaneseq
        %v3642 = vshrl.u32 %v3641, 7
        %v3643 = vsub.s32 %v3640, %v3642
        %v3644 = vrot.slane %v3630, %v3643
        %v3645 = vcombine.low %v3144, %v3168
        %v3646 = vcombine.high %v3144, %v3168
        %v3648 = vunpack.c.l.s4 1983009808
        %v3649 = vunpack.c.0.s8 %v3648
        %v3650 = vlaneseq
        %v3651 = vshrl.u32 %v3650, 7
        %v3652 = vsub.s32 %v3649, %v3651
        %v3653 = vrot.slane %v3645, %v3652
        %v3655 = vunpack.c.l.s4 1983009808
        %v3656 = vunpack.c.0.s8 %v3655
        %v3657 = vlaneseq
        %v3658 = vshrl.u32 %v3657, 7
        %v3659 = vsub.s32 %v3656, %v3658
        %v3660 = vrot.slane %v3646, %v3659
        %v3661 = vcombine.low %v3180, %v3204
        %v3662 = vcombine.high %v3180, %v3204
        %v3664 = vunpack.c.l.s4 1983009808
        %v3665 = vunpack.c.0.s8 %v3664
        %v3666 = vlaneseq
        %v3667 = vshrl.u32 %v3666, 7
        %v3668 = vsub.s32 %v3665, %v3667
        %v3669 = vrot.slane %v3661, %v3668
        %v3671 = vunpack.c.l.s4 1983009808
        %v3672 = vunpack.c.0.s8 %v3671
        %v3673 = vlaneseq
        %v3674 = vshrl.u32 %v3673, 7
        %v3675 = vsub.s32 %v3672, %v3674
        %v3676 = vrot.slane %v3662, %v3675
        %v3677 = vcombine.low %v3192, %v3216
        %v3678 = vcombine.high %v3192, %v3216
        %v3680 = vunpack.c.l.s4 1983009808
        %v3681 = vunpack.c.0.s8 %v3680
        %v3682 = vlaneseq
        %v3683 = vshrl.u32 %v3682, 7
        %v3684 = vsub.s32 %v3681, %v3683
        %v3685 = vrot.slane %v3677, %v3684
        %v3687 = vunpack.c.l.s4 1983009808
        %v3688 = vunpack.c.0.s8 %v3687
        %v3689 = vlaneseq
        %v3690 = vshrl.u32 %v3689, 7
        %v3691 = vsub.s32 %v3688, %v3690
        %v3692 = vrot.slane %v3678, %v3691
        %v3693 = vcombine.low %v3637, %v3653
        %v3694 = vcombine.high %v3637, %v3653
        %v3696 = vunpack.c.l.s4 1934713408
        %v3697 = vunpack.c.0.s8 %v3696
        %v3698 = vlaneseq
        %v3699 = vshrl.u32 %v3698, 7
        %v3700 = vsub.s32 %v3697, %v3699
        %v3701 = vrot.slane %v3693, %v3700
        %v3703 = vunpack.c.l.s4 1934713408
        %v3704 = vunpack.c.0.s8 %v3703
        %v3705 = vlaneseq
        %v3706 = vshrl.u32 %v3705, 7
        %v3707 = vsub.s32 %v3704, %v3706
        %v3708 = vrot.slane %v3694, %v3707
        %v3709 = vcombine.low %v3644, %v3660
        %v3710 = vcombine.high %v3644, %v3660
        %v3712 = vunpack.c.l.s4 1934713408
        %v3713 = vunpack.c.0.s8 %v3712
        %v3714 = vlaneseq
        %v3715 = vshrl.u32 %v3714, 7
        %v3716 = vsub.s32 %v3713, %v3715
        %v3717 = vrot.slane %v3709, %v3716
        %v3719 = vunpack.c.l.s4 1934713408
        %v3720 = vunpack.c.0.s8 %v3719
        %v3721 = vlaneseq
        %v3722 = vshrl.u32 %v3721, 7
        %v3723 = vsub.s32 %v3720, %v3722
        %v3724 = vrot.slane %v3710, %v3723
        %v3725 = vcombine.low %v3669, %v3685
        %v3726 = vcombine.high %v3669, %v3685
        %v3728 = vunpack.c.l.s4 1934713408
        %v3729 = vunpack.c.0.s8 %v3728
        %v3730 = vlaneseq
        %v3731 = vshrl.u32 %v3730, 7
        %v3732 = vsub.s32 %v3729, %v3731
        %v3733 = vrot.slane %v3725, %v3732
        %v3735 = vunpack.c.l.s4 1934713408
        %v3736 = vunpack.c.0.s8 %v3735
        %v3737 = vlaneseq
        %v3738 = vshrl.u32 %v3737, 7
        %v3739 = vsub.s32 %v3736, %v3738
        %v3740 = vrot.slane %v3726, %v3739
        %v3741 = vcombine.low %v3676, %v3692
        %v3742 = vcombine.high %v3676, %v3692
        %v3744 = vunpack.c.l.s4 1934713408
        %v3745 = vunpack.c.0.s8 %v3744
        %v3746 = vlaneseq
        %v3747 = vshrl.u32 %v3746, 7
        %v3748 = vsub.s32 %v3745, %v3747
        %v3749 = vrot.slane %v3741, %v3748
        %v3751 = vunpack.c.l.s4 1934713408
        %v3752 = vunpack.c.0.s8 %v3751
        %v3753 = vlaneseq
        %v3754 = vshrl.u32 %v3753, 7
        %v3755 = vsub.s32 %v3752, %v3754
        %v3756 = vrot.slane %v3742, %v3755
        %v3757 = vcombine.low %v3701, %v3733
        %v3758 = vcombine.high %v3701, %v3733
        %v3759 = vcombine.low %v3708, %v3740
        %v3760 = vcombine.high %v3708, %v3740
        %v3761 = vcombine.low %v3717, %v3749
        %v3762 = vcombine.high %v3717, %v3749
        %v3763 = vcombine.low %v3724, %v3756
        %v3764 = vcombine.high %v3724, %v3756
        %v3765 = vcombine.low %v3349, %v3351
        %v3766 = vcombine.high %v3349, %v3351
        %v3768 = vunpack.c.l.s4 1983009808
        %v3769 = vunpack.c.0.s8 %v3768
        %v3770 = vlaneseq
        %v3771 = vshrl.u32 %v3770, 7
        %v3772 = vsub.s32 %v3769, %v3771
        %v3773 = vrot.slane %v3765, %v3772
        %v3775 = vunpack.c.l.s4 1983009808
        %v3776 = vunpack.c.0.s8 %v3775
        %v3777 = vlaneseq
        %v3778 = vshrl.u32 %v3777, 7
        %v3779 = vsub.s32 %v3776, %v3778
        %v3780 = vrot.slane %v3766, %v3779
        %v3781 = vcombine.low %v3350, %v3352
        %v3782 = vcombine.high %v3350, %v3352
        %v3784 = vunpack.c.l.s4 1983009808
        %v3785 = vunpack.c.0.s8 %v3784
        %v3786 = vlaneseq
        %v3787 = vshrl.u32 %v3786, 7
        %v3788 = vsub.s32 %v3785, %v3787
        %v3789 = vrot.slane %v3781, %v3788
        %v3791 = vunpack.c.l.s4 1983009808
        %v3792 = vunpack.c.0.s8 %v3791
        %v3793 = vlaneseq
        %v3794 = vshrl.u32 %v3793, 7
        %v3795 = vsub.s32 %v3792, %v3794
        %v3796 = vrot.slane %v3782, %v3795
        %v3797 = vcombine.low %v3353, %v3355
        %v3798 = vcombine.high %v3353, %v3355
        %v3800 = vunpack.c.l.s4 1983009808
        %v3801 = vunpack.c.0.s8 %v3800
        %v3802 = vlaneseq
        %v3803 = vshrl.u32 %v3802, 7
        %v3804 = vsub.s32 %v3801, %v3803
        %v3805 = vrot.slane %v3797, %v3804
        %v3807 = vunpack.c.l.s4 1983009808
        %v3808 = vunpack.c.0.s8 %v3807
        %v3809 = vlaneseq
        %v3810 = vshrl.u32 %v3809, 7
        %v3811 = vsub.s32 %v3808, %v3810
        %v3812 = vrot.slane %v3798, %v3811
        %v3813 = vcombine.low %v3354, %v3356
        %v3814 = vcombine.high %v3354, %v3356
        %v3816 = vunpack.c.l.s4 1983009808
        %v3817 = vunpack.c.0.s8 %v3816
        %v3818 = vlaneseq
        %v3819 = vshrl.u32 %v3818, 7
        %v3820 = vsub.s32 %v3817, %v3819
        %v3821 = vrot.slane %v3813, %v3820
        %v3823 = vunpack.c.l.s4 1983009808
        %v3824 = vunpack.c.0.s8 %v3823
        %v3825 = vlaneseq
        %v3826 = vshrl.u32 %v3825, 7
        %v3827 = vsub.s32 %v3824, %v3826
        %v3828 = vrot.slane %v3814, %v3827
        %v3829 = vcombine.low %v3773, %v3789
        %v3830 = vcombine.high %v3773, %v3789
        %v3832 = vunpack.c.l.s4 1934713408
        %v3833 = vunpack.c.0.s8 %v3832
        %v3834 = vlaneseq
        %v3835 = vshrl.u32 %v3834, 7
        %v3836 = vsub.s32 %v3833, %v3835
        %v3837 = vrot.slane %v3829, %v3836
        %v3839 = vunpack.c.l.s4 1934713408
        %v3840 = vunpack.c.0.s8 %v3839
        %v3841 = vlaneseq
        %v3842 = vshrl.u32 %v3841, 7
        %v3843 = vsub.s32 %v3840, %v3842
        %v3844 = vrot.slane %v3830, %v3843
        %v3845 = vcombine.low %v3780, %v3796
        %v3846 = vcombine.high %v3780, %v3796
        %v3848 = vunpack.c.l.s4 1934713408
        %v3849 = vunpack.c.0.s8 %v3848
        %v3850 = vlaneseq
        %v3851 = vshrl.u32 %v3850, 7
        %v3852 = vsub.s32 %v3849, %v3851
        %v3853 = vrot.slane %v3845, %v3852
        %v3855 = vunpack.c.l.s4 1934713408
        %v3856 = vunpack.c.0.s8 %v3855
        %v3857 = vlaneseq
        %v3858 = vshrl.u32 %v3857, 7
        %v3859 = vsub.s32 %v3856, %v3858
        %v3860 = vrot.slane %v3846, %v3859
        %v3861 = vcombine.low %v3805, %v3821
        %v3862 = vcombine.high %v3805, %v3821
        %v3864 = vunpack.c.l.s4 1934713408
        %v3865 = vunpack.c.0.s8 %v3864
        %v3866 = vlaneseq
        %v3867 = vshrl.u32 %v3866, 7
        %v3868 = vsub.s32 %v3865, %v3867
        %v3869 = vrot.slane %v3861, %v3868
        %v3871 = vunpack.c.l.s4 1934713408
        %v3872 = vunpack.c.0.s8 %v3871
        %v3873 = vlaneseq
        %v3874 = vshrl.u32 %v3873, 7
        %v3875 = vsub.s32 %v3872, %v3874
        %v3876 = vrot.slane %v3862, %v3875
        %v3877 = vcombine.low %v3812, %v3828
        %v3878 = vcombine.high %v3812, %v3828
        %v3880 = vunpack.c.l.s4 1934713408
        %v3881 = vunpack.c.0.s8 %v3880
        %v3882 = vlaneseq
        %v3883 = vshrl.u32 %v3882, 7
        %v3884 = vsub.s32 %v3881, %v3883
        %v3885 = vrot.slane %v3877, %v3884
        %v3887 = vunpack.c.l.s4 1934713408
        %v3888 = vunpack.c.0.s8 %v3887
        %v3889 = vlaneseq
        %v3890 = vshrl.u32 %v3889, 7
        %v3891 = vsub.s32 %v3888, %v3890
        %v3892 = vrot.slane %v3878, %v3891
        %v3893 = vcombine.low %v3837, %v3869
        %v3894 = vcombine.high %v3837, %v3869
        %v3895 = vcombine.low %v3844, %v3876
        %v3896 = vcombine.high %v3844, %v3876
        %v3897 = vcombine.low %v3853, %v3885
        %v3898 = vcombine.high %v3853, %v3885
        %v3899 = vcombine.low %v3860, %v3892
        %v3900 = vcombine.high %v3860, %v3892
        %v3901 = vcombine.low %v3485, %v3487
        %v3902 = vcombine.high %v3485, %v3487
        %v3904 = vunpack.c.l.s4 1983009808
        %v3905 = vunpack.c.0.s8 %v3904
        %v3906 = vlaneseq
        %v3907 = vshrl.u32 %v3906, 7
        %v3908 = vsub.s32 %v3905, %v3907
        %v3909 = vrot.slane %v3901, %v3908
        %v3911 = vunpack.c.l.s4 1983009808
        %v3912 = vunpack.c.0.s8 %v3911
        %v3913 = vlaneseq
        %v3914 = vshrl.u32 %v3913, 7
        %v3915 = vsub.s32 %v3912, %v3914
        %v3916 = vrot.slane %v3902, %v3915
        %v3917 = vcombine.low %v3486, %v3488
        %v3918 = vcombine.high %v3486, %v3488
        %v3920 = vunpack.c.l.s4 1983009808
        %v3921 = vunpack.c.0.s8 %v3920
        %v3922 = vlaneseq
        %v3923 = vshrl.u32 %v3922, 7
        %v3924 = vsub.s32 %v3921, %v3923
        %v3925 = vrot.slane %v3917, %v3924
        %v3927 = vunpack.c.l.s4 1983009808
        %v3928 = vunpack.c.0.s8 %v3927
        %v3929 = vlaneseq
        %v3930 = vshrl.u32 %v3929, 7
        %v3931 = vsub.s32 %v3928, %v3930
        %v3932 = vrot.slane %v3918, %v3931
        %v3933 = vcombine.low %v3489, %v3491
        %v3934 = vcombine.high %v3489, %v3491
        %v3936 = vunpack.c.l.s4 1983009808
        %v3937 = vunpack.c.0.s8 %v3936
        %v3938 = vlaneseq
        %v3939 = vshrl.u32 %v3938, 7
        %v3940 = vsub.s32 %v3937, %v3939
        %v3941 = vrot.slane %v3933, %v3940
        %v3943 = vunpack.c.l.s4 1983009808
        %v3944 = vunpack.c.0.s8 %v3943
        %v3945 = vlaneseq
        %v3946 = vshrl.u32 %v3945, 7
        %v3947 = vsub.s32 %v3944, %v3946
        %v3948 = vrot.slane %v3934, %v3947
        %v3949 = vcombine.low %v3490, %v3492
        %v3950 = vcombine.high %v3490, %v3492
        %v3952 = vunpack.c.l.s4 1983009808
        %v3953 = vunpack.c.0.s8 %v3952
        %v3954 = vlaneseq
        %v3955 = vshrl.u32 %v3954, 7
        %v3956 = vsub.s32 %v3953, %v3955
        %v3957 = vrot.slane %v3949, %v3956
        %v3959 = vunpack.c.l.s4 1983009808
        %v3960 = vunpack.c.0.s8 %v3959
        %v3961 = vlaneseq
        %v3962 = vshrl.u32 %v3961, 7
        %v3963 = vsub.s32 %v3960, %v3962
        %v3964 = vrot.slane %v3950, %v3963
        %v3965 = vcombine.low %v3909, %v3925
        %v3966 = vcombine.high %v3909, %v3925
        %v3968 = vunpack.c.l.s4 1934713408
        %v3969 = vunpack.c.0.s8 %v3968
        %v3970 = vlaneseq
        %v3971 = vshrl.u32 %v3970, 7
        %v3972 = vsub.s32 %v3969, %v3971
        %v3973 = vrot.slane %v3965, %v3972
        %v3975 = vunpack.c.l.s4 1934713408
        %v3976 = vunpack.c.0.s8 %v3975
        %v3977 = vlaneseq
        %v3978 = vshrl.u32 %v3977, 7
        %v3979 = vsub.s32 %v3976, %v3978
        %v3980 = vrot.slane %v3966, %v3979
        %v3981 = vcombine.low %v3916, %v3932
        %v3982 = vcombine.high %v3916, %v3932
        %v3984 = vunpack.c.l.s4 1934713408
        %v3985 = vunpack.c.0.s8 %v3984
        %v3986 = vlaneseq
        %v3987 = vshrl.u32 %v3986, 7
        %v3988 = vsub.s32 %v3985, %v3987
        %v3989 = vrot.slane %v3981, %v3988
        %v3991 = vunpack.c.l.s4 1934713408
        %v3992 = vunpack.c.0.s8 %v3991
        %v3993 = vlaneseq
        %v3994 = vshrl.u32 %v3993, 7
        %v3995 = vsub.s32 %v3992, %v3994
        %v3996 = vrot.slane %v3982, %v3995
        %v3997 = vcombine.low %v3941, %v3957
        %v3998 = vcombine.high %v3941, %v3957
        %v4000 = vunpack.c.l.s4 1934713408
        %v4001 = vunpack.c.0.s8 %v4000
        %v4002 = vlaneseq
        %v4003 = vshrl.u32 %v4002, 7
        %v4004 = vsub.s32 %v4001, %v4003
        %v4005 = vrot.slane %v3997, %v4004
        %v4007 = vunpack.c.l.s4 1934713408
        %v4008 = vunpack.c.0.s8 %v4007
        %v4009 = vlaneseq
        %v4010 = vshrl.u32 %v4009, 7
        %v4011 = vsub.s32 %v4008, %v4010
        %v4012 = vrot.slane %v3998, %v4011
        %v4013 = vcombine.low %v3948, %v3964
        %v4014 = vcombine.high %v3948, %v3964
        %v4016 = vunpack.c.l.s4 1934713408
        %v4017 = vunpack.c.0.s8 %v4016
        %v4018 = vlaneseq
        %v4019 = vshrl.u32 %v4018, 7
        %v4020 = vsub.s32 %v4017, %v4019
        %v4021 = vrot.slane %v4013, %v4020
        %v4023 = vunpack.c.l.s4 1934713408
        %v4024 = vunpack.c.0.s8 %v4023
        %v4025 = vlaneseq
        %v4026 = vshrl.u32 %v4025, 7
        %v4027 = vsub.s32 %v4024, %v4026
        %v4028 = vrot.slane %v4014, %v4027
        %v4029 = vcombine.low %v3973, %v4005
        %v4030 = vcombine.high %v3973, %v4005
        %v4031 = vcombine.low %v3980, %v4012
        %v4032 = vcombine.high %v3980, %v4012
        %v4033 = vcombine.low %v3989, %v4021
        %v4034 = vcombine.high %v3989, %v4021
        %v4035 = vcombine.low %v3996, %v4028
        %v4036 = vcombine.high %v3996, %v4028
        %v4037 = vcombine.low %v3621, %v3623
        %v4038 = vcombine.high %v3621, %v3623
        %v4040 = vunpack.c.l.s4 1983009808
        %v4041 = vunpack.c.0.s8 %v4040
        %v4042 = vlaneseq
        %v4043 = vshrl.u32 %v4042, 7
        %v4044 = vsub.s32 %v4041, %v4043
        %v4045 = vrot.slane %v4037, %v4044
        %v4047 = vunpack.c.l.s4 1983009808
        %v4048 = vunpack.c.0.s8 %v4047
        %v4049 = vlaneseq
        %v4050 = vshrl.u32 %v4049, 7
        %v4051 = vsub.s32 %v4048, %v4050
        %v4052 = vrot.slane %v4038, %v4051
        %v4053 = vcombine.low %v3622, %v3624
        %v4054 = vcombine.high %v3622, %v3624
        %v4056 = vunpack.c.l.s4 1983009808
        %v4057 = vunpack.c.0.s8 %v4056
        %v4058 = vlaneseq
        %v4059 = vshrl.u32 %v4058, 7
        %v4060 = vsub.s32 %v4057, %v4059
        %v4061 = vrot.slane %v4053, %v4060
        %v4063 = vunpack.c.l.s4 1983009808
        %v4064 = vunpack.c.0.s8 %v4063
        %v4065 = vlaneseq
        %v4066 = vshrl.u32 %v4065, 7
        %v4067 = vsub.s32 %v4064, %v4066
        %v4068 = vrot.slane %v4054, %v4067
        %v4069 = vcombine.low %v3625, %v3627
        %v4070 = vcombine.high %v3625, %v3627
        %v4072 = vunpack.c.l.s4 1983009808
        %v4073 = vunpack.c.0.s8 %v4072
        %v4074 = vlaneseq
        %v4075 = vshrl.u32 %v4074, 7
        %v4076 = vsub.s32 %v4073, %v4075
        %v4077 = vrot.slane %v4069, %v4076
        %v4079 = vunpack.c.l.s4 1983009808
        %v4080 = vunpack.c.0.s8 %v4079
        %v4081 = vlaneseq
        %v4082 = vshrl.u32 %v4081, 7
        %v4083 = vsub.s32 %v4080, %v4082
        %v4084 = vrot.slane %v4070, %v4083
        %v4085 = vcombine.low %v3626, %v3628
        %v4086 = vcombine.high %v3626, %v3628
        %v4088 = vunpack.c.l.s4 1983009808
        %v4089 = vunpack.c.0.s8 %v4088
        %v4090 = vlaneseq
        %v4091 = vshrl.u32 %v4090, 7
        %v4092 = vsub.s32 %v4089, %v4091
        %v4093 = vrot.slane %v4085, %v4092
        %v4095 = vunpack.c.l.s4 1983009808
        %v4096 = vunpack.c.0.s8 %v4095
        %v4097 = vlaneseq
        %v4098 = vshrl.u32 %v4097, 7
        %v4099 = vsub.s32 %v4096, %v4098
        %v4100 = vrot.slane %v4086, %v4099
        %v4101 = vcombine.low %v4045, %v4061
        %v4102 = vcombine.high %v4045, %v4061
        %v4104 = vunpack.c.l.s4 1934713408
        %v4105 = vunpack.c.0.s8 %v4104
        %v4106 = vlaneseq
        %v4107 = vshrl.u32 %v4106, 7
        %v4108 = vsub.s32 %v4105, %v4107
        %v4109 = vrot.slane %v4101, %v4108
        %v4111 = vunpack.c.l.s4 1934713408
        %v4112 = vunpack.c.0.s8 %v4111
        %v4113 = vlaneseq
        %v4114 = vshrl.u32 %v4113, 7
        %v4115 = vsub.s32 %v4112, %v4114
        %v4116 = vrot.slane %v4102, %v4115
        %v4117 = vcombine.low %v4052, %v4068
        %v4118 = vcombine.high %v4052, %v4068
        %v4120 = vunpack.c.l.s4 1934713408
        %v4121 = vunpack.c.0.s8 %v4120
        %v4122 = vlaneseq
        %v4123 = vshrl.u32 %v4122, 7
        %v4124 = vsub.s32 %v4121, %v4123
        %v4125 = vrot.slane %v4117, %v4124
        %v4127 = vunpack.c.l.s4 1934713408
        %v4128 = vunpack.c.0.s8 %v4127
        %v4129 = vlaneseq
        %v4130 = vshrl.u32 %v4129, 7
        %v4131 = vsub.s32 %v4128, %v4130
        %v4132 = vrot.slane %v4118, %v4131
        %v4133 = vcombine.low %v4077, %v4093
        %v4134 = vcombine.high %v4077, %v4093
        %v4136 = vunpack.c.l.s4 1934713408
        %v4137 = vunpack.c.0.s8 %v4136
        %v4138 = vlaneseq
        %v4139 = vshrl.u32 %v4138, 7
        %v4140 = vsub.s32 %v4137, %v4139
        %v4141 = vrot.slane %v4133, %v4140
        %v4143 = vunpack.c.l.s4 1934713408
        %v4144 = vunpack.c.0.s8 %v4143
        %v4145 = vlaneseq
        %v4146 = vshrl.u32 %v4145, 7
        %v4147 = vsub.s32 %v4144, %v4146
        %v4148 = vrot.slane %v4134, %v4147
        %v4149 = vcombine.low %v4084, %v4100
        %v4150 = vcombine.high %v4084, %v4100
        %v4152 = vunpack.c.l.s4 1934713408
        %v4153 = vunpack.c.0.s8 %v4152
        %v4154 = vlaneseq
        %v4155 = vshrl.u32 %v4154, 7
        %v4156 = vsub.s32 %v4153, %v4155
        %v4157 = vrot.slane %v4149, %v4156
        %v4159 = vunpack.c.l.s4 1934713408
        %v4160 = vunpack.c.0.s8 %v4159
        %v4161 = vlaneseq
        %v4162 = vshrl.u32 %v4161, 7
        %v4163 = vsub.s32 %v4160, %v4162
        %v4164 = vrot.slane %v4150, %v4163
        %v4165 = vcombine.low %v4109, %v4141
        %v4166 = vcombine.high %v4109, %v4141
        %v4167 = vcombine.low %v4116, %v4148
        %v4168 = vcombine.high %v4116, %v4148
        %v4169 = vcombine.low %v4125, %v4157
        %v4170 = vcombine.high %v4125, %v4157
        %v4171 = vcombine.low %v4132, %v4164
        %v4172 = vcombine.high %v4132, %v4164
        %v4173 = vcombine.low %v3757, %v3759
        %v4174 = vcombine.high %v3757, %v3759
        %v4176 = vunpack.c.l.s4 1983009808
        %v4177 = vunpack.c.0.s8 %v4176
        %v4178 = vlaneseq
        %v4179 = vshrl.u32 %v4178, 7
        %v4180 = vsub.s32 %v4177, %v4179
        %v4181 = vrot.slane %v4173, %v4180
        %v4183 = vunpack.c.l.s4 1983009808
        %v4184 = vunpack.c.0.s8 %v4183
        %v4185 = vlaneseq
        %v4186 = vshrl.u32 %v4185, 7
        %v4187 = vsub.s32 %v4184, %v4186
        %v4188 = vrot.slane %v4174, %v4187
        %v4189 = vcombine.low %v3758, %v3760
        %v4190 = vcombine.high %v3758, %v3760
        %v4192 = vunpack.c.l.s4 1983009808
        %v4193 = vunpack.c.0.s8 %v4192
        %v4194 = vlaneseq
        %v4195 = vshrl.u32 %v4194, 7
        %v4196 = vsub.s32 %v4193, %v4195
        %v4197 = vrot.slane %v4189, %v4196
        %v4199 = vunpack.c.l.s4 1983009808
        %v4200 = vunpack.c.0.s8 %v4199
        %v4201 = vlaneseq
        %v4202 = vshrl.u32 %v4201, 7
        %v4203 = vsub.s32 %v4200, %v4202
        %v4204 = vrot.slane %v4190, %v4203
        %v4205 = vcombine.low %v3761, %v3763
        %v4206 = vcombine.high %v3761, %v3763
        %v4208 = vunpack.c.l.s4 1983009808
        %v4209 = vunpack.c.0.s8 %v4208
        %v4210 = vlaneseq
        %v4211 = vshrl.u32 %v4210, 7
        %v4212 = vsub.s32 %v4209, %v4211
        %v4213 = vrot.slane %v4205, %v4212
        %v4215 = vunpack.c.l.s4 1983009808
        %v4216 = vunpack.c.0.s8 %v4215
        %v4217 = vlaneseq
        %v4218 = vshrl.u32 %v4217, 7
        %v4219 = vsub.s32 %v4216, %v4218
        %v4220 = vrot.slane %v4206, %v4219
        %v4221 = vcombine.low %v3762, %v3764
        %v4222 = vcombine.high %v3762, %v3764
        %v4224 = vunpack.c.l.s4 1983009808
        %v4225 = vunpack.c.0.s8 %v4224
        %v4226 = vlaneseq
        %v4227 = vshrl.u32 %v4226, 7
        %v4228 = vsub.s32 %v4225, %v4227
        %v4229 = vrot.slane %v4221, %v4228
        %v4231 = vunpack.c.l.s4 1983009808
        %v4232 = vunpack.c.0.s8 %v4231
        %v4233 = vlaneseq
        %v4234 = vshrl.u32 %v4233, 7
        %v4235 = vsub.s32 %v4232, %v4234
        %v4236 = vrot.slane %v4222, %v4235
        %v4237 = vcombine.low %v4181, %v4197
        %v4238 = vcombine.high %v4181, %v4197
        %v4240 = vunpack.c.l.s4 1934713408
        %v4241 = vunpack.c.0.s8 %v4240
        %v4242 = vlaneseq
        %v4243 = vshrl.u32 %v4242, 7
        %v4244 = vsub.s32 %v4241, %v4243
        %v4245 = vrot.slane %v4237, %v4244
        %v4247 = vunpack.c.l.s4 1934713408
        %v4248 = vunpack.c.0.s8 %v4247
        %v4249 = vlaneseq
        %v4250 = vshrl.u32 %v4249, 7
        %v4251 = vsub.s32 %v4248, %v4250
        %v4252 = vrot.slane %v4238, %v4251
        %v4253 = vcombine.low %v4188, %v4204
        %v4254 = vcombine.high %v4188, %v4204
        %v4256 = vunpack.c.l.s4 1934713408
        %v4257 = vunpack.c.0.s8 %v4256
        %v4258 = vlaneseq
        %v4259 = vshrl.u32 %v4258, 7
        %v4260 = vsub.s32 %v4257, %v4259
        %v4261 = vrot.slane %v4253, %v4260
        %v4263 = vunpack.c.l.s4 1934713408
        %v4264 = vunpack.c.0.s8 %v4263
        %v4265 = vlaneseq
        %v4266 = vshrl.u32 %v4265, 7
        %v4267 = vsub.s32 %v4264, %v4266
        %v4268 = vrot.slane %v4254, %v4267
        %v4269 = vcombine.low %v4213, %v4229
        %v4270 = vcombine.high %v4213, %v4229
        %v4272 = vunpack.c.l.s4 1934713408
        %v4273 = vunpack.c.0.s8 %v4272
        %v4274 = vlaneseq
        %v4275 = vshrl.u32 %v4274, 7
        %v4276 = vsub.s32 %v4273, %v4275
        %v4277 = vrot.slane %v4269, %v4276
        %v4279 = vunpack.c.l.s4 1934713408
        %v4280 = vunpack.c.0.s8 %v4279
        %v4281 = vlaneseq
        %v4282 = vshrl.u32 %v4281, 7
        %v4283 = vsub.s32 %v4280, %v4282
        %v4284 = vrot.slane %v4270, %v4283
        %v4285 = vcombine.low %v4220, %v4236
        %v4286 = vcombine.high %v4220, %v4236
        %v4288 = vunpack.c.l.s4 1934713408
        %v4289 = vunpack.c.0.s8 %v4288
        %v4290 = vlaneseq
        %v4291 = vshrl.u32 %v4290, 7
        %v4292 = vsub.s32 %v4289, %v4291
        %v4293 = vrot.slane %v4285, %v4292
        %v4295 = vunpack.c.l.s4 1934713408
        %v4296 = vunpack.c.0.s8 %v4295
        %v4297 = vlaneseq
        %v4298 = vshrl.u32 %v4297, 7
        %v4299 = vsub.s32 %v4296, %v4298
        %v4300 = vrot.slane %v4286, %v4299
        %v4301 = vcombine.low %v4245, %v4277
        %v4302 = vcombine.high %v4245, %v4277
        %v4303 = vcombine.low %v4252, %v4284
        %v4304 = vcombine.high %v4252, %v4284
        %v4305 = vcombine.low %v4261, %v4293
        %v4306 = vcombine.high %v4261, %v4293
        %v4307 = vcombine.low %v4268, %v4300
        %v4308 = vcombine.high %v4268, %v4300
        %vm4309 = vcmask 130048
        %v4311 = vsel %vm4309, %v1541, 0
        %v4314 = vsel %vm4309, %v1677, 0
        %v4317 = vsel %vm4309, %v1813, 0
        %v4320 = vsel %vm4309, %v1949, 0
        %v4323 = vsel %vm4309, %v2717, 0
        %v4326 = vsel %vm4309, %v2853, 0
        %v4329 = vsel %vm4309, %v2989, 0
        %v4332 = vsel %vm4309, %v3125, 0
        %4334 = vmatprep.subr.mxu0 0.0
        %4335 = vmatpush1.xpose.msra.mxu0 0.0
        %4336 = vmatprep.subr.mxu0 0.0
        %4337 = vmatpush1.xpose.msra.mxu0 0.0
        %4338 = vmatprep.subr.mxu0 0.0
        %4339 = vmatpush1.xpose.msra.mxu0 0.0
        %4340 = vmatprep.subr.mxu0 0.0
        %4341 = vmatpush1.xpose.msra.mxu0 0.0
        %4342 = vmatprep.subr.mxu0 0.0
        %4343 = vmatpush1.xpose.msra.mxu0 0.0
        %4344 = vmatprep.subr.mxu0 0.0
        %4345 = vmatpush1.xpose.msra.mxu0 0.0
        %4346 = vmatprep.subr.mxu0 0.0
        %4347 = vmatpush1.xpose.msra.mxu0 0.0
        %4348 = vmatprep.subr.mxu0 0.0
        %4349 = vmatpush1.xpose.msra.mxu0 0.0
        %4350 = vmatprep.subr.mxu0 0.0
        %4351 = vmatpush1.xpose.msra.mxu0 0.0
        %4352 = vmatprep.subr.mxu0 0.0
        %4353 = vmatpush1.xpose.msra.mxu0 0.0
        %4354 = vmatprep.subr.mxu0 0.0
        %4355 = vmatpush1.xpose.msra.mxu0 0.0
        %4356 = vmatprep.subr.mxu0 0.0
        %4357 = vmatpush1.xpose.msra.mxu0 0.0
        %4358 = vmatprep.subr.mxu0 0.0
        %4359 = vmatpush1.xpose.msra.mxu0 %v4332
        %4360 = vmatprep.subr.mxu0 0.0
        %4361 = vmatpush1.xpose.msra.mxu0 %v4329
        %4362 = vmatprep.subr.mxu0 0.0
        %4363 = vmatpush1.xpose.msra.mxu0 %v4326
        %4364 = vmatprep.subr.mxu0 0.0
        %4365 = vmatpush1.xpose.msra.mxu0 %v4323
        %4366 = vmatprep.subr.mxu0 0.0
        %4367 = vmatpush2.xpose.msra.mxu0 0.0
        %4368 = vmatprep.subr.mxu0 0.0
        %4369 = vmatpush2.xpose.msra.mxu0 0.0
        %4370 = vmatprep.subr.mxu0 0.0
        %4371 = vmatpush2.xpose.msra.mxu0 0.0
        %4372 = vmatprep.subr.mxu0 0.0
        %4373 = vmatpush2.xpose.msra.mxu0 0.0
        %4374 = vmatprep.subr.mxu0 0.0
        %4375 = vmatpush2.xpose.msra.mxu0 0.0
        %4376 = vmatprep.subr.mxu0 0.0
        %4377 = vmatpush2.xpose.msra.mxu0 0.0
        %4378 = vmatprep.subr.mxu0 0.0
        %4379 = vmatpush2.xpose.msra.mxu0 0.0
        %4380 = vmatprep.subr.mxu0 0.0
        %4381 = vmatpush2.xpose.msra.mxu0 0.0
        %4382 = vmatprep.subr.mxu0 0.0
        %4383 = vmatpush2.xpose.msra.mxu0 0.0
        %4384 = vmatprep.subr.mxu0 0.0
        %4385 = vmatpush2.xpose.msra.mxu0 0.0
        %4386 = vmatprep.subr.mxu0 0.0
        %4387 = vmatpush2.xpose.msra.mxu0 0.0
        %4388 = vmatprep.subr.mxu0 0.0
        %4389 = vmatpush2.xpose.msra.mxu0 0.0
        %4390 = vmatprep.subr.mxu0 0.0
        %4391 = vmatpush2.xpose.msra.mxu0 0.0
        %4392 = vmatprep.subr.mxu0 0.0
        %4393 = vmatpush2.xpose.msra.mxu0 0.0
        %4394 = vmatprep.subr.mxu0 0.0
        %4395 = vmatpush2.xpose.msra.mxu0 0.0
        %4396 = vmatprep.subr.mxu0 0.0
        %4397 = vmatpush2.xpose.msra.mxu0 0.0
        %4398 = vmatprep.mubr.f32.mxu0 0.0
        %4399 = vmatmul.mubr.f32.gmra.mxu0 %v4311
        %v4400 = vpop.f32.mrf.mxu0
        %v4401 = vadd.f32 %v536, %v4400
        %v4402 = vpop.f32.mrf.mxu0
        %4403 = vmatprep.mubr.f32.mxu0 0.0
        %4404 = vmatmul.mubr.f32.gmra.mxu0 %v4314
        %v4405 = vpop.f32.mrf.mxu0
        %v4406 = vadd.f32 %v537, %v4405
        %v4407 = vpop.f32.mrf.mxu0
        %4408 = vmatprep.mubr.f32.mxu0 0.0
        %4409 = vmatmul.mubr.f32.gmra.mxu0 %v4317
        %v4410 = vpop.f32.mrf.mxu0
        %v4411 = vadd.f32 %v538, %v4410
        %v4412 = vpop.f32.mrf.mxu0
        %4413 = vmatprep.mubr.f32.mxu0 0.0
        %4414 = vmatmul.mubr.f32.gmra.mxu0 %v4320
        %v4415 = vpop.f32.mrf.mxu0
        %v4416 = vadd.f32 %v539, %v4415
        %v4417 = vpop.f32.mrf.mxu0
        %4418 = vdwg.mxu0
        %v4420 = vsel %vm4309, %v1542, 0
        %v4423 = vsel %vm4309, %v1678, 0
        %v4426 = vsel %vm4309, %v1814, 0
        %v4429 = vsel %vm4309, %v1950, 0
        %v4432 = vsel %vm4309, %v2718, 0
        %v4435 = vsel %vm4309, %v2854, 0
        %v4438 = vsel %vm4309, %v2990, 0
        %v4441 = vsel %vm4309, %v3126, 0
        %4443 = vmatprep.subr.mxu0 0.0
        %4444 = vmatpush1.xpose.msra.mxu0 0.0
        %4445 = vmatprep.subr.mxu0 0.0
        %4446 = vmatpush1.xpose.msra.mxu0 0.0
        %4447 = vmatprep.subr.mxu0 0.0
        %4448 = vmatpush1.xpose.msra.mxu0 0.0
        %4449 = vmatprep.subr.mxu0 0.0
        %4450 = vmatpush1.xpose.msra.mxu0 0.0
        %4451 = vmatprep.subr.mxu0 0.0
        %4452 = vmatpush1.xpose.msra.mxu0 0.0
        %4453 = vmatprep.subr.mxu0 0.0
        %4454 = vmatpush1.xpose.msra.mxu0 0.0
        %4455 = vmatprep.subr.mxu0 0.0
        %4456 = vmatpush1.xpose.msra.mxu0 0.0
        %4457 = vmatprep.subr.mxu0 0.0
        %4458 = vmatpush1.xpose.msra.mxu0 0.0
        %4459 = vmatprep.subr.mxu0 0.0
        %4460 = vmatpush1.xpose.msra.mxu0 0.0
        %4461 = vmatprep.subr.mxu0 0.0
        %4462 = vmatpush1.xpose.msra.mxu0 0.0
        %4463 = vmatprep.subr.mxu0 0.0
        %4464 = vmatpush1.xpose.msra.mxu0 0.0
        %4465 = vmatprep.subr.mxu0 0.0
        %4466 = vmatpush1.xpose.msra.mxu0 0.0
        %4467 = vmatprep.subr.mxu0 0.0
        %4468 = vmatpush1.xpose.msra.mxu0 %v4441
        %4469 = vmatprep.subr.mxu0 0.0
        %4470 = vmatpush1.xpose.msra.mxu0 %v4438
        %4471 = vmatprep.subr.mxu0 0.0
        %4472 = vmatpush1.xpose.msra.mxu0 %v4435
        %4473 = vmatprep.subr.mxu0 0.0
        %4474 = vmatpush1.xpose.msra.mxu0 %v4432
        %4475 = vmatprep.subr.mxu0 0.0
        %4476 = vmatpush2.xpose.msra.mxu0 0.0
        %4477 = vmatprep.subr.mxu0 0.0
        %4478 = vmatpush2.xpose.msra.mxu0 0.0
        %4479 = vmatprep.subr.mxu0 0.0
        %4480 = vmatpush2.xpose.msra.mxu0 0.0
        %4481 = vmatprep.subr.mxu0 0.0
        %4482 = vmatpush2.xpose.msra.mxu0 0.0
        %4483 = vmatprep.subr.mxu0 0.0
        %4484 = vmatpush2.xpose.msra.mxu0 0.0
        %4485 = vmatprep.subr.mxu0 0.0
        %4486 = vmatpush2.xpose.msra.mxu0 0.0
        %4487 = vmatprep.subr.mxu0 0.0
        %4488 = vmatpush2.xpose.msra.mxu0 0.0
        %4489 = vmatprep.subr.mxu0 0.0
        %4490 = vmatpush2.xpose.msra.mxu0 0.0
        %4491 = vmatprep.subr.mxu0 0.0
        %4492 = vmatpush2.xpose.msra.mxu0 0.0
        %4493 = vmatprep.subr.mxu0 0.0
        %4494 = vmatpush2.xpose.msra.mxu0 0.0
        %4495 = vmatprep.subr.mxu0 0.0
        %4496 = vmatpush2.xpose.msra.mxu0 0.0
        %4497 = vmatprep.subr.mxu0 0.0
        %4498 = vmatpush2.xpose.msra.mxu0 0.0
        %4499 = vmatprep.subr.mxu0 0.0
        %4500 = vmatpush2.xpose.msra.mxu0 0.0
        %4501 = vmatprep.subr.mxu0 0.0
        %4502 = vmatpush2.xpose.msra.mxu0 0.0
        %4503 = vmatprep.subr.mxu0 0.0
        %4504 = vmatpush2.xpose.msra.mxu0 0.0
        %4505 = vmatprep.subr.mxu0 0.0
        %4506 = vmatpush2.xpose.msra.mxu0 0.0
        %4507 = vmatprep.mubr.f32.mxu0 0.0
        %4508 = vmatmul.mubr.f32.gmra.mxu0 %v4420
        %v4509 = vpop.f32.mrf.mxu0
        %v4510 = vadd.f32 %v536, %v4509
        %v4511 = vpop.f32.mrf.mxu0
        %4512 = vmatprep.mubr.f32.mxu0 0.0
        %4513 = vmatmul.mubr.f32.gmra.mxu0 %v4423
        %v4514 = vpop.f32.mrf.mxu0
        %v4515 = vadd.f32 %v537, %v4514
        %v4516 = vpop.f32.mrf.mxu0
        %4517 = vmatprep.mubr.f32.mxu0 0.0
        %4518 = vmatmul.mubr.f32.gmra.mxu0 %v4426
        %v4519 = vpop.f32.mrf.mxu0
        %v4520 = vadd.f32 %v538, %v4519
        %v4521 = vpop.f32.mrf.mxu0
        %4522 = vmatprep.mubr.f32.mxu0 0.0
        %4523 = vmatmul.mubr.f32.gmra.mxu0 %v4429
        %v4524 = vpop.f32.mrf.mxu0
        %v4525 = vadd.f32 %v539, %v4524
        %v4526 = vpop.f32.mrf.mxu0
        %4527 = vdwg.mxu0
        %v4529 = vsel %vm4309, %v1543, 0
        %v4532 = vsel %vm4309, %v1679, 0
        %v4535 = vsel %vm4309, %v1815, 0
        %v4538 = vsel %vm4309, %v1951, 0
        %v4541 = vsel %vm4309, %v2719, 0
        %v4544 = vsel %vm4309, %v2855, 0
        %v4547 = vsel %vm4309, %v2991, 0
        %v4550 = vsel %vm4309, %v3127, 0
        %4552 = vmatprep.subr.mxu0 0.0
        %4553 = vmatpush1.xpose.msra.mxu0 0.0
        %4554 = vmatprep.subr.mxu0 0.0
        %4555 = vmatpush1.xpose.msra.mxu0 0.0
        %4556 = vmatprep.subr.mxu0 0.0
        %4557 = vmatpush1.xpose.msra.mxu0 0.0
        %4558 = vmatprep.subr.mxu0 0.0
        %4559 = vmatpush1.xpose.msra.mxu0 0.0
        %4560 = vmatprep.subr.mxu0 0.0
        %4561 = vmatpush1.xpose.msra.mxu0 0.0
        %4562 = vmatprep.subr.mxu0 0.0
        %4563 = vmatpush1.xpose.msra.mxu0 0.0
        %4564 = vmatprep.subr.mxu0 0.0
        %4565 = vmatpush1.xpose.msra.mxu0 0.0
        %4566 = vmatprep.subr.mxu0 0.0
        %4567 = vmatpush1.xpose.msra.mxu0 0.0
        %4568 = vmatprep.subr.mxu0 0.0
        %4569 = vmatpush1.xpose.msra.mxu0 0.0
        %4570 = vmatprep.subr.mxu0 0.0
        %4571 = vmatpush1.xpose.msra.mxu0 0.0
        %4572 = vmatprep.subr.mxu0 0.0
        %4573 = vmatpush1.xpose.msra.mxu0 0.0
        %4574 = vmatprep.subr.mxu0 0.0
        %4575 = vmatpush1.xpose.msra.mxu0 0.0
        %4576 = vmatprep.subr.mxu0 0.0
        %4577 = vmatpush1.xpose.msra.mxu0 %v4550
        %4578 = vmatprep.subr.mxu0 0.0
        %4579 = vmatpush1.xpose.msra.mxu0 %v4547
        %4580 = vmatprep.subr.mxu0 0.0
        %4581 = vmatpush1.xpose.msra.mxu0 %v4544
        %4582 = vmatprep.subr.mxu0 0.0
        %4583 = vmatpush1.xpose.msra.mxu0 %v4541
        %4584 = vmatprep.subr.mxu0 0.0
        %4585 = vmatpush2.xpose.msra.mxu0 0.0
        %4586 = vmatprep.subr.mxu0 0.0
        %4587 = vmatpush2.xpose.msra.mxu0 0.0
        %4588 = vmatprep.subr.mxu0 0.0
        %4589 = vmatpush2.xpose.msra.mxu0 0.0
        %4590 = vmatprep.subr.mxu0 0.0
        %4591 = vmatpush2.xpose.msra.mxu0 0.0
        %4592 = vmatprep.subr.mxu0 0.0
        %4593 = vmatpush2.xpose.msra.mxu0 0.0
        %4594 = vmatprep.subr.mxu0 0.0
        %4595 = vmatpush2.xpose.msra.mxu0 0.0
        %4596 = vmatprep.subr.mxu0 0.0
        %4597 = vmatpush2.xpose.msra.mxu0 0.0
        %4598 = vmatprep.subr.mxu0 0.0
        %4599 = vmatpush2.xpose.msra.mxu0 0.0
        %4600 = vmatprep.subr.mxu0 0.0
        %4601 = vmatpush2.xpose.msra.mxu0 0.0
        %4602 = vmatprep.subr.mxu0 0.0
        %4603 = vmatpush2.xpose.msra.mxu0 0.0
        %4604 = vmatprep.subr.mxu0 0.0
        %4605 = vmatpush2.xpose.msra.mxu0 0.0
        %4606 = vmatprep.subr.mxu0 0.0
        %4607 = vmatpush2.xpose.msra.mxu0 0.0
        %4608 = vmatprep.subr.mxu0 0.0
        %4609 = vmatpush2.xpose.msra.mxu0 0.0
        %4610 = vmatprep.subr.mxu0 0.0
        %4611 = vmatpush2.xpose.msra.mxu0 0.0
        %4612 = vmatprep.subr.mxu0 0.0
        %4613 = vmatpush2.xpose.msra.mxu0 0.0
        %4614 = vmatprep.subr.mxu0 0.0
        %4615 = vmatpush2.xpose.msra.mxu0 0.0
        %4616 = vmatprep.mubr.f32.mxu0 0.0
        %4617 = vmatmul.mubr.f32.gmra.mxu0 %v4529
        %v4618 = vpop.f32.mrf.mxu0
        %v4619 = vadd.f32 %v536, %v4618
        %v4620 = vpop.f32.mrf.mxu0
        %4621 = vmatprep.mubr.f32.mxu0 0.0
        %4622 = vmatmul.mubr.f32.gmra.mxu0 %v4532
        %v4623 = vpop.f32.mrf.mxu0
        %v4624 = vadd.f32 %v537, %v4623
        %v4625 = vpop.f32.mrf.mxu0
        %4626 = vmatprep.mubr.f32.mxu0 0.0
        %4627 = vmatmul.mubr.f32.gmra.mxu0 %v4535
        %v4628 = vpop.f32.mrf.mxu0
        %v4629 = vadd.f32 %v538, %v4628
        %v4630 = vpop.f32.mrf.mxu0
        %4631 = vmatprep.mubr.f32.mxu0 0.0
        %4632 = vmatmul.mubr.f32.gmra.mxu0 %v4538
        %v4633 = vpop.f32.mrf.mxu0
        %v4634 = vadd.f32 %v539, %v4633
        %v4635 = vpop.f32.mrf.mxu0
        %4636 = vdwg.mxu0
        %v4638 = vsel %vm4309, %v1544, 0
        %v4641 = vsel %vm4309, %v1680, 0
        %v4644 = vsel %vm4309, %v1816, 0
        %v4647 = vsel %vm4309, %v1952, 0
        %v4650 = vsel %vm4309, %v2720, 0
        %v4653 = vsel %vm4309, %v2856, 0
        %v4656 = vsel %vm4309, %v2992, 0
        %v4659 = vsel %vm4309, %v3128, 0
        %4661 = vmatprep.subr.mxu0 0.0
        %4662 = vmatpush1.xpose.msra.mxu0 0.0
        %4663 = vmatprep.subr.mxu0 0.0
        %4664 = vmatpush1.xpose.msra.mxu0 0.0
        %4665 = vmatprep.subr.mxu0 0.0
        %4666 = vmatpush1.xpose.msra.mxu0 0.0
        %4667 = vmatprep.subr.mxu0 0.0
        %4668 = vmatpush1.xpose.msra.mxu0 0.0
        %4669 = vmatprep.subr.mxu0 0.0
        %4670 = vmatpush1.xpose.msra.mxu0 0.0
        %4671 = vmatprep.subr.mxu0 0.0
        %4672 = vmatpush1.xpose.msra.mxu0 0.0
        %4673 = vmatprep.subr.mxu0 0.0
        %4674 = vmatpush1.xpose.msra.mxu0 0.0
        %4675 = vmatprep.subr.mxu0 0.0
        %4676 = vmatpush1.xpose.msra.mxu0 0.0
        %4677 = vmatprep.subr.mxu0 0.0
        %4678 = vmatpush1.xpose.msra.mxu0 0.0
        %4679 = vmatprep.subr.mxu0 0.0
        %4680 = vmatpush1.xpose.msra.mxu0 0.0
        %4681 = vmatprep.subr.mxu0 0.0
        %4682 = vmatpush1.xpose.msra.mxu0 0.0
        %4683 = vmatprep.subr.mxu0 0.0
        %4684 = vmatpush1.xpose.msra.mxu0 0.0
        %4685 = vmatprep.subr.mxu0 0.0
        %4686 = vmatpush1.xpose.msra.mxu0 %v4659
        %4687 = vmatprep.subr.mxu0 0.0
        %4688 = vmatpush1.xpose.msra.mxu0 %v4656
        %4689 = vmatprep.subr.mxu0 0.0
        %4690 = vmatpush1.xpose.msra.mxu0 %v4653
        %4691 = vmatprep.subr.mxu0 0.0
        %4692 = vmatpush1.xpose.msra.mxu0 %v4650
        %4693 = vmatprep.subr.mxu0 0.0
        %4694 = vmatpush2.xpose.msra.mxu0 0.0
        %4695 = vmatprep.subr.mxu0 0.0
        %4696 = vmatpush2.xpose.msra.mxu0 0.0
        %4697 = vmatprep.subr.mxu0 0.0
        %4698 = vmatpush2.xpose.msra.mxu0 0.0
        %4699 = vmatprep.subr.mxu0 0.0
        %4700 = vmatpush2.xpose.msra.mxu0 0.0
        %4701 = vmatprep.subr.mxu0 0.0
        %4702 = vmatpush2.xpose.msra.mxu0 0.0
        %4703 = vmatprep.subr.mxu0 0.0
        %4704 = vmatpush2.xpose.msra.mxu0 0.0
        %4705 = vmatprep.subr.mxu0 0.0
        %4706 = vmatpush2.xpose.msra.mxu0 0.0
        %4707 = vmatprep.subr.mxu0 0.0
        %4708 = vmatpush2.xpose.msra.mxu0 0.0
        %4709 = vmatprep.subr.mxu0 0.0
        %4710 = vmatpush2.xpose.msra.mxu0 0.0
        %4711 = vmatprep.subr.mxu0 0.0
        %4712 = vmatpush2.xpose.msra.mxu0 0.0
        %4713 = vmatprep.subr.mxu0 0.0
        %4714 = vmatpush2.xpose.msra.mxu0 0.0
        %4715 = vmatprep.subr.mxu0 0.0
        %4716 = vmatpush2.xpose.msra.mxu0 0.0
        %4717 = vmatprep.subr.mxu0 0.0
        %4718 = vmatpush2.xpose.msra.mxu0 0.0
        %4719 = vmatprep.subr.mxu0 0.0
        %4720 = vmatpush2.xpose.msra.mxu0 0.0
        %4721 = vmatprep.subr.mxu0 0.0
        %4722 = vmatpush2.xpose.msra.mxu0 0.0
        %4723 = vmatprep.subr.mxu0 0.0
        %4724 = vmatpush2.xpose.msra.mxu0 0.0
        %4725 = vmatprep.mubr.f32.mxu0 0.0
        %4726 = vmatmul.mubr.f32.gmra.mxu0 %v4638
        %v4727 = vpop.f32.mrf.mxu0
        %v4728 = vadd.f32 %v536, %v4727
        %v4729 = vpop.f32.mrf.mxu0
        %4730 = vmatprep.mubr.f32.mxu0 0.0
        %4731 = vmatmul.mubr.f32.gmra.mxu0 %v4641
        %v4732 = vpop.f32.mrf.mxu0
        %v4733 = vadd.f32 %v537, %v4732
        %v4734 = vpop.f32.mrf.mxu0
        %4735 = vmatprep.mubr.f32.mxu0 0.0
        %4736 = vmatmul.mubr.f32.gmra.mxu0 %v4644
        %v4737 = vpop.f32.mrf.mxu0
        %v4738 = vadd.f32 %v538, %v4737
        %v4739 = vpop.f32.mrf.mxu0
        %4740 = vmatprep.mubr.f32.mxu0 0.0
        %4741 = vmatmul.mubr.f32.gmra.mxu0 %v4647
        %v4742 = vpop.f32.mrf.mxu0
        %v4743 = vadd.f32 %v539, %v4742
        %v4744 = vpop.f32.mrf.mxu0
        %4745 = vdwg.mxu0
        %v4747 = vsel %vm4309, %v1545, 0
        %v4750 = vsel %vm4309, %v1681, 0
        %v4753 = vsel %vm4309, %v1817, 0
        %v4756 = vsel %vm4309, %v1953, 0
        %v4759 = vsel %vm4309, %v2721, 0
        %v4762 = vsel %vm4309, %v2857, 0
        %v4765 = vsel %vm4309, %v2993, 0
        %v4768 = vsel %vm4309, %v3129, 0
        %4770 = vmatprep.subr.mxu0 0.0
        %4771 = vmatpush1.xpose.msra.mxu0 0.0
        %4772 = vmatprep.subr.mxu0 0.0
        %4773 = vmatpush1.xpose.msra.mxu0 0.0
        %4774 = vmatprep.subr.mxu0 0.0
        %4775 = vmatpush1.xpose.msra.mxu0 0.0
        %4776 = vmatprep.subr.mxu0 0.0
        %4777 = vmatpush1.xpose.msra.mxu0 0.0
        %4778 = vmatprep.subr.mxu0 0.0
        %4779 = vmatpush1.xpose.msra.mxu0 0.0
        %4780 = vmatprep.subr.mxu0 0.0
        %4781 = vmatpush1.xpose.msra.mxu0 0.0
        %4782 = vmatprep.subr.mxu0 0.0
        %4783 = vmatpush1.xpose.msra.mxu0 0.0
        %4784 = vmatprep.subr.mxu0 0.0
        %4785 = vmatpush1.xpose.msra.mxu0 0.0
        %4786 = vmatprep.subr.mxu0 0.0
        %4787 = vmatpush1.xpose.msra.mxu0 0.0
        %4788 = vmatprep.subr.mxu0 0.0
        %4789 = vmatpush1.xpose.msra.mxu0 0.0
        %4790 = vmatprep.subr.mxu0 0.0
        %4791 = vmatpush1.xpose.msra.mxu0 0.0
        %4792 = vmatprep.subr.mxu0 0.0
        %4793 = vmatpush1.xpose.msra.mxu0 0.0
        %4794 = vmatprep.subr.mxu0 0.0
        %4795 = vmatpush1.xpose.msra.mxu0 %v4768
        %4796 = vmatprep.subr.mxu0 0.0
        %4797 = vmatpush1.xpose.msra.mxu0 %v4765
        %4798 = vmatprep.subr.mxu0 0.0
        %4799 = vmatpush1.xpose.msra.mxu0 %v4762
        %4800 = vmatprep.subr.mxu0 0.0
        %4801 = vmatpush1.xpose.msra.mxu0 %v4759
        %4802 = vmatprep.subr.mxu0 0.0
        %4803 = vmatpush2.xpose.msra.mxu0 0.0
        %4804 = vmatprep.subr.mxu0 0.0
        %4805 = vmatpush2.xpose.msra.mxu0 0.0
        %4806 = vmatprep.subr.mxu0 0.0
        %4807 = vmatpush2.xpose.msra.mxu0 0.0
        %4808 = vmatprep.subr.mxu0 0.0
        %4809 = vmatpush2.xpose.msra.mxu0 0.0
        %4810 = vmatprep.subr.mxu0 0.0
        %4811 = vmatpush2.xpose.msra.mxu0 0.0
        %4812 = vmatprep.subr.mxu0 0.0
        %4813 = vmatpush2.xpose.msra.mxu0 0.0
        %4814 = vmatprep.subr.mxu0 0.0
        %4815 = vmatpush2.xpose.msra.mxu0 0.0
        %4816 = vmatprep.subr.mxu0 0.0
        %4817 = vmatpush2.xpose.msra.mxu0 0.0
        %4818 = vmatprep.subr.mxu0 0.0
        %4819 = vmatpush2.xpose.msra.mxu0 0.0
        %4820 = vmatprep.subr.mxu0 0.0
        %4821 = vmatpush2.xpose.msra.mxu0 0.0
        %4822 = vmatprep.subr.mxu0 0.0
        %4823 = vmatpush2.xpose.msra.mxu0 0.0
        %4824 = vmatprep.subr.mxu0 0.0
        %4825 = vmatpush2.xpose.msra.mxu0 0.0
        %4826 = vmatprep.subr.mxu0 0.0
        %4827 = vmatpush2.xpose.msra.mxu0 0.0
        %4828 = vmatprep.subr.mxu0 0.0
        %4829 = vmatpush2.xpose.msra.mxu0 0.0
        %4830 = vmatprep.subr.mxu0 0.0
        %4831 = vmatpush2.xpose.msra.mxu0 0.0
        %4832 = vmatprep.subr.mxu0 0.0
        %4833 = vmatpush2.xpose.msra.mxu0 0.0
        %4834 = vmatprep.mubr.f32.mxu0 0.0
        %4835 = vmatmul.mubr.f32.gmra.mxu0 %v4747
        %v4836 = vpop.f32.mrf.mxu0
        %v4837 = vadd.f32 %v536, %v4836
        %v4838 = vpop.f32.mrf.mxu0
        %4839 = vmatprep.mubr.f32.mxu0 0.0
        %4840 = vmatmul.mubr.f32.gmra.mxu0 %v4750
        %v4841 = vpop.f32.mrf.mxu0
        %v4842 = vadd.f32 %v537, %v4841
        %v4843 = vpop.f32.mrf.mxu0
        %4844 = vmatprep.mubr.f32.mxu0 0.0
        %4845 = vmatmul.mubr.f32.gmra.mxu0 %v4753
        %v4846 = vpop.f32.mrf.mxu0
        %v4847 = vadd.f32 %v538, %v4846
        %v4848 = vpop.f32.mrf.mxu0
        %4849 = vmatprep.mubr.f32.mxu0 0.0
        %4850 = vmatmul.mubr.f32.gmra.mxu0 %v4756
        %v4851 = vpop.f32.mrf.mxu0
        %v4852 = vadd.f32 %v539, %v4851
        %v4853 = vpop.f32.mrf.mxu0
        %4854 = vdwg.mxu0
        %v4856 = vsel %vm4309, %v1546, 0
        %v4859 = vsel %vm4309, %v1682, 0
        %v4862 = vsel %vm4309, %v1818, 0
        %v4865 = vsel %vm4309, %v1954, 0
        %v4868 = vsel %vm4309, %v2722, 0
        %v4871 = vsel %vm4309, %v2858, 0
        %v4874 = vsel %vm4309, %v2994, 0
        %v4877 = vsel %vm4309, %v3130, 0
        %4879 = vmatprep.subr.mxu0 0.0
        %4880 = vmatpush1.xpose.msra.mxu0 0.0
        %4881 = vmatprep.subr.mxu0 0.0
        %4882 = vmatpush1.xpose.msra.mxu0 0.0
        %4883 = vmatprep.subr.mxu0 0.0
        %4884 = vmatpush1.xpose.msra.mxu0 0.0
        %4885 = vmatprep.subr.mxu0 0.0
        %4886 = vmatpush1.xpose.msra.mxu0 0.0
        %4887 = vmatprep.subr.mxu0 0.0
        %4888 = vmatpush1.xpose.msra.mxu0 0.0
        %4889 = vmatprep.subr.mxu0 0.0
        %4890 = vmatpush1.xpose.msra.mxu0 0.0
        %4891 = vmatprep.subr.mxu0 0.0
        %4892 = vmatpush1.xpose.msra.mxu0 0.0
        %4893 = vmatprep.subr.mxu0 0.0
        %4894 = vmatpush1.xpose.msra.mxu0 0.0
        %4895 = vmatprep.subr.mxu0 0.0
        %4896 = vmatpush1.xpose.msra.mxu0 0.0
        %4897 = vmatprep.subr.mxu0 0.0
        %4898 = vmatpush1.xpose.msra.mxu0 0.0
        %4899 = vmatprep.subr.mxu0 0.0
        %4900 = vmatpush1.xpose.msra.mxu0 0.0
        %4901 = vmatprep.subr.mxu0 0.0
        %4902 = vmatpush1.xpose.msra.mxu0 0.0
        %4903 = vmatprep.subr.mxu0 0.0
        %4904 = vmatpush1.xpose.msra.mxu0 %v4877
        %4905 = vmatprep.subr.mxu0 0.0
        %4906 = vmatpush1.xpose.msra.mxu0 %v4874
        %4907 = vmatprep.subr.mxu0 0.0
        %4908 = vmatpush1.xpose.msra.mxu0 %v4871
        %4909 = vmatprep.subr.mxu0 0.0
        %4910 = vmatpush1.xpose.msra.mxu0 %v4868
        %4911 = vmatprep.subr.mxu0 0.0
        %4912 = vmatpush2.xpose.msra.mxu0 0.0
        %4913 = vmatprep.subr.mxu0 0.0
        %4914 = vmatpush2.xpose.msra.mxu0 0.0
        %4915 = vmatprep.subr.mxu0 0.0
        %4916 = vmatpush2.xpose.msra.mxu0 0.0
        %4917 = vmatprep.subr.mxu0 0.0
        %4918 = vmatpush2.xpose.msra.mxu0 0.0
        %4919 = vmatprep.subr.mxu0 0.0
        %4920 = vmatpush2.xpose.msra.mxu0 0.0
        %4921 = vmatprep.subr.mxu0 0.0
        %4922 = vmatpush2.xpose.msra.mxu0 0.0
        %4923 = vmatprep.subr.mxu0 0.0
        %4924 = vmatpush2.xpose.msra.mxu0 0.0
        %4925 = vmatprep.subr.mxu0 0.0
        %4926 = vmatpush2.xpose.msra.mxu0 0.0
        %4927 = vmatprep.subr.mxu0 0.0
        %4928 = vmatpush2.xpose.msra.mxu0 0.0
        %4929 = vmatprep.subr.mxu0 0.0
        %4930 = vmatpush2.xpose.msra.mxu0 0.0
        %4931 = vmatprep.subr.mxu0 0.0
        %4932 = vmatpush2.xpose.msra.mxu0 0.0
        %4933 = vmatprep.subr.mxu0 0.0
        %4934 = vmatpush2.xpose.msra.mxu0 0.0
        %4935 = vmatprep.subr.mxu0 0.0
        %4936 = vmatpush2.xpose.msra.mxu0 0.0
        %4937 = vmatprep.subr.mxu0 0.0
        %4938 = vmatpush2.xpose.msra.mxu0 0.0
        %4939 = vmatprep.subr.mxu0 0.0
        %4940 = vmatpush2.xpose.msra.mxu0 0.0
        %4941 = vmatprep.subr.mxu0 0.0
        %4942 = vmatpush2.xpose.msra.mxu0 0.0
        %4943 = vmatprep.mubr.f32.mxu0 0.0
        %4944 = vmatmul.mubr.f32.gmra.mxu0 %v4856
        %v4945 = vpop.f32.mrf.mxu0
        %v4946 = vadd.f32 %v536, %v4945
        %v4947 = vpop.f32.mrf.mxu0
        %4948 = vmatprep.mubr.f32.mxu0 0.0
        %4949 = vmatmul.mubr.f32.gmra.mxu0 %v4859
        %v4950 = vpop.f32.mrf.mxu0
        %v4951 = vadd.f32 %v537, %v4950
        %v4952 = vpop.f32.mrf.mxu0
        %4953 = vmatprep.mubr.f32.mxu0 0.0
        %4954 = vmatmul.mubr.f32.gmra.mxu0 %v4862
        %v4955 = vpop.f32.mrf.mxu0
        %v4956 = vadd.f32 %v538, %v4955
        %v4957 = vpop.f32.mrf.mxu0
        %4958 = vmatprep.mubr.f32.mxu0 0.0
        %4959 = vmatmul.mubr.f32.gmra.mxu0 %v4865
        %v4960 = vpop.f32.mrf.mxu0
        %v4961 = vadd.f32 %v539, %v4960
        %v4962 = vpop.f32.mrf.mxu0
        %4963 = vdwg.mxu0
        %v4965 = vsel %vm4309, %v1547, 0
        %v4968 = vsel %vm4309, %v1683, 0
        %v4971 = vsel %vm4309, %v1819, 0
        %v4974 = vsel %vm4309, %v1955, 0
        %v4977 = vsel %vm4309, %v2723, 0
        %v4980 = vsel %vm4309, %v2859, 0
        %v4983 = vsel %vm4309, %v2995, 0
        %v4986 = vsel %vm4309, %v3131, 0
        %4988 = vmatprep.subr.mxu0 0.0
        %4989 = vmatpush1.xpose.msra.mxu0 0.0
        %4990 = vmatprep.subr.mxu0 0.0
        %4991 = vmatpush1.xpose.msra.mxu0 0.0
        %4992 = vmatprep.subr.mxu0 0.0
        %4993 = vmatpush1.xpose.msra.mxu0 0.0
        %4994 = vmatprep.subr.mxu0 0.0
        %4995 = vmatpush1.xpose.msra.mxu0 0.0
        %4996 = vmatprep.subr.mxu0 0.0
        %4997 = vmatpush1.xpose.msra.mxu0 0.0
        %4998 = vmatprep.subr.mxu0 0.0
        %4999 = vmatpush1.xpose.msra.mxu0 0.0
        %5000 = vmatprep.subr.mxu0 0.0
        %5001 = vmatpush1.xpose.msra.mxu0 0.0
        %5002 = vmatprep.subr.mxu0 0.0
        %5003 = vmatpush1.xpose.msra.mxu0 0.0
        %5004 = vmatprep.subr.mxu0 0.0
        %5005 = vmatpush1.xpose.msra.mxu0 0.0
        %5006 = vmatprep.subr.mxu0 0.0
        %5007 = vmatpush1.xpose.msra.mxu0 0.0
        %5008 = vmatprep.subr.mxu0 0.0
        %5009 = vmatpush1.xpose.msra.mxu0 0.0
        %5010 = vmatprep.subr.mxu0 0.0
        %5011 = vmatpush1.xpose.msra.mxu0 0.0
        %5012 = vmatprep.subr.mxu0 0.0
        %5013 = vmatpush1.xpose.msra.mxu0 %v4986
        %5014 = vmatprep.subr.mxu0 0.0
        %5015 = vmatpush1.xpose.msra.mxu0 %v4983
        %5016 = vmatprep.subr.mxu0 0.0
        %5017 = vmatpush1.xpose.msra.mxu0 %v4980
        %5018 = vmatprep.subr.mxu0 0.0
        %5019 = vmatpush1.xpose.msra.mxu0 %v4977
        %5020 = vmatprep.subr.mxu0 0.0
        %5021 = vmatpush2.xpose.msra.mxu0 0.0
        %5022 = vmatprep.subr.mxu0 0.0
        %5023 = vmatpush2.xpose.msra.mxu0 0.0
        %5024 = vmatprep.subr.mxu0 0.0
        %5025 = vmatpush2.xpose.msra.mxu0 0.0
        %5026 = vmatprep.subr.mxu0 0.0
        %5027 = vmatpush2.xpose.msra.mxu0 0.0
        %5028 = vmatprep.subr.mxu0 0.0
        %5029 = vmatpush2.xpose.msra.mxu0 0.0
        %5030 = vmatprep.subr.mxu0 0.0
        %5031 = vmatpush2.xpose.msra.mxu0 0.0
        %5032 = vmatprep.subr.mxu0 0.0
        %5033 = vmatpush2.xpose.msra.mxu0 0.0
        %5034 = vmatprep.subr.mxu0 0.0
        %5035 = vmatpush2.xpose.msra.mxu0 0.0
        %5036 = vmatprep.subr.mxu0 0.0
        %5037 = vmatpush2.xpose.msra.mxu0 0.0
        %5038 = vmatprep.subr.mxu0 0.0
        %5039 = vmatpush2.xpose.msra.mxu0 0.0
        %5040 = vmatprep.subr.mxu0 0.0
        %5041 = vmatpush2.xpose.msra.mxu0 0.0
        %5042 = vmatprep.subr.mxu0 0.0
        %5043 = vmatpush2.xpose.msra.mxu0 0.0
        %5044 = vmatprep.subr.mxu0 0.0
        %5045 = vmatpush2.xpose.msra.mxu0 0.0
        %5046 = vmatprep.subr.mxu0 0.0
        %5047 = vmatpush2.xpose.msra.mxu0 0.0
        %5048 = vmatprep.subr.mxu0 0.0
        %5049 = vmatpush2.xpose.msra.mxu0 0.0
        %5050 = vmatprep.subr.mxu0 0.0
        %5051 = vmatpush2.xpose.msra.mxu0 0.0
        %5052 = vmatprep.mubr.f32.mxu0 0.0
        %5053 = vmatmul.mubr.f32.gmra.mxu0 %v4965
        %v5054 = vpop.f32.mrf.mxu0
        %v5055 = vadd.f32 %v536, %v5054
        %v5056 = vpop.f32.mrf.mxu0
        %5057 = vmatprep.mubr.f32.mxu0 0.0
        %5058 = vmatmul.mubr.f32.gmra.mxu0 %v4968
        %v5059 = vpop.f32.mrf.mxu0
        %v5060 = vadd.f32 %v537, %v5059
        %v5061 = vpop.f32.mrf.mxu0
        %5062 = vmatprep.mubr.f32.mxu0 0.0
        %5063 = vmatmul.mubr.f32.gmra.mxu0 %v4971
        %v5064 = vpop.f32.mrf.mxu0
        %v5065 = vadd.f32 %v538, %v5064
        %v5066 = vpop.f32.mrf.mxu0
        %5067 = vmatprep.mubr.f32.mxu0 0.0
        %5068 = vmatmul.mubr.f32.gmra.mxu0 %v4974
        %v5069 = vpop.f32.mrf.mxu0
        %v5070 = vadd.f32 %v539, %v5069
        %v5071 = vpop.f32.mrf.mxu0
        %5072 = vdwg.mxu0
        %v5074 = vsel %vm4309, %v1548, 0
        %v5077 = vsel %vm4309, %v1684, 0
        %v5080 = vsel %vm4309, %v1820, 0
        %v5083 = vsel %vm4309, %v1956, 0
        %v5086 = vsel %vm4309, %v2724, 0
        %v5089 = vsel %vm4309, %v2860, 0
        %v5092 = vsel %vm4309, %v2996, 0
        %v5095 = vsel %vm4309, %v3132, 0
        %5097 = vmatprep.subr.mxu0 0.0
        %5098 = vmatpush1.xpose.msra.mxu0 0.0
        %5099 = vmatprep.subr.mxu0 0.0
        %5100 = vmatpush1.xpose.msra.mxu0 0.0
        %5101 = vmatprep.subr.mxu0 0.0
        %5102 = vmatpush1.xpose.msra.mxu0 0.0
        %5103 = vmatprep.subr.mxu0 0.0
        %5104 = vmatpush1.xpose.msra.mxu0 0.0
        %5105 = vmatprep.subr.mxu0 0.0
        %5106 = vmatpush1.xpose.msra.mxu0 0.0
        %5107 = vmatprep.subr.mxu0 0.0
        %5108 = vmatpush1.xpose.msra.mxu0 0.0
        %5109 = vmatprep.subr.mxu0 0.0
        %5110 = vmatpush1.xpose.msra.mxu0 0.0
        %5111 = vmatprep.subr.mxu0 0.0
        %5112 = vmatpush1.xpose.msra.mxu0 0.0
        %5113 = vmatprep.subr.mxu0 0.0
        %5114 = vmatpush1.xpose.msra.mxu0 0.0
        %5115 = vmatprep.subr.mxu0 0.0
        %5116 = vmatpush1.xpose.msra.mxu0 0.0
        %5117 = vmatprep.subr.mxu0 0.0
        %5118 = vmatpush1.xpose.msra.mxu0 0.0
        %5119 = vmatprep.subr.mxu0 0.0
        %5120 = vmatpush1.xpose.msra.mxu0 0.0
        %5121 = vmatprep.subr.mxu0 0.0
        %5122 = vmatpush1.xpose.msra.mxu0 %v5095
        %5123 = vmatprep.subr.mxu0 0.0
        %5124 = vmatpush1.xpose.msra.mxu0 %v5092
        %5125 = vmatprep.subr.mxu0 0.0
        %5126 = vmatpush1.xpose.msra.mxu0 %v5089
        %5127 = vmatprep.subr.mxu0 0.0
        %5128 = vmatpush1.xpose.msra.mxu0 %v5086
        %5129 = vmatprep.subr.mxu0 0.0
        %5130 = vmatpush2.xpose.msra.mxu0 0.0
        %5131 = vmatprep.subr.mxu0 0.0
        %5132 = vmatpush2.xpose.msra.mxu0 0.0
        %5133 = vmatprep.subr.mxu0 0.0
        %5134 = vmatpush2.xpose.msra.mxu0 0.0
        %5135 = vmatprep.subr.mxu0 0.0
        %5136 = vmatpush2.xpose.msra.mxu0 0.0
        %5137 = vmatprep.subr.mxu0 0.0
        %5138 = vmatpush2.xpose.msra.mxu0 0.0
        %5139 = vmatprep.subr.mxu0 0.0
        %5140 = vmatpush2.xpose.msra.mxu0 0.0
        %5141 = vmatprep.subr.mxu0 0.0
        %5142 = vmatpush2.xpose.msra.mxu0 0.0
        %5143 = vmatprep.subr.mxu0 0.0
        %5144 = vmatpush2.xpose.msra.mxu0 0.0
        %5145 = vmatprep.subr.mxu0 0.0
        %5146 = vmatpush2.xpose.msra.mxu0 0.0
        %5147 = vmatprep.subr.mxu0 0.0
        %5148 = vmatpush2.xpose.msra.mxu0 0.0
        %5149 = vmatprep.subr.mxu0 0.0
        %5150 = vmatpush2.xpose.msra.mxu0 0.0
        %5151 = vmatprep.subr.mxu0 0.0
        %5152 = vmatpush2.xpose.msra.mxu0 0.0
        %5153 = vmatprep.subr.mxu0 0.0
        %5154 = vmatpush2.xpose.msra.mxu0 0.0
        %5155 = vmatprep.subr.mxu0 0.0
        %5156 = vmatpush2.xpose.msra.mxu0 0.0
        %5157 = vmatprep.subr.mxu0 0.0
        %5158 = vmatpush2.xpose.msra.mxu0 0.0
        %5159 = vmatprep.subr.mxu0 0.0
        %5160 = vmatpush2.xpose.msra.mxu0 0.0
        %5161 = vmatprep.mubr.f32.mxu0 0.0
        %5162 = vmatmul.mubr.f32.gmra.mxu0 %v5074
        %v5163 = vpop.f32.mrf.mxu0
        %v5164 = vadd.f32 %v536, %v5163
        %v5165 = vpop.f32.mrf.mxu0
        %5166 = vmatprep.mubr.f32.mxu0 0.0
        %5167 = vmatmul.mubr.f32.gmra.mxu0 %v5077
        %v5168 = vpop.f32.mrf.mxu0
        %v5169 = vadd.f32 %v537, %v5168
        %v5170 = vpop.f32.mrf.mxu0
        %5171 = vmatprep.mubr.f32.mxu0 0.0
        %5172 = vmatmul.mubr.f32.gmra.mxu0 %v5080
        %v5173 = vpop.f32.mrf.mxu0
        %v5174 = vadd.f32 %v538, %v5173
        %v5175 = vpop.f32.mrf.mxu0
        %5176 = vmatprep.mubr.f32.mxu0 0.0
        %5177 = vmatmul.mubr.f32.gmra.mxu0 %v5083
        %v5178 = vpop.f32.mrf.mxu0
        %v5179 = vadd.f32 %v539, %v5178
        %v5180 = vpop.f32.mrf.mxu0
        %5181 = vdwg.mxu0
        %vm5182 = vcmask 261120
        %v5183 = vsel %vm5182, %v4401, -inf
        %5184 = vmax.xlane.f32.xlu0 %v5183
        %v5185 = vpop.xlane.xlu0 %5184
        %v5186 = vsel %vm5182, %v4406, -inf
        %5187 = vmax.xlane.f32.xlu0 %v5186
        %v5188 = vpop.xlane.xlu0 %5187
        %v5189 = vsel %vm5182, %v4411, -inf
        %5190 = vmax.xlane.f32.xlu0 %v5189
        %v5191 = vpop.xlane.xlu0 %5190
        %v5192 = vsel %vm5182, %v4416, -inf
        %5193 = vmax.xlane.f32.xlu0 %v5192
        %v5194 = vpop.xlane.xlu0 %5193
        %v5195 = vsel %vm5182, %v4510, -inf
        %5196 = vmax.xlane.f32.xlu0 %v5195
        %v5197 = vpop.xlane.xlu0 %5196
        %v5198 = vsel %vm5182, %v4515, -inf
        %5199 = vmax.xlane.f32.xlu0 %v5198
        %v5200 = vpop.xlane.xlu0 %5199
        %v5201 = vsel %vm5182, %v4520, -inf
        %5202 = vmax.xlane.f32.xlu0 %v5201
        %v5203 = vpop.xlane.xlu0 %5202
        %v5204 = vsel %vm5182, %v4525, -inf
        %5205 = vmax.xlane.f32.xlu0 %v5204
        %v5206 = vpop.xlane.xlu0 %5205
        %v5207 = vsel %vm5182, %v4619, -inf
        %5208 = vmax.xlane.f32.xlu0 %v5207
        %v5209 = vpop.xlane.xlu0 %5208
        %v5210 = vsel %vm5182, %v4624, -inf
        %5211 = vmax.xlane.f32.xlu0 %v5210
        %v5212 = vpop.xlane.xlu0 %5211
        %v5213 = vsel %vm5182, %v4629, -inf
        %5214 = vmax.xlane.f32.xlu0 %v5213
        %v5215 = vpop.xlane.xlu0 %5214
        %v5216 = vsel %vm5182, %v4634, -inf
        %5217 = vmax.xlane.f32.xlu0 %v5216
        %v5218 = vpop.xlane.xlu0 %5217
        %v5219 = vsel %vm5182, %v4728, -inf
        %5220 = vmax.xlane.f32.xlu0 %v5219
        %v5221 = vpop.xlane.xlu0 %5220
        %v5222 = vsel %vm5182, %v4733, -inf
        %5223 = vmax.xlane.f32.xlu0 %v5222
        %v5224 = vpop.xlane.xlu0 %5223
        %v5225 = vsel %vm5182, %v4738, -inf
        %5226 = vmax.xlane.f32.xlu0 %v5225
        %v5227 = vpop.xlane.xlu0 %5226
        %v5228 = vsel %vm5182, %v4743, -inf
        %5229 = vmax.xlane.f32.xlu0 %v5228
        %v5230 = vpop.xlane.xlu0 %5229
        %v5231 = vsel %vm5182, %v4837, -inf
        %5232 = vmax.xlane.f32.xlu0 %v5231
        %v5233 = vpop.xlane.xlu0 %5232
        %v5234 = vsel %vm5182, %v4842, -inf
        %5235 = vmax.xlane.f32.xlu0 %v5234
        %v5236 = vpop.xlane.xlu0 %5235
        %v5237 = vsel %vm5182, %v4847, -inf
        %5238 = vmax.xlane.f32.xlu0 %v5237
        %v5239 = vpop.xlane.xlu0 %5238
        %v5240 = vsel %vm5182, %v4852, -inf
        %5241 = vmax.xlane.f32.xlu0 %v5240
        %v5242 = vpop.xlane.xlu0 %5241
        %v5243 = vsel %vm5182, %v4946, -inf
        %5244 = vmax.xlane.f32.xlu0 %v5243
        %v5245 = vpop.xlane.xlu0 %5244
        %v5246 = vsel %vm5182, %v4951, -inf
        %5247 = vmax.xlane.f32.xlu0 %v5246
        %v5248 = vpop.xlane.xlu0 %5247
        %v5249 = vsel %vm5182, %v4956, -inf
        %5250 = vmax.xlane.f32.xlu0 %v5249
        %v5251 = vpop.xlane.xlu0 %5250
        %v5252 = vsel %vm5182, %v4961, -inf
        %5253 = vmax.xlane.f32.xlu0 %v5252
        %v5254 = vpop.xlane.xlu0 %5253
        %v5255 = vsel %vm5182, %v5055, -inf
        %5256 = vmax.xlane.f32.xlu0 %v5255
        %v5257 = vpop.xlane.xlu0 %5256
        %v5258 = vsel %vm5182, %v5060, -inf
        %5259 = vmax.xlane.f32.xlu0 %v5258
        %v5260 = vpop.xlane.xlu0 %5259
        %v5261 = vsel %vm5182, %v5065, -inf
        %5262 = vmax.xlane.f32.xlu0 %v5261
        %v5263 = vpop.xlane.xlu0 %5262
        %v5264 = vsel %vm5182, %v5070, -inf
        %5265 = vmax.xlane.f32.xlu0 %v5264
        %v5266 = vpop.xlane.xlu0 %5265
        %v5267 = vsel %vm5182, %v5164, -inf
        %5268 = vmax.xlane.f32.xlu0 %v5267
        %v5269 = vpop.xlane.xlu0 %5268
        %v5270 = vsel %vm5182, %v5169, -inf
        %5271 = vmax.xlane.f32.xlu0 %v5270
        %v5272 = vpop.xlane.xlu0 %5271
        %v5273 = vsel %vm5182, %v5174, -inf
        %5274 = vmax.xlane.f32.xlu0 %v5273
        %v5275 = vpop.xlane.xlu0 %5274
        %v5276 = vsel %vm5182, %v5179, -inf
        %5277 = vmax.xlane.f32.xlu0 %v5276
        %v5278 = vpop.xlane.xlu0 %5277
        %v5279 = vsub.f32 %v4401, %v5185
        %v5280 = vsub.f32 %v4406, %v5188
        %v5281 = vsub.f32 %v4411, %v5191
        %v5282 = vsub.f32 %v4416, %v5194
        %v5283 = vsub.f32 %v4510, %v5197
        %v5284 = vsub.f32 %v4515, %v5200
        %v5285 = vsub.f32 %v4520, %v5203
        %v5286 = vsub.f32 %v4525, %v5206
        %v5287 = vsub.f32 %v4619, %v5209
        %v5288 = vsub.f32 %v4624, %v5212
        %v5289 = vsub.f32 %v4629, %v5215
        %v5290 = vsub.f32 %v4634, %v5218
        %v5291 = vsub.f32 %v4728, %v5221
        %v5292 = vsub.f32 %v4733, %v5224
        %v5293 = vsub.f32 %v4738, %v5227
        %v5294 = vsub.f32 %v4743, %v5230
        %v5295 = vsub.f32 %v4837, %v5233
        %v5296 = vsub.f32 %v4842, %v5236
        %v5297 = vsub.f32 %v4847, %v5239
        %v5298 = vsub.f32 %v4852, %v5242
        %v5299 = vsub.f32 %v4946, %v5245
        %v5300 = vsub.f32 %v4951, %v5248
        %v5301 = vsub.f32 %v4956, %v5251
        %v5302 = vsub.f32 %v4961, %v5254
        %v5303 = vsub.f32 %v5055, %v5257
        %v5304 = vsub.f32 %v5060, %v5260
        %v5305 = vsub.f32 %v5065, %v5263
        %v5306 = vsub.f32 %v5070, %v5266
        %v5307 = vsub.f32 %v5164, %v5269
        %v5308 = vsub.f32 %v5169, %v5272
        %v5309 = vsub.f32 %v5174, %v5275
        %v5310 = vsub.f32 %v5179, %v5278
        %v5311 = vmul.f32 %v5279, 1.442695
        %v5312 = vpow.pop %v5311
        %v5313 = vmul.f32 %v5280, 1.442695
        %v5314 = vpow.pop %v5313
        %v5315 = vmul.f32 %v5281, 1.442695
        %v5316 = vpow.pop %v5315
        %v5317 = vmul.f32 %v5282, 1.442695
        %v5318 = vpow.pop %v5317
        %v5319 = vmul.f32 %v5283, 1.442695
        %v5320 = vpow.pop %v5319
        %v5321 = vmul.f32 %v5284, 1.442695
        %v5322 = vpow.pop %v5321
        %v5323 = vmul.f32 %v5285, 1.442695
        %v5324 = vpow.pop %v5323
        %v5325 = vmul.f32 %v5286, 1.442695
        %v5326 = vpow.pop %v5325
        %v5327 = vmul.f32 %v5287, 1.442695
        %v5328 = vpow.pop %v5327
        %v5329 = vmul.f32 %v5288, 1.442695
        %v5330 = vpow.pop %v5329
        %v5331 = vmul.f32 %v5289, 1.442695
        %v5332 = vpow.pop %v5331
        %v5333 = vmul.f32 %v5290, 1.442695
        %v5334 = vpow.pop %v5333
        %v5335 = vmul.f32 %v5291, 1.442695
        %v5336 = vpow.pop %v5335
        %v5337 = vmul.f32 %v5292, 1.442695
        %v5338 = vpow.pop %v5337
        %v5339 = vmul.f32 %v5293, 1.442695
        %v5340 = vpow.pop %v5339
        %v5341 = vmul.f32 %v5294, 1.442695
        %v5342 = vpow.pop %v5341
        %v5343 = vmul.f32 %v5295, 1.442695
        %v5344 = vpow.pop %v5343
        %v5345 = vmul.f32 %v5296, 1.442695
        %v5346 = vpow.pop %v5345
        %v5347 = vmul.f32 %v5297, 1.442695
        %v5348 = vpow.pop %v5347
        %v5349 = vmul.f32 %v5298, 1.442695
        %v5350 = vpow.pop %v5349
        %v5351 = vmul.f32 %v5299, 1.442695
        %v5352 = vpow.pop %v5351
        %v5353 = vmul.f32 %v5300, 1.442695
        %v5354 = vpow.pop %v5353
        %v5355 = vmul.f32 %v5301, 1.442695
        %v5356 = vpow.pop %v5355
        %v5357 = vmul.f32 %v5302, 1.442695
        %v5358 = vpow.pop %v5357
        %v5359 = vmul.f32 %v5303, 1.442695
        %v5360 = vpow.pop %v5359
        %v5361 = vmul.f32 %v5304, 1.442695
        %v5362 = vpow.pop %v5361
        %v5363 = vmul.f32 %v5305, 1.442695
        %v5364 = vpow.pop %v5363
        %v5365 = vmul.f32 %v5306, 1.442695
        %v5366 = vpow.pop %v5365
        %v5367 = vmul.f32 %v5307, 1.442695
        %v5368 = vpow.pop %v5367
        %v5369 = vmul.f32 %v5308, 1.442695
        %v5370 = vpow.pop %v5369
        %v5371 = vmul.f32 %v5309, 1.442695
        %v5372 = vpow.pop %v5371
        %v5373 = vmul.f32 %v5310, 1.442695
        %v5374 = vpow.pop %v5373
        %v5375 = vsel %vm5182, %v5312, 0.0
        %5376 = vadd.xlane.f32.xlu0 %v5375
        %v5377 = vpop.xlane.xlu0 %5376
        %v5378 = vsel %vm5182, %v5314, 0.0
        %5379 = vadd.xlane.f32.xlu0 %v5378
        %v5380 = vpop.xlane.xlu0 %5379
        %v5381 = vsel %vm5182, %v5316, 0.0
        %5382 = vadd.xlane.f32.xlu0 %v5381
        %v5383 = vpop.xlane.xlu0 %5382
        %v5384 = vsel %vm5182, %v5318, 0.0
        %5385 = vadd.xlane.f32.xlu0 %v5384
        %v5386 = vpop.xlane.xlu0 %5385
        %v5387 = vsel %vm5182, %v5320, 0.0
        %5388 = vadd.xlane.f32.xlu0 %v5387
        %v5389 = vpop.xlane.xlu0 %5388
        %v5390 = vsel %vm5182, %v5322, 0.0
        %5391 = vadd.xlane.f32.xlu0 %v5390
        %v5392 = vpop.xlane.xlu0 %5391
        %v5393 = vsel %vm5182, %v5324, 0.0
        %5394 = vadd.xlane.f32.xlu0 %v5393
        %v5395 = vpop.xlane.xlu0 %5394
        %v5396 = vsel %vm5182, %v5326, 0.0
        %5397 = vadd.xlane.f32.xlu0 %v5396
        %v5398 = vpop.xlane.xlu0 %5397
        %v5399 = vsel %vm5182, %v5328, 0.0
        %5400 = vadd.xlane.f32.xlu0 %v5399
        %v5401 = vpop.xlane.xlu0 %5400
        %v5402 = vsel %vm5182, %v5330, 0.0
        %5403 = vadd.xlane.f32.xlu0 %v5402
        %v5404 = vpop.xlane.xlu0 %5403
        %v5405 = vsel %vm5182, %v5332, 0.0
        %5406 = vadd.xlane.f32.xlu0 %v5405
        %v5407 = vpop.xlane.xlu0 %5406
        %v5408 = vsel %vm5182, %v5334, 0.0
        %5409 = vadd.xlane.f32.xlu0 %v5408
        %v5410 = vpop.xlane.xlu0 %5409
        %v5411 = vsel %vm5182, %v5336, 0.0
        %5412 = vadd.xlane.f32.xlu0 %v5411
        %v5413 = vpop.xlane.xlu0 %5412
        %v5414 = vsel %vm5182, %v5338, 0.0
        %5415 = vadd.xlane.f32.xlu0 %v5414
        %v5416 = vpop.xlane.xlu0 %5415
        %v5417 = vsel %vm5182, %v5340, 0.0
        %5418 = vadd.xlane.f32.xlu0 %v5417
        %v5419 = vpop.xlane.xlu0 %5418
        %v5420 = vsel %vm5182, %v5342, 0.0
        %5421 = vadd.xlane.f32.xlu0 %v5420
        %v5422 = vpop.xlane.xlu0 %5421
        %v5423 = vsel %vm5182, %v5344, 0.0
        %5424 = vadd.xlane.f32.xlu0 %v5423
        %v5425 = vpop.xlane.xlu0 %5424
        %v5426 = vsel %vm5182, %v5346, 0.0
        %5427 = vadd.xlane.f32.xlu0 %v5426
        %v5428 = vpop.xlane.xlu0 %5427
        %v5429 = vsel %vm5182, %v5348, 0.0
        %5430 = vadd.xlane.f32.xlu0 %v5429
        %v5431 = vpop.xlane.xlu0 %5430
        %v5432 = vsel %vm5182, %v5350, 0.0
        %5433 = vadd.xlane.f32.xlu0 %v5432
        %v5434 = vpop.xlane.xlu0 %5433
        %v5435 = vsel %vm5182, %v5352, 0.0
        %5436 = vadd.xlane.f32.xlu0 %v5435
        %v5437 = vpop.xlane.xlu0 %5436
        %v5438 = vsel %vm5182, %v5354, 0.0
        %5439 = vadd.xlane.f32.xlu0 %v5438
        %v5440 = vpop.xlane.xlu0 %5439
        %v5441 = vsel %vm5182, %v5356, 0.0
        %5442 = vadd.xlane.f32.xlu0 %v5441
        %v5443 = vpop.xlane.xlu0 %5442
        %v5444 = vsel %vm5182, %v5358, 0.0
        %5445 = vadd.xlane.f32.xlu0 %v5444
        %v5446 = vpop.xlane.xlu0 %5445
        %v5447 = vsel %vm5182, %v5360, 0.0
        %5448 = vadd.xlane.f32.xlu0 %v5447
        %v5449 = vpop.xlane.xlu0 %5448
        %v5450 = vsel %vm5182, %v5362, 0.0
        %5451 = vadd.xlane.f32.xlu0 %v5450
        %v5452 = vpop.xlane.xlu0 %5451
        %v5453 = vsel %vm5182, %v5364, 0.0
        %5454 = vadd.xlane.f32.xlu0 %v5453
        %v5455 = vpop.xlane.xlu0 %5454
        %v5456 = vsel %vm5182, %v5366, 0.0
        %5457 = vadd.xlane.f32.xlu0 %v5456
        %v5458 = vpop.xlane.xlu0 %5457
        %v5459 = vsel %vm5182, %v5368, 0.0
        %5460 = vadd.xlane.f32.xlu0 %v5459
        %v5461 = vpop.xlane.xlu0 %5460
        %v5462 = vsel %vm5182, %v5370, 0.0
        %5463 = vadd.xlane.f32.xlu0 %v5462
        %v5464 = vpop.xlane.xlu0 %5463
        %v5465 = vsel %vm5182, %v5372, 0.0
        %5466 = vadd.xlane.f32.xlu0 %v5465
        %v5467 = vpop.xlane.xlu0 %5466
        %v5468 = vsel %vm5182, %v5374, 0.0
        %5469 = vadd.xlane.f32.xlu0 %v5468
        %v5470 = vpop.xlane.xlu0 %5469
        %v5471 = vrcp.pop %v5377
        %v5472 = vrcp.pop %v5380
        %v5473 = vrcp.pop %v5383
        %v5474 = vrcp.pop %v5386
        %v5475 = vrcp.pop %v5389
        %v5476 = vrcp.pop %v5392
        %v5477 = vrcp.pop %v5395
        %v5478 = vrcp.pop %v5398
        %v5479 = vrcp.pop %v5401
        %v5480 = vrcp.pop %v5404
        %v5481 = vrcp.pop %v5407
        %v5482 = vrcp.pop %v5410
        %v5483 = vrcp.pop %v5413
        %v5484 = vrcp.pop %v5416
        %v5485 = vrcp.pop %v5419
        %v5486 = vrcp.pop %v5422
        %v5487 = vrcp.pop %v5425
        %v5488 = vrcp.pop %v5428
        %v5489 = vrcp.pop %v5431
        %v5490 = vrcp.pop %v5434
        %v5491 = vrcp.pop %v5437
        %v5492 = vrcp.pop %v5440
        %v5493 = vrcp.pop %v5443
        %v5494 = vrcp.pop %v5446
        %v5495 = vrcp.pop %v5449
        %v5496 = vrcp.pop %v5452
        %v5497 = vrcp.pop %v5455
        %v5498 = vrcp.pop %v5458
        %v5499 = vrcp.pop %v5461
        %v5500 = vrcp.pop %v5464
        %v5501 = vrcp.pop %v5467
        %v5502 = vrcp.pop %v5470
        %v5503 = vmul.f32 %v5312, %v5471
        %v5504 = vmul.f32 %v5314, %v5472
        %v5505 = vmul.f32 %v5316, %v5473
        %v5506 = vmul.f32 %v5318, %v5474
        %v5507 = vmul.f32 %v5320, %v5475
        %v5508 = vmul.f32 %v5322, %v5476
        %v5509 = vmul.f32 %v5324, %v5477
        %v5510 = vmul.f32 %v5326, %v5478
        %v5511 = vmul.f32 %v5328, %v5479
        %v5512 = vmul.f32 %v5330, %v5480
        %v5513 = vmul.f32 %v5332, %v5481
        %v5514 = vmul.f32 %v5334, %v5482
        %v5515 = vmul.f32 %v5336, %v5483
        %v5516 = vmul.f32 %v5338, %v5484
        %v5517 = vmul.f32 %v5340, %v5485
        %v5518 = vmul.f32 %v5342, %v5486
        %v5519 = vmul.f32 %v5344, %v5487
        %v5520 = vmul.f32 %v5346, %v5488
        %v5521 = vmul.f32 %v5348, %v5489
        %v5522 = vmul.f32 %v5350, %v5490
        %v5523 = vmul.f32 %v5352, %v5491
        %v5524 = vmul.f32 %v5354, %v5492
        %v5525 = vmul.f32 %v5356, %v5493
        %v5526 = vmul.f32 %v5358, %v5494
        %v5527 = vmul.f32 %v5360, %v5495
        %v5528 = vmul.f32 %v5362, %v5496
        %v5529 = vmul.f32 %v5364, %v5497
        %v5530 = vmul.f32 %v5366, %v5498
        %v5531 = vmul.f32 %v5368, %v5499
        %v5532 = vmul.f32 %v5370, %v5500
        %v5533 = vmul.f32 %v5372, %v5501
        %v5534 = vmul.f32 %v5374, %v5502
        %v5536 = vsel %vm5182, %v5503, 0
        %v5539 = vsel %vm5182, %v5504, 0
        %v5542 = vsel %vm5182, %v5505, 0
        %v5545 = vsel %vm5182, %v5506, 0
        %5547 = vmatprep.subr.mxu0 0.0
        %5548 = vmatpush1.msra.mxu0 0.0
        %5549 = vmatprep.subr.mxu0 0.0
        %5550 = vmatpush1.msra.mxu0 0.0
        %5551 = vmatprep.subr.mxu0 0.0
        %5552 = vmatpush1.msra.mxu0 0.0
        %5553 = vmatprep.subr.mxu0 0.0
        %5554 = vmatpush1.msra.mxu0 0.0
        %5555 = vmatprep.subr.mxu0 0.0
        %5556 = vmatpush1.msra.mxu0 0.0
        %5557 = vmatprep.subr.mxu0 0.0
        %5558 = vmatpush1.msra.mxu0 0.0
        %5559 = vmatprep.subr.mxu0 0.0
        %5560 = vmatpush1.msra.mxu0 0.0
        %5561 = vmatprep.subr.mxu0 0.0
        %5562 = vmatpush1.msra.mxu0 0.0
        %5563 = vmatprep.subr.mxu0 0.0
        %5564 = vmatpush1.msra.mxu0 0.0
        %5565 = vmatprep.subr.mxu0 0.0
        %5566 = vmatpush1.msra.mxu0 0.0
        %5567 = vmatprep.subr.mxu0 0.0
        %5568 = vmatpush1.msra.mxu0 0.0
        %5569 = vmatprep.subr.mxu0 0.0
        %5570 = vmatpush1.msra.mxu0 0.0
        %5571 = vmatprep.subr.mxu0 0.0
        %5572 = vmatpush1.msra.mxu0 %v4301
        %5573 = vmatprep.subr.mxu0 0.0
        %5574 = vmatpush1.msra.mxu0 %v4165
        %5575 = vmatprep.subr.mxu0 0.0
        %5576 = vmatpush1.msra.mxu0 %v4029
        %5577 = vmatprep.subr.mxu0 0.0
        %5578 = vmatpush1.msra.mxu0 %v3893
        %5579 = vmatprep.subr.mxu0 0.0
        %5580 = vmatpush2.msra.mxu0 0.0
        %5581 = vmatprep.subr.mxu0 0.0
        %5582 = vmatpush2.msra.mxu0 0.0
        %5583 = vmatprep.subr.mxu0 0.0
        %5584 = vmatpush2.msra.mxu0 0.0
        %5585 = vmatprep.subr.mxu0 0.0
        %5586 = vmatpush2.msra.mxu0 0.0
        %5587 = vmatprep.subr.mxu0 0.0
        %5588 = vmatpush2.msra.mxu0 0.0
        %5589 = vmatprep.subr.mxu0 0.0
        %5590 = vmatpush2.msra.mxu0 0.0
        %5591 = vmatprep.subr.mxu0 0.0
        %5592 = vmatpush2.msra.mxu0 0.0
        %5593 = vmatprep.subr.mxu0 0.0
        %5594 = vmatpush2.msra.mxu0 0.0
        %5595 = vmatprep.subr.mxu0 0.0
        %5596 = vmatpush2.msra.mxu0 0.0
        %5597 = vmatprep.subr.mxu0 0.0
        %5598 = vmatpush2.msra.mxu0 0.0
        %5599 = vmatprep.subr.mxu0 0.0
        %5600 = vmatpush2.msra.mxu0 0.0
        %5601 = vmatprep.subr.mxu0 0.0
        %5602 = vmatpush2.msra.mxu0 0.0
        %5603 = vmatprep.subr.mxu0 0.0
        %5604 = vmatpush2.msra.mxu0 0.0
        %5605 = vmatprep.subr.mxu0 0.0
        %5606 = vmatpush2.msra.mxu0 0.0
        %5607 = vmatprep.subr.mxu0 0.0
        %5608 = vmatpush2.msra.mxu0 0.0
        %5609 = vmatprep.subr.mxu0 0.0
        %5610 = vmatpush2.msra.mxu0 0.0
        %5611 = vmatprep.mubr.f32.mxu0 0.0
        %5612 = vmatmul.mubr.f32.gmra.mxu0 %v5536
        %v5613 = vpop.f32.mrf.mxu0
        %v5614 = vadd.f32 0.0, %v5613
        %v5615 = vpop.f32.mrf.mxu0
        %5616 = vmatprep.mubr.f32.mxu0 0.0
        %5617 = vmatmul.mubr.f32.gmra.mxu0 %v5539
        %v5618 = vpop.f32.mrf.mxu0
        %v5619 = vadd.f32 0.0, %v5618
        %v5620 = vpop.f32.mrf.mxu0
        %5621 = vmatprep.mubr.f32.mxu0 0.0
        %5622 = vmatmul.mubr.f32.gmra.mxu0 %v5542
        %v5623 = vpop.f32.mrf.mxu0
        %v5624 = vadd.f32 0.0, %v5623
        %v5625 = vpop.f32.mrf.mxu0
        %5626 = vmatprep.mubr.f32.mxu0 0.0
        %5627 = vmatmul.mubr.f32.gmra.mxu0 %v5545
        %v5628 = vpop.f32.mrf.mxu0
        %v5629 = vadd.f32 0.0, %v5628
        %v5630 = vpop.f32.mrf.mxu0
        %5631 = vdwg.mxu0
        %v5633 = vsel %vm5182, %v5507, 0
        %v5636 = vsel %vm5182, %v5508, 0
        %v5639 = vsel %vm5182, %v5509, 0
        %v5642 = vsel %vm5182, %v5510, 0
        %5644 = vmatprep.subr.mxu0 0.0
        %5645 = vmatpush1.msra.mxu0 0.0
        %5646 = vmatprep.subr.mxu0 0.0
        %5647 = vmatpush1.msra.mxu0 0.0
        %5648 = vmatprep.subr.mxu0 0.0
        %5649 = vmatpush1.msra.mxu0 0.0
        %5650 = vmatprep.subr.mxu0 0.0
        %5651 = vmatpush1.msra.mxu0 0.0
        %5652 = vmatprep.subr.mxu0 0.0
        %5653 = vmatpush1.msra.mxu0 0.0
        %5654 = vmatprep.subr.mxu0 0.0
        %5655 = vmatpush1.msra.mxu0 0.0
        %5656 = vmatprep.subr.mxu0 0.0
        %5657 = vmatpush1.msra.mxu0 0.0
        %5658 = vmatprep.subr.mxu0 0.0
        %5659 = vmatpush1.msra.mxu0 0.0
        %5660 = vmatprep.subr.mxu0 0.0
        %5661 = vmatpush1.msra.mxu0 0.0
        %5662 = vmatprep.subr.mxu0 0.0
        %5663 = vmatpush1.msra.mxu0 0.0
        %5664 = vmatprep.subr.mxu0 0.0
        %5665 = vmatpush1.msra.mxu0 0.0
        %5666 = vmatprep.subr.mxu0 0.0
        %5667 = vmatpush1.msra.mxu0 0.0
        %5668 = vmatprep.subr.mxu0 0.0
        %5669 = vmatpush1.msra.mxu0 %v4302
        %5670 = vmatprep.subr.mxu0 0.0
        %5671 = vmatpush1.msra.mxu0 %v4166
        %5672 = vmatprep.subr.mxu0 0.0
        %5673 = vmatpush1.msra.mxu0 %v4030
        %5674 = vmatprep.subr.mxu0 0.0
        %5675 = vmatpush1.msra.mxu0 %v3894
        %5676 = vmatprep.subr.mxu0 0.0
        %5677 = vmatpush2.msra.mxu0 0.0
        %5678 = vmatprep.subr.mxu0 0.0
        %5679 = vmatpush2.msra.mxu0 0.0
        %5680 = vmatprep.subr.mxu0 0.0
        %5681 = vmatpush2.msra.mxu0 0.0
        %5682 = vmatprep.subr.mxu0 0.0
        %5683 = vmatpush2.msra.mxu0 0.0
        %5684 = vmatprep.subr.mxu0 0.0
        %5685 = vmatpush2.msra.mxu0 0.0
        %5686 = vmatprep.subr.mxu0 0.0
        %5687 = vmatpush2.msra.mxu0 0.0
        %5688 = vmatprep.subr.mxu0 0.0
        %5689 = vmatpush2.msra.mxu0 0.0
        %5690 = vmatprep.subr.mxu0 0.0
        %5691 = vmatpush2.msra.mxu0 0.0
        %5692 = vmatprep.subr.mxu0 0.0
        %5693 = vmatpush2.msra.mxu0 0.0
        %5694 = vmatprep.subr.mxu0 0.0
        %5695 = vmatpush2.msra.mxu0 0.0
        %5696 = vmatprep.subr.mxu0 0.0
        %5697 = vmatpush2.msra.mxu0 0.0
        %5698 = vmatprep.subr.mxu0 0.0
        %5699 = vmatpush2.msra.mxu0 0.0
        %5700 = vmatprep.subr.mxu0 0.0
        %5701 = vmatpush2.msra.mxu0 0.0
        %5702 = vmatprep.subr.mxu0 0.0
        %5703 = vmatpush2.msra.mxu0 0.0
        %5704 = vmatprep.subr.mxu0 0.0
        %5705 = vmatpush2.msra.mxu0 0.0
        %5706 = vmatprep.subr.mxu0 0.0
        %5707 = vmatpush2.msra.mxu0 0.0
        %5708 = vmatprep.mubr.f32.mxu0 0.0
        %5709 = vmatmul.mubr.f32.gmra.mxu0 %v5633
        %v5710 = vpop.f32.mrf.mxu0
        %v5711 = vadd.f32 0.0, %v5710
        %v5712 = vpop.f32.mrf.mxu0
        %5713 = vmatprep.mubr.f32.mxu0 0.0
        %5714 = vmatmul.mubr.f32.gmra.mxu0 %v5636
        %v5715 = vpop.f32.mrf.mxu0
        %v5716 = vadd.f32 0.0, %v5715
        %v5717 = vpop.f32.mrf.mxu0
        %5718 = vmatprep.mubr.f32.mxu0 0.0
        %5719 = vmatmul.mubr.f32.gmra.mxu0 %v5639
        %v5720 = vpop.f32.mrf.mxu0
        %v5721 = vadd.f32 0.0, %v5720
        %v5722 = vpop.f32.mrf.mxu0
        %5723 = vmatprep.mubr.f32.mxu0 0.0
        %5724 = vmatmul.mubr.f32.gmra.mxu0 %v5642
        %v5725 = vpop.f32.mrf.mxu0
        %v5726 = vadd.f32 0.0, %v5725
        %v5727 = vpop.f32.mrf.mxu0
        %5728 = vdwg.mxu0
        %v5730 = vsel %vm5182, %v5511, 0
        %v5733 = vsel %vm5182, %v5512, 0
        %v5736 = vsel %vm5182, %v5513, 0
        %v5739 = vsel %vm5182, %v5514, 0
        %5741 = vmatprep.subr.mxu0 0.0
        %5742 = vmatpush1.msra.mxu0 0.0
        %5743 = vmatprep.subr.mxu0 0.0
        %5744 = vmatpush1.msra.mxu0 0.0
        %5745 = vmatprep.subr.mxu0 0.0
        %5746 = vmatpush1.msra.mxu0 0.0
        %5747 = vmatprep.subr.mxu0 0.0
        %5748 = vmatpush1.msra.mxu0 0.0
        %5749 = vmatprep.subr.mxu0 0.0
        %5750 = vmatpush1.msra.mxu0 0.0
        %5751 = vmatprep.subr.mxu0 0.0
        %5752 = vmatpush1.msra.mxu0 0.0
        %5753 = vmatprep.subr.mxu0 0.0
        %5754 = vmatpush1.msra.mxu0 0.0
        %5755 = vmatprep.subr.mxu0 0.0
        %5756 = vmatpush1.msra.mxu0 0.0
        %5757 = vmatprep.subr.mxu0 0.0
        %5758 = vmatpush1.msra.mxu0 0.0
        %5759 = vmatprep.subr.mxu0 0.0
        %5760 = vmatpush1.msra.mxu0 0.0
        %5761 = vmatprep.subr.mxu0 0.0
        %5762 = vmatpush1.msra.mxu0 0.0
        %5763 = vmatprep.subr.mxu0 0.0
        %5764 = vmatpush1.msra.mxu0 0.0
        %5765 = vmatprep.subr.mxu0 0.0
        %5766 = vmatpush1.msra.mxu0 %v4303
        %5767 = vmatprep.subr.mxu0 0.0
        %5768 = vmatpush1.msra.mxu0 %v4167
        %5769 = vmatprep.subr.mxu0 0.0
        %5770 = vmatpush1.msra.mxu0 %v4031
        %5771 = vmatprep.subr.mxu0 0.0
        %5772 = vmatpush1.msra.mxu0 %v3895
        %5773 = vmatprep.subr.mxu0 0.0
        %5774 = vmatpush2.msra.mxu0 0.0
        %5775 = vmatprep.subr.mxu0 0.0
        %5776 = vmatpush2.msra.mxu0 0.0
        %5777 = vmatprep.subr.mxu0 0.0
        %5778 = vmatpush2.msra.mxu0 0.0
        %5779 = vmatprep.subr.mxu0 0.0
        %5780 = vmatpush2.msra.mxu0 0.0
        %5781 = vmatprep.subr.mxu0 0.0
        %5782 = vmatpush2.msra.mxu0 0.0
        %5783 = vmatprep.subr.mxu0 0.0
        %5784 = vmatpush2.msra.mxu0 0.0
        %5785 = vmatprep.subr.mxu0 0.0
        %5786 = vmatpush2.msra.mxu0 0.0
        %5787 = vmatprep.subr.mxu0 0.0
        %5788 = vmatpush2.msra.mxu0 0.0
        %5789 = vmatprep.subr.mxu0 0.0
        %5790 = vmatpush2.msra.mxu0 0.0
        %5791 = vmatprep.subr.mxu0 0.0
        %5792 = vmatpush2.msra.mxu0 0.0
        %5793 = vmatprep.subr.mxu0 0.0
        %5794 = vmatpush2.msra.mxu0 0.0
        %5795 = vmatprep.subr.mxu0 0.0
        %5796 = vmatpush2.msra.mxu0 0.0
        %5797 = vmatprep.subr.mxu0 0.0
        %5798 = vmatpush2.msra.mxu0 0.0
        %5799 = vmatprep.subr.mxu0 0.0
        %5800 = vmatpush2.msra.mxu0 0.0
        %5801 = vmatprep.subr.mxu0 0.0
        %5802 = vmatpush2.msra.mxu0 0.0
        %5803 = vmatprep.subr.mxu0 0.0
        %5804 = vmatpush2.msra.mxu0 0.0
        %5805 = vmatprep.mubr.f32.mxu0 0.0
        %5806 = vmatmul.mubr.f32.gmra.mxu0 %v5730
        %v5807 = vpop.f32.mrf.mxu0
        %v5808 = vadd.f32 0.0, %v5807
        %v5809 = vpop.f32.mrf.mxu0
        %5810 = vmatprep.mubr.f32.mxu0 0.0
        %5811 = vmatmul.mubr.f32.gmra.mxu0 %v5733
        %v5812 = vpop.f32.mrf.mxu0
        %v5813 = vadd.f32 0.0, %v5812
        %v5814 = vpop.f32.mrf.mxu0
        %5815 = vmatprep.mubr.f32.mxu0 0.0
        %5816 = vmatmul.mubr.f32.gmra.mxu0 %v5736
        %v5817 = vpop.f32.mrf.mxu0
        %v5818 = vadd.f32 0.0, %v5817
        %v5819 = vpop.f32.mrf.mxu0
        %5820 = vmatprep.mubr.f32.mxu0 0.0
        %5821 = vmatmul.mubr.f32.gmra.mxu0 %v5739
        %v5822 = vpop.f32.mrf.mxu0
        %v5823 = vadd.f32 0.0, %v5822
        %v5824 = vpop.f32.mrf.mxu0
        %5825 = vdwg.mxu0
        %v5827 = vsel %vm5182, %v5515, 0
        %v5830 = vsel %vm5182, %v5516, 0
        %v5833 = vsel %vm5182, %v5517, 0
        %v5836 = vsel %vm5182, %v5518, 0
        %5838 = vmatprep.subr.mxu0 0.0
        %5839 = vmatpush1.msra.mxu0 0.0
        %5840 = vmatprep.subr.mxu0 0.0
        %5841 = vmatpush1.msra.mxu0 0.0
        %5842 = vmatprep.subr.mxu0 0.0
        %5843 = vmatpush1.msra.mxu0 0.0
        %5844 = vmatprep.subr.mxu0 0.0
        %5845 = vmatpush1.msra.mxu0 0.0
        %5846 = vmatprep.subr.mxu0 0.0
        %5847 = vmatpush1.msra.mxu0 0.0
        %5848 = vmatprep.subr.mxu0 0.0
        %5849 = vmatpush1.msra.mxu0 0.0
        %5850 = vmatprep.subr.mxu0 0.0
        %5851 = vmatpush1.msra.mxu0 0.0
        %5852 = vmatprep.subr.mxu0 0.0
        %5853 = vmatpush1.msra.mxu0 0.0
        %5854 = vmatprep.subr.mxu0 0.0
        %5855 = vmatpush1.msra.mxu0 0.0
        %5856 = vmatprep.subr.mxu0 0.0
        %5857 = vmatpush1.msra.mxu0 0.0
        %5858 = vmatprep.subr.mxu0 0.0
        %5859 = vmatpush1.msra.mxu0 0.0
        %5860 = vmatprep.subr.mxu0 0.0
        %5861 = vmatpush1.msra.mxu0 0.0
        %5862 = vmatprep.subr.mxu0 0.0
        %5863 = vmatpush1.msra.mxu0 %v4304
        %5864 = vmatprep.subr.mxu0 0.0
        %5865 = vmatpush1.msra.mxu0 %v4168
        %5866 = vmatprep.subr.mxu0 0.0
        %5867 = vmatpush1.msra.mxu0 %v4032
        %5868 = vmatprep.subr.mxu0 0.0
        %5869 = vmatpush1.msra.mxu0 %v3896
        %5870 = vmatprep.subr.mxu0 0.0
        %5871 = vmatpush2.msra.mxu0 0.0
        %5872 = vmatprep.subr.mxu0 0.0
        %5873 = vmatpush2.msra.mxu0 0.0
        %5874 = vmatprep.subr.mxu0 0.0
        %5875 = vmatpush2.msra.mxu0 0.0
        %5876 = vmatprep.subr.mxu0 0.0
        %5877 = vmatpush2.msra.mxu0 0.0
        %5878 = vmatprep.subr.mxu0 0.0
        %5879 = vmatpush2.msra.mxu0 0.0
        %5880 = vmatprep.subr.mxu0 0.0
        %5881 = vmatpush2.msra.mxu0 0.0
        %5882 = vmatprep.subr.mxu0 0.0
        %5883 = vmatpush2.msra.mxu0 0.0
        %5884 = vmatprep.subr.mxu0 0.0
        %5885 = vmatpush2.msra.mxu0 0.0
        %5886 = vmatprep.subr.mxu0 0.0
        %5887 = vmatpush2.msra.mxu0 0.0
        %5888 = vmatprep.subr.mxu0 0.0
        %5889 = vmatpush2.msra.mxu0 0.0
        %5890 = vmatprep.subr.mxu0 0.0
        %5891 = vmatpush2.msra.mxu0 0.0
        %5892 = vmatprep.subr.mxu0 0.0
        %5893 = vmatpush2.msra.mxu0 0.0
        %5894 = vmatprep.subr.mxu0 0.0
        %5895 = vmatpush2.msra.mxu0 0.0
        %5896 = vmatprep.subr.mxu0 0.0
        %5897 = vmatpush2.msra.mxu0 0.0
        %5898 = vmatprep.subr.mxu0 0.0
        %5899 = vmatpush2.msra.mxu0 0.0
        %5900 = vmatprep.subr.mxu0 0.0
        %5901 = vmatpush2.msra.mxu0 0.0
        %5902 = vmatprep.mubr.f32.mxu0 0.0
        %5903 = vmatmul.mubr.f32.gmra.mxu0 %v5827
        %v5904 = vpop.f32.mrf.mxu0
        %v5905 = vadd.f32 0.0, %v5904
        %v5906 = vpop.f32.mrf.mxu0
        %5907 = vmatprep.mubr.f32.mxu0 0.0
        %5908 = vmatmul.mubr.f32.gmra.mxu0 %v5830
        %v5909 = vpop.f32.mrf.mxu0
        %v5910 = vadd.f32 0.0, %v5909
        %v5911 = vpop.f32.mrf.mxu0
        %5912 = vmatprep.mubr.f32.mxu0 0.0
        %5913 = vmatmul.mubr.f32.gmra.mxu0 %v5833
        %v5914 = vpop.f32.mrf.mxu0
        %v5915 = vadd.f32 0.0, %v5914
        %v5916 = vpop.f32.mrf.mxu0
        %5917 = vmatprep.mubr.f32.mxu0 0.0
        %5918 = vmatmul.mubr.f32.gmra.mxu0 %v5836
        %v5919 = vpop.f32.mrf.mxu0
        %v5920 = vadd.f32 0.0, %v5919
        %v5921 = vpop.f32.mrf.mxu0
        %5922 = vdwg.mxu0
        %v5924 = vsel %vm5182, %v5519, 0
        %v5927 = vsel %vm5182, %v5520, 0
        %v5930 = vsel %vm5182, %v5521, 0
        %v5933 = vsel %vm5182, %v5522, 0
        %5935 = vmatprep.subr.mxu0 0.0
        %5936 = vmatpush1.msra.mxu0 0.0
        %5937 = vmatprep.subr.mxu0 0.0
        %5938 = vmatpush1.msra.mxu0 0.0
        %5939 = vmatprep.subr.mxu0 0.0
        %5940 = vmatpush1.msra.mxu0 0.0
        %5941 = vmatprep.subr.mxu0 0.0
        %5942 = vmatpush1.msra.mxu0 0.0
        %5943 = vmatprep.subr.mxu0 0.0
        %5944 = vmatpush1.msra.mxu0 0.0
        %5945 = vmatprep.subr.mxu0 0.0
        %5946 = vmatpush1.msra.mxu0 0.0
        %5947 = vmatprep.subr.mxu0 0.0
        %5948 = vmatpush1.msra.mxu0 0.0
        %5949 = vmatprep.subr.mxu0 0.0
        %5950 = vmatpush1.msra.mxu0 0.0
        %5951 = vmatprep.subr.mxu0 0.0
        %5952 = vmatpush1.msra.mxu0 0.0
        %5953 = vmatprep.subr.mxu0 0.0
        %5954 = vmatpush1.msra.mxu0 0.0
        %5955 = vmatprep.subr.mxu0 0.0
        %5956 = vmatpush1.msra.mxu0 0.0
        %5957 = vmatprep.subr.mxu0 0.0
        %5958 = vmatpush1.msra.mxu0 0.0
        %5959 = vmatprep.subr.mxu0 0.0
        %5960 = vmatpush1.msra.mxu0 %v4305
        %5961 = vmatprep.subr.mxu0 0.0
        %5962 = vmatpush1.msra.mxu0 %v4169
        %5963 = vmatprep.subr.mxu0 0.0
        %5964 = vmatpush1.msra.mxu0 %v4033
        %5965 = vmatprep.subr.mxu0 0.0
        %5966 = vmatpush1.msra.mxu0 %v3897
        %5967 = vmatprep.subr.mxu0 0.0
        %5968 = vmatpush2.msra.mxu0 0.0
        %5969 = vmatprep.subr.mxu0 0.0
        %5970 = vmatpush2.msra.mxu0 0.0
        %5971 = vmatprep.subr.mxu0 0.0
        %5972 = vmatpush2.msra.mxu0 0.0
        %5973 = vmatprep.subr.mxu0 0.0
        %5974 = vmatpush2.msra.mxu0 0.0
        %5975 = vmatprep.subr.mxu0 0.0
        %5976 = vmatpush2.msra.mxu0 0.0
        %5977 = vmatprep.subr.mxu0 0.0
        %5978 = vmatpush2.msra.mxu0 0.0
        %5979 = vmatprep.subr.mxu0 0.0
        %5980 = vmatpush2.msra.mxu0 0.0
        %5981 = vmatprep.subr.mxu0 0.0
        %5982 = vmatpush2.msra.mxu0 0.0
        %5983 = vmatprep.subr.mxu0 0.0
        %5984 = vmatpush2.msra.mxu0 0.0
        %5985 = vmatprep.subr.mxu0 0.0
        %5986 = vmatpush2.msra.mxu0 0.0
        %5987 = vmatprep.subr.mxu0 0.0
        %5988 = vmatpush2.msra.mxu0 0.0
        %5989 = vmatprep.subr.mxu0 0.0
        %5990 = vmatpush2.msra.mxu0 0.0
        %5991 = vmatprep.subr.mxu0 0.0
        %5992 = vmatpush2.msra.mxu0 0.0
        %5993 = vmatprep.subr.mxu0 0.0
        %5994 = vmatpush2.msra.mxu0 0.0
        %5995 = vmatprep.subr.mxu0 0.0
        %5996 = vmatpush2.msra.mxu0 0.0
        %5997 = vmatprep.subr.mxu0 0.0
        %5998 = vmatpush2.msra.mxu0 0.0
        %5999 = vmatprep.mubr.f32.mxu0 0.0
        %6000 = vmatmul.mubr.f32.gmra.mxu0 %v5924
        %v6001 = vpop.f32.mrf.mxu0
        %v6002 = vadd.f32 0.0, %v6001
        %v6003 = vpop.f32.mrf.mxu0
        %6004 = vmatprep.mubr.f32.mxu0 0.0
        %6005 = vmatmul.mubr.f32.gmra.mxu0 %v5927
        %v6006 = vpop.f32.mrf.mxu0
        %v6007 = vadd.f32 0.0, %v6006
        %v6008 = vpop.f32.mrf.mxu0
        %6009 = vmatprep.mubr.f32.mxu0 0.0
        %6010 = vmatmul.mubr.f32.gmra.mxu0 %v5930
        %v6011 = vpop.f32.mrf.mxu0
        %v6012 = vadd.f32 0.0, %v6011
        %v6013 = vpop.f32.mrf.mxu0
        %6014 = vmatprep.mubr.f32.mxu0 0.0
        %6015 = vmatmul.mubr.f32.gmra.mxu0 %v5933
        %v6016 = vpop.f32.mrf.mxu0
        %v6017 = vadd.f32 0.0, %v6016
        %v6018 = vpop.f32.mrf.mxu0
        %6019 = vdwg.mxu0
        %v6021 = vsel %vm5182, %v5523, 0
        %v6024 = vsel %vm5182, %v5524, 0
        %v6027 = vsel %vm5182, %v5525, 0
        %v6030 = vsel %vm5182, %v5526, 0
        %6032 = vmatprep.subr.mxu0 0.0
        %6033 = vmatpush1.msra.mxu0 0.0
        %6034 = vmatprep.subr.mxu0 0.0
        %6035 = vmatpush1.msra.mxu0 0.0
        %6036 = vmatprep.subr.mxu0 0.0
        %6037 = vmatpush1.msra.mxu0 0.0
        %6038 = vmatprep.subr.mxu0 0.0
        %6039 = vmatpush1.msra.mxu0 0.0
        %6040 = vmatprep.subr.mxu0 0.0
        %6041 = vmatpush1.msra.mxu0 0.0
        %6042 = vmatprep.subr.mxu0 0.0
        %6043 = vmatpush1.msra.mxu0 0.0
        %6044 = vmatprep.subr.mxu0 0.0
        %6045 = vmatpush1.msra.mxu0 0.0
        %6046 = vmatprep.subr.mxu0 0.0
        %6047 = vmatpush1.msra.mxu0 0.0
        %6048 = vmatprep.subr.mxu0 0.0
        %6049 = vmatpush1.msra.mxu0 0.0
        %6050 = vmatprep.subr.mxu0 0.0
        %6051 = vmatpush1.msra.mxu0 0.0
        %6052 = vmatprep.subr.mxu0 0.0
        %6053 = vmatpush1.msra.mxu0 0.0
        %6054 = vmatprep.subr.mxu0 0.0
        %6055 = vmatpush1.msra.mxu0 0.0
        %6056 = vmatprep.subr.mxu0 0.0
        %6057 = vmatpush1.msra.mxu0 %v4306
        %6058 = vmatprep.subr.mxu0 0.0
        %6059 = vmatpush1.msra.mxu0 %v4170
        %6060 = vmatprep.subr.mxu0 0.0
        %6061 = vmatpush1.msra.mxu0 %v4034
        %6062 = vmatprep.subr.mxu0 0.0
        %6063 = vmatpush1.msra.mxu0 %v3898
        %6064 = vmatprep.subr.mxu0 0.0
        %6065 = vmatpush2.msra.mxu0 0.0
        %6066 = vmatprep.subr.mxu0 0.0
        %6067 = vmatpush2.msra.mxu0 0.0
        %6068 = vmatprep.subr.mxu0 0.0
        %6069 = vmatpush2.msra.mxu0 0.0
        %6070 = vmatprep.subr.mxu0 0.0
        %6071 = vmatpush2.msra.mxu0 0.0
        %6072 = vmatprep.subr.mxu0 0.0
        %6073 = vmatpush2.msra.mxu0 0.0
        %6074 = vmatprep.subr.mxu0 0.0
        %6075 = vmatpush2.msra.mxu0 0.0
        %6076 = vmatprep.subr.mxu0 0.0
        %6077 = vmatpush2.msra.mxu0 0.0
        %6078 = vmatprep.subr.mxu0 0.0
        %6079 = vmatpush2.msra.mxu0 0.0
        %6080 = vmatprep.subr.mxu0 0.0
        %6081 = vmatpush2.msra.mxu0 0.0
        %6082 = vmatprep.subr.mxu0 0.0
        %6083 = vmatpush2.msra.mxu0 0.0
        %6084 = vmatprep.subr.mxu0 0.0
        %6085 = vmatpush2.msra.mxu0 0.0
        %6086 = vmatprep.subr.mxu0 0.0
        %6087 = vmatpush2.msra.mxu0 0.0
        %6088 = vmatprep.subr.mxu0 0.0
        %6089 = vmatpush2.msra.mxu0 0.0
        %6090 = vmatprep.subr.mxu0 0.0
        %6091 = vmatpush2.msra.mxu0 0.0
        %6092 = vmatprep.subr.mxu0 0.0
        %6093 = vmatpush2.msra.mxu0 0.0
        %6094 = vmatprep.subr.mxu0 0.0
        %6095 = vmatpush2.msra.mxu0 0.0
        %6096 = vmatprep.mubr.f32.mxu0 0.0
        %6097 = vmatmul.mubr.f32.gmra.mxu0 %v6021
        %v6098 = vpop.f32.mrf.mxu0
        %v6099 = vadd.f32 0.0, %v6098
        %v6100 = vpop.f32.mrf.mxu0
        %6101 = vmatprep.mubr.f32.mxu0 0.0
        %6102 = vmatmul.mubr.f32.gmra.mxu0 %v6024
        %v6103 = vpop.f32.mrf.mxu0
        %v6104 = vadd.f32 0.0, %v6103
        %v6105 = vpop.f32.mrf.mxu0
        %6106 = vmatprep.mubr.f32.mxu0 0.0
        %6107 = vmatmul.mubr.f32.gmra.mxu0 %v6027
        %v6108 = vpop.f32.mrf.mxu0
        %v6109 = vadd.f32 0.0, %v6108
        %v6110 = vpop.f32.mrf.mxu0
        %6111 = vmatprep.mubr.f32.mxu0 0.0
        %6112 = vmatmul.mubr.f32.gmra.mxu0 %v6030
        %v6113 = vpop.f32.mrf.mxu0
        %v6114 = vadd.f32 0.0, %v6113
        %v6115 = vpop.f32.mrf.mxu0
        %6116 = vdwg.mxu0
        %v6118 = vsel %vm5182, %v5527, 0
        %v6121 = vsel %vm5182, %v5528, 0
        %v6124 = vsel %vm5182, %v5529, 0
        %v6127 = vsel %vm5182, %v5530, 0
        %6129 = vmatprep.subr.mxu0 0.0
        %6130 = vmatpush1.msra.mxu0 0.0
        %6131 = vmatprep.subr.mxu0 0.0
        %6132 = vmatpush1.msra.mxu0 0.0
        %6133 = vmatprep.subr.mxu0 0.0
        %6134 = vmatpush1.msra.mxu0 0.0
        %6135 = vmatprep.subr.mxu0 0.0
        %6136 = vmatpush1.msra.mxu0 0.0
        %6137 = vmatprep.subr.mxu0 0.0
        %6138 = vmatpush1.msra.mxu0 0.0
        %6139 = vmatprep.subr.mxu0 0.0
        %6140 = vmatpush1.msra.mxu0 0.0
        %6141 = vmatprep.subr.mxu0 0.0
        %6142 = vmatpush1.msra.mxu0 0.0
        %6143 = vmatprep.subr.mxu0 0.0
        %6144 = vmatpush1.msra.mxu0 0.0
        %6145 = vmatprep.subr.mxu0 0.0
        %6146 = vmatpush1.msra.mxu0 0.0
        %6147 = vmatprep.subr.mxu0 0.0
        %6148 = vmatpush1.msra.mxu0 0.0
        %6149 = vmatprep.subr.mxu0 0.0
        %6150 = vmatpush1.msra.mxu0 0.0
        %6151 = vmatprep.subr.mxu0 0.0
        %6152 = vmatpush1.msra.mxu0 0.0
        %6153 = vmatprep.subr.mxu0 0.0
        %6154 = vmatpush1.msra.mxu0 %v4307
        %6155 = vmatprep.subr.mxu0 0.0
        %6156 = vmatpush1.msra.mxu0 %v4171
        %6157 = vmatprep.subr.mxu0 0.0
        %6158 = vmatpush1.msra.mxu0 %v4035
        %6159 = vmatprep.subr.mxu0 0.0
        %6160 = vmatpush1.msra.mxu0 %v3899
        %6161 = vmatprep.subr.mxu0 0.0
        %6162 = vmatpush2.msra.mxu0 0.0
        %6163 = vmatprep.subr.mxu0 0.0
        %6164 = vmatpush2.msra.mxu0 0.0
        %6165 = vmatprep.subr.mxu0 0.0
        %6166 = vmatpush2.msra.mxu0 0.0
        %6167 = vmatprep.subr.mxu0 0.0
        %6168 = vmatpush2.msra.mxu0 0.0
        %6169 = vmatprep.subr.mxu0 0.0
        %6170 = vmatpush2.msra.mxu0 0.0
        %6171 = vmatprep.subr.mxu0 0.0
        %6172 = vmatpush2.msra.mxu0 0.0
        %6173 = vmatprep.subr.mxu0 0.0
        %6174 = vmatpush2.msra.mxu0 0.0
        %6175 = vmatprep.subr.mxu0 0.0
        %6176 = vmatpush2.msra.mxu0 0.0
        %6177 = vmatprep.subr.mxu0 0.0
        %6178 = vmatpush2.msra.mxu0 0.0
        %6179 = vmatprep.subr.mxu0 0.0
        %6180 = vmatpush2.msra.mxu0 0.0
        %6181 = vmatprep.subr.mxu0 0.0
        %6182 = vmatpush2.msra.mxu0 0.0
        %6183 = vmatprep.subr.mxu0 0.0
        %6184 = vmatpush2.msra.mxu0 0.0
        %6185 = vmatprep.subr.mxu0 0.0
        %6186 = vmatpush2.msra.mxu0 0.0
        %6187 = vmatprep.subr.mxu0 0.0
        %6188 = vmatpush2.msra.mxu0 0.0
        %6189 = vmatprep.subr.mxu0 0.0
        %6190 = vmatpush2.msra.mxu0 0.0
        %6191 = vmatprep.subr.mxu0 0.0
        %6192 = vmatpush2.msra.mxu0 0.0
        %6193 = vmatprep.mubr.f32.mxu0 0.0
        %6194 = vmatmul.mubr.f32.gmra.mxu0 %v6118
        %v6195 = vpop.f32.mrf.mxu0
        %v6196 = vadd.f32 0.0, %v6195
        %v6197 = vpop.f32.mrf.mxu0
        %6198 = vmatprep.mubr.f32.mxu0 0.0
        %6199 = vmatmul.mubr.f32.gmra.mxu0 %v6121
        %v6200 = vpop.f32.mrf.mxu0
        %v6201 = vadd.f32 0.0, %v6200
        %v6202 = vpop.f32.mrf.mxu0
        %6203 = vmatprep.mubr.f32.mxu0 0.0
        %6204 = vmatmul.mubr.f32.gmra.mxu0 %v6124
        %v6205 = vpop.f32.mrf.mxu0
        %v6206 = vadd.f32 0.0, %v6205
        %v6207 = vpop.f32.mrf.mxu0
        %6208 = vmatprep.mubr.f32.mxu0 0.0
        %6209 = vmatmul.mubr.f32.gmra.mxu0 %v6127
        %v6210 = vpop.f32.mrf.mxu0
        %v6211 = vadd.f32 0.0, %v6210
        %v6212 = vpop.f32.mrf.mxu0
        %6213 = vdwg.mxu0
        %v6215 = vsel %vm5182, %v5531, 0
        %v6218 = vsel %vm5182, %v5532, 0
        %v6221 = vsel %vm5182, %v5533, 0
        %v6224 = vsel %vm5182, %v5534, 0
        %6226 = vmatprep.subr.mxu0 0.0
        %6227 = vmatpush1.msra.mxu0 0.0
        %6228 = vmatprep.subr.mxu0 0.0
        %6229 = vmatpush1.msra.mxu0 0.0
        %6230 = vmatprep.subr.mxu0 0.0
        %6231 = vmatpush1.msra.mxu0 0.0
        %6232 = vmatprep.subr.mxu0 0.0
        %6233 = vmatpush1.msra.mxu0 0.0
        %6234 = vmatprep.subr.mxu0 0.0
        %6235 = vmatpush1.msra.mxu0 0.0
        %6236 = vmatprep.subr.mxu0 0.0
        %6237 = vmatpush1.msra.mxu0 0.0
        %6238 = vmatprep.subr.mxu0 0.0
        %6239 = vmatpush1.msra.mxu0 0.0
        %6240 = vmatprep.subr.mxu0 0.0
        %6241 = vmatpush1.msra.mxu0 0.0
        %6242 = vmatprep.subr.mxu0 0.0
        %6243 = vmatpush1.msra.mxu0 0.0
        %6244 = vmatprep.subr.mxu0 0.0
        %6245 = vmatpush1.msra.mxu0 0.0
        %6246 = vmatprep.subr.mxu0 0.0
        %6247 = vmatpush1.msra.mxu0 0.0
        %6248 = vmatprep.subr.mxu0 0.0
        %6249 = vmatpush1.msra.mxu0 0.0
        %6250 = vmatprep.subr.mxu0 0.0
        %6251 = vmatpush1.msra.mxu0 %v4308
        %6252 = vmatprep.subr.mxu0 0.0
        %6253 = vmatpush1.msra.mxu0 %v4172
        %6254 = vmatprep.subr.mxu0 0.0
        %6255 = vmatpush1.msra.mxu0 %v4036
        %6256 = vmatprep.subr.mxu0 0.0
        %6257 = vmatpush1.msra.mxu0 %v3900
        %6258 = vmatprep.subr.mxu0 0.0
        %6259 = vmatpush2.msra.mxu0 0.0
        %6260 = vmatprep.subr.mxu0 0.0
        %6261 = vmatpush2.msra.mxu0 0.0
        %6262 = vmatprep.subr.mxu0 0.0
        %6263 = vmatpush2.msra.mxu0 0.0
        %6264 = vmatprep.subr.mxu0 0.0
        %6265 = vmatpush2.msra.mxu0 0.0
        %6266 = vmatprep.subr.mxu0 0.0
        %6267 = vmatpush2.msra.mxu0 0.0
        %6268 = vmatprep.subr.mxu0 0.0
        %6269 = vmatpush2.msra.mxu0 0.0
        %6270 = vmatprep.subr.mxu0 0.0
        %6271 = vmatpush2.msra.mxu0 0.0
        %6272 = vmatprep.subr.mxu0 0.0
        %6273 = vmatpush2.msra.mxu0 0.0
        %6274 = vmatprep.subr.mxu0 0.0
        %6275 = vmatpush2.msra.mxu0 0.0
        %6276 = vmatprep.subr.mxu0 0.0
        %6277 = vmatpush2.msra.mxu0 0.0
        %6278 = vmatprep.subr.mxu0 0.0
        %6279 = vmatpush2.msra.mxu0 0.0
        %6280 = vmatprep.subr.mxu0 0.0
        %6281 = vmatpush2.msra.mxu0 0.0
        %6282 = vmatprep.subr.mxu0 0.0
        %6283 = vmatpush2.msra.mxu0 0.0
        %6284 = vmatprep.subr.mxu0 0.0
        %6285 = vmatpush2.msra.mxu0 0.0
        %6286 = vmatprep.subr.mxu0 0.0
        %6287 = vmatpush2.msra.mxu0 0.0
        %6288 = vmatprep.subr.mxu0 0.0
        %6289 = vmatpush2.msra.mxu0 0.0
        %6290 = vmatprep.mubr.f32.mxu0 0.0
        %6291 = vmatmul.mubr.f32.gmra.mxu0 %v6215
        %v6292 = vpop.f32.mrf.mxu0
        %v6293 = vadd.f32 0.0, %v6292
        %v6294 = vpop.f32.mrf.mxu0
        %6295 = vmatprep.mubr.f32.mxu0 0.0
        %6296 = vmatmul.mubr.f32.gmra.mxu0 %v6218
        %v6297 = vpop.f32.mrf.mxu0
        %v6298 = vadd.f32 0.0, %v6297
        %v6299 = vpop.f32.mrf.mxu0
        %6300 = vmatprep.mubr.f32.mxu0 0.0
        %6301 = vmatmul.mubr.f32.gmra.mxu0 %v6221
        %v6302 = vpop.f32.mrf.mxu0
        %v6303 = vadd.f32 0.0, %v6302
        %v6304 = vpop.f32.mrf.mxu0
        %6305 = vmatprep.mubr.f32.mxu0 0.0
        %6306 = vmatmul.mubr.f32.gmra.mxu0 %v6224
        %v6307 = vpop.f32.mrf.mxu0
        %v6308 = vadd.f32 0.0, %v6307
        %v6309 = vpop.f32.mrf.mxu0
        %6310 = vdwg.mxu0
        %v6311 = vld [vmem:[#allocation11] sm:$0xff]
        %v6312 = vld [vmem:[#allocation11 + $0x8] sm:$0xff]
        %v6313 = vld [vmem:[#allocation11 + $0x10] sm:$0xff]
        %v6314 = vld [vmem:[#allocation11 + $0x18] sm:$0xff]
        %v6315 = vld [vmem:[#allocation11 + $0x20] sm:$0xff]
        %v6316 = vld [vmem:[#allocation11 + $0x28] sm:$0xff]
        %v6317 = vld [vmem:[#allocation11 + $0x30] sm:$0xff]
        %v6318 = vld [vmem:[#allocation11 + $0x38] sm:$0xff]
        %v6319 = vld [vmem:[#allocation11 + $0x40] sm:$0xff]
        %v6320 = vld [vmem:[#allocation11 + $0x48] sm:$0xff]
        %v6321 = vld [vmem:[#allocation11 + $0x50] sm:$0xff]
        %v6322 = vld [vmem:[#allocation11 + $0x58] sm:$0xff]
        %v6323 = vld [vmem:[#allocation11 + $0x60] sm:$0xff]
        %v6324 = vld [vmem:[#allocation11 + $0x68] sm:$0xff]
        %v6325 = vld [vmem:[#allocation11 + $0x70] sm:$0xff]
        %v6326 = vld [vmem:[#allocation11 + $0x78] sm:$0xff]
        %v6328 = vsel %vm4309, %v5614, 0
        %v6331 = vsel %vm4309, %v5619, 0
        %v6334 = vsel %vm4309, %v5624, 0
        %v6337 = vsel %vm4309, %v5629, 0
        %6339 = vmatprep.subr.mxu0 0.0
        %6340 = vmatpush1.msra.mxu0 0.0
        %6341 = vmatprep.subr.mxu0 0.0
        %6342 = vmatpush1.msra.mxu0 0.0
        %6343 = vmatprep.subr.mxu0 0.0
        %6344 = vmatpush1.msra.mxu0 0.0
        %6345 = vmatprep.subr.mxu0 0.0
        %6346 = vmatpush1.msra.mxu0 0.0
        %6347 = vmatprep.subr.mxu0 0.0
        %6348 = vmatpush1.msra.mxu0 0.0
        %6349 = vmatprep.subr.mxu0 0.0
        %6350 = vmatpush1.msra.mxu0 0.0
        %6351 = vmatprep.subr.mxu0 0.0
        %6352 = vmatpush1.msra.mxu0 0.0
        %6353 = vmatprep.subr.mxu0 0.0
        %6354 = vmatpush1.msra.mxu0 0.0
        %6355 = vmatprep.subr.mxu0 0.0
        %6356 = vmatpush1.msra.mxu0 0.0
        %6357 = vmatprep.subr.mxu0 0.0
        %6358 = vmatpush1.msra.mxu0 0.0
        %6359 = vmatprep.subr.mxu0 0.0
        %6360 = vmatpush1.msra.mxu0 0.0
        %6361 = vmatprep.subr.mxu0 0.0
        %6362 = vmatpush1.msra.mxu0 0.0
        %6363 = vmatprep.subr.mxu0 0.0
        %6364 = vmatpush1.msra.mxu0 0.0
        %6365 = vmatprep.subr.mxu0 0.0
        %6366 = vmatpush1.msra.mxu0 0.0
        %6367 = vmatprep.subr.mxu0 0.0
        %6368 = vmatpush1.msra.mxu0 %v6312
        %6369 = vmatprep.subr.mxu0 0.0
        %6370 = vmatpush1.msra.mxu0 %v6311
        %6371 = vmatprep.subr.mxu0 0.0
        %6372 = vmatpush2.msra.mxu0 0.0
        %6373 = vmatprep.subr.mxu0 0.0
        %6374 = vmatpush2.msra.mxu0 0.0
        %6375 = vmatprep.subr.mxu0 0.0
        %6376 = vmatpush2.msra.mxu0 0.0
        %6377 = vmatprep.subr.mxu0 0.0
        %6378 = vmatpush2.msra.mxu0 0.0
        %6379 = vmatprep.subr.mxu0 0.0
        %6380 = vmatpush2.msra.mxu0 0.0
        %6381 = vmatprep.subr.mxu0 0.0
        %6382 = vmatpush2.msra.mxu0 0.0
        %6383 = vmatprep.subr.mxu0 0.0
        %6384 = vmatpush2.msra.mxu0 0.0
        %6385 = vmatprep.subr.mxu0 0.0
        %6386 = vmatpush2.msra.mxu0 0.0
        %6387 = vmatprep.subr.mxu0 0.0
        %6388 = vmatpush2.msra.mxu0 0.0
        %6389 = vmatprep.subr.mxu0 0.0
        %6390 = vmatpush2.msra.mxu0 0.0
        %6391 = vmatprep.subr.mxu0 0.0
        %6392 = vmatpush2.msra.mxu0 0.0
        %6393 = vmatprep.subr.mxu0 0.0
        %6394 = vmatpush2.msra.mxu0 0.0
        %6395 = vmatprep.subr.mxu0 0.0
        %6396 = vmatpush2.msra.mxu0 0.0
        %6397 = vmatprep.subr.mxu0 0.0
        %6398 = vmatpush2.msra.mxu0 0.0
        %6399 = vmatprep.subr.mxu0 0.0
        %6400 = vmatpush2.msra.mxu0 0.0
        %6401 = vmatprep.subr.mxu0 0.0
        %6402 = vmatpush2.msra.mxu0 0.0
        %6403 = vmatprep.mubr.f32.mxu0 0.0
        %6404 = vmatmul.mubr.f32.gmra.mxu0 %v6328
        %v6405 = vpop.f32.mrf.mxu0
        %v6406 = vadd.f32 0.0, %v6405
        %v6407 = vpop.f32.mrf.mxu0
        %6408 = vmatprep.mubr.f32.mxu0 0.0
        %6409 = vmatmul.mubr.f32.gmra.mxu0 %v6331
        %v6410 = vpop.f32.mrf.mxu0
        %v6411 = vadd.f32 0.0, %v6410
        %v6412 = vpop.f32.mrf.mxu0
        %6413 = vmatprep.mubr.f32.mxu0 0.0
        %6414 = vmatmul.mubr.f32.gmra.mxu0 %v6334
        %v6415 = vpop.f32.mrf.mxu0
        %v6416 = vadd.f32 0.0, %v6415
        %v6417 = vpop.f32.mrf.mxu0
        %6418 = vmatprep.mubr.f32.mxu0 0.0
        %6419 = vmatmul.mubr.f32.gmra.mxu0 %v6337
        %v6420 = vpop.f32.mrf.mxu0
        %v6421 = vadd.f32 0.0, %v6420
        %v6422 = vpop.f32.mrf.mxu0
        %6423 = vdwg.mxu0
        %v6425 = vsel %vm4309, %v5711, 0
        %v6428 = vsel %vm4309, %v5716, 0
        %v6431 = vsel %vm4309, %v5721, 0
        %v6434 = vsel %vm4309, %v5726, 0
        %6436 = vmatprep.subr.mxu0 0.0
        %6437 = vmatpush1.msra.mxu0 0.0
        %6438 = vmatprep.subr.mxu0 0.0
        %6439 = vmatpush1.msra.mxu0 0.0
        %6440 = vmatprep.subr.mxu0 0.0
        %6441 = vmatpush1.msra.mxu0 0.0
        %6442 = vmatprep.subr.mxu0 0.0
        %6443 = vmatpush1.msra.mxu0 0.0
        %6444 = vmatprep.subr.mxu0 0.0
        %6445 = vmatpush1.msra.mxu0 0.0
        %6446 = vmatprep.subr.mxu0 0.0
        %6447 = vmatpush1.msra.mxu0 0.0
        %6448 = vmatprep.subr.mxu0 0.0
        %6449 = vmatpush1.msra.mxu0 0.0
        %6450 = vmatprep.subr.mxu0 0.0
        %6451 = vmatpush1.msra.mxu0 0.0
        %6452 = vmatprep.subr.mxu0 0.0
        %6453 = vmatpush1.msra.mxu0 0.0
        %6454 = vmatprep.subr.mxu0 0.0
        %6455 = vmatpush1.msra.mxu0 0.0
        %6456 = vmatprep.subr.mxu0 0.0
        %6457 = vmatpush1.msra.mxu0 0.0
        %6458 = vmatprep.subr.mxu0 0.0
        %6459 = vmatpush1.msra.mxu0 0.0
        %6460 = vmatprep.subr.mxu0 0.0
        %6461 = vmatpush1.msra.mxu0 0.0
        %6462 = vmatprep.subr.mxu0 0.0
        %6463 = vmatpush1.msra.mxu0 0.0
        %6464 = vmatprep.subr.mxu0 0.0
        %6465 = vmatpush1.msra.mxu0 %v6314
        %6466 = vmatprep.subr.mxu0 0.0
        %6467 = vmatpush1.msra.mxu0 %v6313
        %6468 = vmatprep.subr.mxu0 0.0
        %6469 = vmatpush2.msra.mxu0 0.0
        %6470 = vmatprep.subr.mxu0 0.0
        %6471 = vmatpush2.msra.mxu0 0.0
        %6472 = vmatprep.subr.mxu0 0.0
        %6473 = vmatpush2.msra.mxu0 0.0
        %6474 = vmatprep.subr.mxu0 0.0
        %6475 = vmatpush2.msra.mxu0 0.0
        %6476 = vmatprep.subr.mxu0 0.0
        %6477 = vmatpush2.msra.mxu0 0.0
        %6478 = vmatprep.subr.mxu0 0.0
        %6479 = vmatpush2.msra.mxu0 0.0
        %6480 = vmatprep.subr.mxu0 0.0
        %6481 = vmatpush2.msra.mxu0 0.0
        %6482 = vmatprep.subr.mxu0 0.0
        %6483 = vmatpush2.msra.mxu0 0.0
        %6484 = vmatprep.subr.mxu0 0.0
        %6485 = vmatpush2.msra.mxu0 0.0
        %6486 = vmatprep.subr.mxu0 0.0
        %6487 = vmatpush2.msra.mxu0 0.0
        %6488 = vmatprep.subr.mxu0 0.0
        %6489 = vmatpush2.msra.mxu0 0.0
        %6490 = vmatprep.subr.mxu0 0.0
        %6491 = vmatpush2.msra.mxu0 0.0
        %6492 = vmatprep.subr.mxu0 0.0
        %6493 = vmatpush2.msra.mxu0 0.0
        %6494 = vmatprep.subr.mxu0 0.0
        %6495 = vmatpush2.msra.mxu0 0.0
        %6496 = vmatprep.subr.mxu0 0.0
        %6497 = vmatpush2.msra.mxu0 0.0
        %6498 = vmatprep.subr.mxu0 0.0
        %6499 = vmatpush2.msra.mxu0 0.0
        %6500 = vmatprep.mubr.f32.mxu0 0.0
        %6501 = vmatmul.mubr.f32.gmra.mxu0 %v6425
        %v6502 = vpop.f32.mrf.mxu0
        %v6503 = vadd.f32 0.0, %v6502
        %v6504 = vpop.f32.mrf.mxu0
        %6505 = vmatprep.mubr.f32.mxu0 0.0
        %6506 = vmatmul.mubr.f32.gmra.mxu0 %v6428
        %v6507 = vpop.f32.mrf.mxu0
        %v6508 = vadd.f32 0.0, %v6507
        %v6509 = vpop.f32.mrf.mxu0
        %6510 = vmatprep.mubr.f32.mxu0 0.0
        %6511 = vmatmul.mubr.f32.gmra.mxu0 %v6431
        %v6512 = vpop.f32.mrf.mxu0
        %v6513 = vadd.f32 0.0, %v6512
        %v6514 = vpop.f32.mrf.mxu0
        %6515 = vmatprep.mubr.f32.mxu0 0.0
        %6516 = vmatmul.mubr.f32.gmra.mxu0 %v6434
        %v6517 = vpop.f32.mrf.mxu0
        %v6518 = vadd.f32 0.0, %v6517
        %v6519 = vpop.f32.mrf.mxu0
        %6520 = vdwg.mxu0
        %v6522 = vsel %vm4309, %v5808, 0
        %v6525 = vsel %vm4309, %v5813, 0
        %v6528 = vsel %vm4309, %v5818, 0
        %v6531 = vsel %vm4309, %v5823, 0
        %6533 = vmatprep.subr.mxu0 0.0
        %6534 = vmatpush1.msra.mxu0 0.0
        %6535 = vmatprep.subr.mxu0 0.0
        %6536 = vmatpush1.msra.mxu0 0.0
        %6537 = vmatprep.subr.mxu0 0.0
        %6538 = vmatpush1.msra.mxu0 0.0
        %6539 = vmatprep.subr.mxu0 0.0
        %6540 = vmatpush1.msra.mxu0 0.0
        %6541 = vmatprep.subr.mxu0 0.0
        %6542 = vmatpush1.msra.mxu0 0.0
        %6543 = vmatprep.subr.mxu0 0.0
        %6544 = vmatpush1.msra.mxu0 0.0
        %6545 = vmatprep.subr.mxu0 0.0
        %6546 = vmatpush1.msra.mxu0 0.0
        %6547 = vmatprep.subr.mxu0 0.0
        %6548 = vmatpush1.msra.mxu0 0.0
        %6549 = vmatprep.subr.mxu0 0.0
        %6550 = vmatpush1.msra.mxu0 0.0
        %6551 = vmatprep.subr.mxu0 0.0
        %6552 = vmatpush1.msra.mxu0 0.0
        %6553 = vmatprep.subr.mxu0 0.0
        %6554 = vmatpush1.msra.mxu0 0.0
        %6555 = vmatprep.subr.mxu0 0.0
        %6556 = vmatpush1.msra.mxu0 0.0
        %6557 = vmatprep.subr.mxu0 0.0
        %6558 = vmatpush1.msra.mxu0 0.0
        %6559 = vmatprep.subr.mxu0 0.0
        %6560 = vmatpush1.msra.mxu0 0.0
        %6561 = vmatprep.subr.mxu0 0.0
        %6562 = vmatpush1.msra.mxu0 %v6316
        %6563 = vmatprep.subr.mxu0 0.0
        %6564 = vmatpush1.msra.mxu0 %v6315
        %6565 = vmatprep.subr.mxu0 0.0
        %6566 = vmatpush2.msra.mxu0 0.0
        %6567 = vmatprep.subr.mxu0 0.0
        %6568 = vmatpush2.msra.mxu0 0.0
        %6569 = vmatprep.subr.mxu0 0.0
        %6570 = vmatpush2.msra.mxu0 0.0
        %6571 = vmatprep.subr.mxu0 0.0
        %6572 = vmatpush2.msra.mxu0 0.0
        %6573 = vmatprep.subr.mxu0 0.0
        %6574 = vmatpush2.msra.mxu0 0.0
        %6575 = vmatprep.subr.mxu0 0.0
        %6576 = vmatpush2.msra.mxu0 0.0
        %6577 = vmatprep.subr.mxu0 0.0
        %6578 = vmatpush2.msra.mxu0 0.0
        %6579 = vmatprep.subr.mxu0 0.0
        %6580 = vmatpush2.msra.mxu0 0.0
        %6581 = vmatprep.subr.mxu0 0.0
        %6582 = vmatpush2.msra.mxu0 0.0
        %6583 = vmatprep.subr.mxu0 0.0
        %6584 = vmatpush2.msra.mxu0 0.0
        %6585 = vmatprep.subr.mxu0 0.0
        %6586 = vmatpush2.msra.mxu0 0.0
        %6587 = vmatprep.subr.mxu0 0.0
        %6588 = vmatpush2.msra.mxu0 0.0
        %6589 = vmatprep.subr.mxu0 0.0
        %6590 = vmatpush2.msra.mxu0 0.0
        %6591 = vmatprep.subr.mxu0 0.0
        %6592 = vmatpush2.msra.mxu0 0.0
        %6593 = vmatprep.subr.mxu0 0.0
        %6594 = vmatpush2.msra.mxu0 0.0
        %6595 = vmatprep.subr.mxu0 0.0
        %6596 = vmatpush2.msra.mxu0 0.0
        %6597 = vmatprep.mubr.f32.mxu0 0.0
        %6598 = vmatmul.mubr.f32.gmra.mxu0 %v6522
        %v6599 = vpop.f32.mrf.mxu0
        %v6600 = vadd.f32 0.0, %v6599
        %v6601 = vpop.f32.mrf.mxu0
        %6602 = vmatprep.mubr.f32.mxu0 0.0
        %6603 = vmatmul.mubr.f32.gmra.mxu0 %v6525
        %v6604 = vpop.f32.mrf.mxu0
        %v6605 = vadd.f32 0.0, %v6604
        %v6606 = vpop.f32.mrf.mxu0
        %6607 = vmatprep.mubr.f32.mxu0 0.0
        %6608 = vmatmul.mubr.f32.gmra.mxu0 %v6528
        %v6609 = vpop.f32.mrf.mxu0
        %v6610 = vadd.f32 0.0, %v6609
        %v6611 = vpop.f32.mrf.mxu0
        %6612 = vmatprep.mubr.f32.mxu0 0.0
        %6613 = vmatmul.mubr.f32.gmra.mxu0 %v6531
        %v6614 = vpop.f32.mrf.mxu0
        %v6615 = vadd.f32 0.0, %v6614
        %v6616 = vpop.f32.mrf.mxu0
        %6617 = vdwg.mxu0
        %v6619 = vsel %vm4309, %v5905, 0
        %v6622 = vsel %vm4309, %v5910, 0
        %v6625 = vsel %vm4309, %v5915, 0
        %v6628 = vsel %vm4309, %v5920, 0
        %6630 = vmatprep.subr.mxu0 0.0
        %6631 = vmatpush1.msra.mxu0 0.0
        %6632 = vmatprep.subr.mxu0 0.0
        %6633 = vmatpush1.msra.mxu0 0.0
        %6634 = vmatprep.subr.mxu0 0.0
        %6635 = vmatpush1.msra.mxu0 0.0
        %6636 = vmatprep.subr.mxu0 0.0
        %6637 = vmatpush1.msra.mxu0 0.0
        %6638 = vmatprep.subr.mxu0 0.0
        %6639 = vmatpush1.msra.mxu0 0.0
        %6640 = vmatprep.subr.mxu0 0.0
        %6641 = vmatpush1.msra.mxu0 0.0
        %6642 = vmatprep.subr.mxu0 0.0
        %6643 = vmatpush1.msra.mxu0 0.0
        %6644 = vmatprep.subr.mxu0 0.0
        %6645 = vmatpush1.msra.mxu0 0.0
        %6646 = vmatprep.subr.mxu0 0.0
        %6647 = vmatpush1.msra.mxu0 0.0
        %6648 = vmatprep.subr.mxu0 0.0
        %6649 = vmatpush1.msra.mxu0 0.0
        %6650 = vmatprep.subr.mxu0 0.0
        %6651 = vmatpush1.msra.mxu0 0.0
        %6652 = vmatprep.subr.mxu0 0.0
        %6653 = vmatpush1.msra.mxu0 0.0
        %6654 = vmatprep.subr.mxu0 0.0
        %6655 = vmatpush1.msra.mxu0 0.0
        %6656 = vmatprep.subr.mxu0 0.0
        %6657 = vmatpush1.msra.mxu0 0.0
        %6658 = vmatprep.subr.mxu0 0.0
        %6659 = vmatpush1.msra.mxu0 %v6318
        %6660 = vmatprep.subr.mxu0 0.0
        %6661 = vmatpush1.msra.mxu0 %v6317
        %6662 = vmatprep.subr.mxu0 0.0
        %6663 = vmatpush2.msra.mxu0 0.0
        %6664 = vmatprep.subr.mxu0 0.0
        %6665 = vmatpush2.msra.mxu0 0.0
        %6666 = vmatprep.subr.mxu0 0.0
        %6667 = vmatpush2.msra.mxu0 0.0
        %6668 = vmatprep.subr.mxu0 0.0
        %6669 = vmatpush2.msra.mxu0 0.0
        %6670 = vmatprep.subr.mxu0 0.0
        %6671 = vmatpush2.msra.mxu0 0.0
        %6672 = vmatprep.subr.mxu0 0.0
        %6673 = vmatpush2.msra.mxu0 0.0
        %6674 = vmatprep.subr.mxu0 0.0
        %6675 = vmatpush2.msra.mxu0 0.0
        %6676 = vmatprep.subr.mxu0 0.0
        %6677 = vmatpush2.msra.mxu0 0.0
        %6678 = vmatprep.subr.mxu0 0.0
        %6679 = vmatpush2.msra.mxu0 0.0
        %6680 = vmatprep.subr.mxu0 0.0
        %6681 = vmatpush2.msra.mxu0 0.0
        %6682 = vmatprep.subr.mxu0 0.0
        %6683 = vmatpush2.msra.mxu0 0.0
        %6684 = vmatprep.subr.mxu0 0.0
        %6685 = vmatpush2.msra.mxu0 0.0
        %6686 = vmatprep.subr.mxu0 0.0
        %6687 = vmatpush2.msra.mxu0 0.0
        %6688 = vmatprep.subr.mxu0 0.0
        %6689 = vmatpush2.msra.mxu0 0.0
        %6690 = vmatprep.subr.mxu0 0.0
        %6691 = vmatpush2.msra.mxu0 0.0
        %6692 = vmatprep.subr.mxu0 0.0
        %6693 = vmatpush2.msra.mxu0 0.0
        %6694 = vmatprep.mubr.f32.mxu0 0.0
        %6695 = vmatmul.mubr.f32.gmra.mxu0 %v6619
        %v6696 = vpop.f32.mrf.mxu0
        %v6697 = vadd.f32 0.0, %v6696
        %v6698 = vpop.f32.mrf.mxu0
        %6699 = vmatprep.mubr.f32.mxu0 0.0
        %6700 = vmatmul.mubr.f32.gmra.mxu0 %v6622
        %v6701 = vpop.f32.mrf.mxu0
        %v6702 = vadd.f32 0.0, %v6701
        %v6703 = vpop.f32.mrf.mxu0
        %6704 = vmatprep.mubr.f32.mxu0 0.0
        %6705 = vmatmul.mubr.f32.gmra.mxu0 %v6625
        %v6706 = vpop.f32.mrf.mxu0
        %v6707 = vadd.f32 0.0, %v6706
        %v6708 = vpop.f32.mrf.mxu0
        %6709 = vmatprep.mubr.f32.mxu0 0.0
        %6710 = vmatmul.mubr.f32.gmra.mxu0 %v6628
        %v6711 = vpop.f32.mrf.mxu0
        %v6712 = vadd.f32 0.0, %v6711
        %v6713 = vpop.f32.mrf.mxu0
        %6714 = vdwg.mxu0
        %v6716 = vsel %vm4309, %v6002, 0
        %v6719 = vsel %vm4309, %v6007, 0
        %v6722 = vsel %vm4309, %v6012, 0
        %v6725 = vsel %vm4309, %v6017, 0
        %6727 = vmatprep.subr.mxu0 0.0
        %6728 = vmatpush1.msra.mxu0 0.0
        %6729 = vmatprep.subr.mxu0 0.0
        %6730 = vmatpush1.msra.mxu0 0.0
        %6731 = vmatprep.subr.mxu0 0.0
        %6732 = vmatpush1.msra.mxu0 0.0
        %6733 = vmatprep.subr.mxu0 0.0
        %6734 = vmatpush1.msra.mxu0 0.0
        %6735 = vmatprep.subr.mxu0 0.0
        %6736 = vmatpush1.msra.mxu0 0.0
        %6737 = vmatprep.subr.mxu0 0.0
        %6738 = vmatpush1.msra.mxu0 0.0
        %6739 = vmatprep.subr.mxu0 0.0
        %6740 = vmatpush1.msra.mxu0 0.0
        %6741 = vmatprep.subr.mxu0 0.0
        %6742 = vmatpush1.msra.mxu0 0.0
        %6743 = vmatprep.subr.mxu0 0.0
        %6744 = vmatpush1.msra.mxu0 0.0
        %6745 = vmatprep.subr.mxu0 0.0
        %6746 = vmatpush1.msra.mxu0 0.0
        %6747 = vmatprep.subr.mxu0 0.0
        %6748 = vmatpush1.msra.mxu0 0.0
        %6749 = vmatprep.subr.mxu0 0.0
        %6750 = vmatpush1.msra.mxu0 0.0
        %6751 = vmatprep.subr.mxu0 0.0
        %6752 = vmatpush1.msra.mxu0 0.0
        %6753 = vmatprep.subr.mxu0 0.0
        %6754 = vmatpush1.msra.mxu0 0.0
        %6755 = vmatprep.subr.mxu0 0.0
        %6756 = vmatpush1.msra.mxu0 %v6320
        %6757 = vmatprep.subr.mxu0 0.0
        %6758 = vmatpush1.msra.mxu0 %v6319
        %6759 = vmatprep.subr.mxu0 0.0
        %6760 = vmatpush2.msra.mxu0 0.0
        %6761 = vmatprep.subr.mxu0 0.0
        %6762 = vmatpush2.msra.mxu0 0.0
        %6763 = vmatprep.subr.mxu0 0.0
        %6764 = vmatpush2.msra.mxu0 0.0
        %6765 = vmatprep.subr.mxu0 0.0
        %6766 = vmatpush2.msra.mxu0 0.0
        %6767 = vmatprep.subr.mxu0 0.0
        %6768 = vmatpush2.msra.mxu0 0.0
        %6769 = vmatprep.subr.mxu0 0.0
        %6770 = vmatpush2.msra.mxu0 0.0
        %6771 = vmatprep.subr.mxu0 0.0
        %6772 = vmatpush2.msra.mxu0 0.0
        %6773 = vmatprep.subr.mxu0 0.0
        %6774 = vmatpush2.msra.mxu0 0.0
        %6775 = vmatprep.subr.mxu0 0.0
        %6776 = vmatpush2.msra.mxu0 0.0
        %6777 = vmatprep.subr.mxu0 0.0
        %6778 = vmatpush2.msra.mxu0 0.0
        %6779 = vmatprep.subr.mxu0 0.0
        %6780 = vmatpush2.msra.mxu0 0.0
        %6781 = vmatprep.subr.mxu0 0.0
        %6782 = vmatpush2.msra.mxu0 0.0
        %6783 = vmatprep.subr.mxu0 0.0
        %6784 = vmatpush2.msra.mxu0 0.0
        %6785 = vmatprep.subr.mxu0 0.0
        %6786 = vmatpush2.msra.mxu0 0.0
        %6787 = vmatprep.subr.mxu0 0.0
        %6788 = vmatpush2.msra.mxu0 0.0
        %6789 = vmatprep.subr.mxu0 0.0
        %6790 = vmatpush2.msra.mxu0 0.0
        %6791 = vmatprep.mubr.f32.mxu0 0.0
        %6792 = vmatmul.mubr.f32.gmra.mxu0 %v6716
        %v6793 = vpop.f32.mrf.mxu0
        %v6794 = vadd.f32 0.0, %v6793
        %v6795 = vpop.f32.mrf.mxu0
        %6796 = vmatprep.mubr.f32.mxu0 0.0
        %6797 = vmatmul.mubr.f32.gmra.mxu0 %v6719
        %v6798 = vpop.f32.mrf.mxu0
        %v6799 = vadd.f32 0.0, %v6798
        %v6800 = vpop.f32.mrf.mxu0
        %6801 = vmatprep.mubr.f32.mxu0 0.0
        %6802 = vmatmul.mubr.f32.gmra.mxu0 %v6722
        %v6803 = vpop.f32.mrf.mxu0
        %v6804 = vadd.f32 0.0, %v6803
        %v6805 = vpop.f32.mrf.mxu0
        %6806 = vmatprep.mubr.f32.mxu0 0.0
        %6807 = vmatmul.mubr.f32.gmra.mxu0 %v6725
        %v6808 = vpop.f32.mrf.mxu0
        %v6809 = vadd.f32 0.0, %v6808
        %v6810 = vpop.f32.mrf.mxu0
        %6811 = vdwg.mxu0
        %v6813 = vsel %vm4309, %v6099, 0
        %v6816 = vsel %vm4309, %v6104, 0
        %v6819 = vsel %vm4309, %v6109, 0
        %v6822 = vsel %vm4309, %v6114, 0
        %6824 = vmatprep.subr.mxu0 0.0
        %6825 = vmatpush1.msra.mxu0 0.0
        %6826 = vmatprep.subr.mxu0 0.0
        %6827 = vmatpush1.msra.mxu0 0.0
        %6828 = vmatprep.subr.mxu0 0.0
        %6829 = vmatpush1.msra.mxu0 0.0
        %6830 = vmatprep.subr.mxu0 0.0
        %6831 = vmatpush1.msra.mxu0 0.0
        %6832 = vmatprep.subr.mxu0 0.0
        %6833 = vmatpush1.msra.mxu0 0.0
        %6834 = vmatprep.subr.mxu0 0.0
        %6835 = vmatpush1.msra.mxu0 0.0
        %6836 = vmatprep.subr.mxu0 0.0
        %6837 = vmatpush1.msra.mxu0 0.0
        %6838 = vmatprep.subr.mxu0 0.0
        %6839 = vmatpush1.msra.mxu0 0.0
        %6840 = vmatprep.subr.mxu0 0.0
        %6841 = vmatpush1.msra.mxu0 0.0
        %6842 = vmatprep.subr.mxu0 0.0
        %6843 = vmatpush1.msra.mxu0 0.0
        %6844 = vmatprep.subr.mxu0 0.0
        %6845 = vmatpush1.msra.mxu0 0.0
        %6846 = vmatprep.subr.mxu0 0.0
        %6847 = vmatpush1.msra.mxu0 0.0
        %6848 = vmatprep.subr.mxu0 0.0
        %6849 = vmatpush1.msra.mxu0 0.0
        %6850 = vmatprep.subr.mxu0 0.0
        %6851 = vmatpush1.msra.mxu0 0.0
        %6852 = vmatprep.subr.mxu0 0.0
        %6853 = vmatpush1.msra.mxu0 %v6322
        %6854 = vmatprep.subr.mxu0 0.0
        %6855 = vmatpush1.msra.mxu0 %v6321
        %6856 = vmatprep.subr.mxu0 0.0
        %6857 = vmatpush2.msra.mxu0 0.0
        %6858 = vmatprep.subr.mxu0 0.0
        %6859 = vmatpush2.msra.mxu0 0.0
        %6860 = vmatprep.subr.mxu0 0.0
        %6861 = vmatpush2.msra.mxu0 0.0
        %6862 = vmatprep.subr.mxu0 0.0
        %6863 = vmatpush2.msra.mxu0 0.0
        %6864 = vmatprep.subr.mxu0 0.0
        %6865 = vmatpush2.msra.mxu0 0.0
        %6866 = vmatprep.subr.mxu0 0.0
        %6867 = vmatpush2.msra.mxu0 0.0
        %6868 = vmatprep.subr.mxu0 0.0
        %6869 = vmatpush2.msra.mxu0 0.0
        %6870 = vmatprep.subr.mxu0 0.0
        %6871 = vmatpush2.msra.mxu0 0.0
        %6872 = vmatprep.subr.mxu0 0.0
        %6873 = vmatpush2.msra.mxu0 0.0
        %6874 = vmatprep.subr.mxu0 0.0
        %6875 = vmatpush2.msra.mxu0 0.0
        %6876 = vmatprep.subr.mxu0 0.0
        %6877 = vmatpush2.msra.mxu0 0.0
        %6878 = vmatprep.subr.mxu0 0.0
        %6879 = vmatpush2.msra.mxu0 0.0
        %6880 = vmatprep.subr.mxu0 0.0
        %6881 = vmatpush2.msra.mxu0 0.0
        %6882 = vmatprep.subr.mxu0 0.0
        %6883 = vmatpush2.msra.mxu0 0.0
        %6884 = vmatprep.subr.mxu0 0.0
        %6885 = vmatpush2.msra.mxu0 0.0
        %6886 = vmatprep.subr.mxu0 0.0
        %6887 = vmatpush2.msra.mxu0 0.0
        %6888 = vmatprep.mubr.f32.mxu0 0.0
        %6889 = vmatmul.mubr.f32.gmra.mxu0 %v6813
        %v6890 = vpop.f32.mrf.mxu0
        %v6891 = vadd.f32 0.0, %v6890
        %v6892 = vpop.f32.mrf.mxu0
        %6893 = vmatprep.mubr.f32.mxu0 0.0
        %6894 = vmatmul.mubr.f32.gmra.mxu0 %v6816
        %v6895 = vpop.f32.mrf.mxu0
        %v6896 = vadd.f32 0.0, %v6895
        %v6897 = vpop.f32.mrf.mxu0
        %6898 = vmatprep.mubr.f32.mxu0 0.0
        %6899 = vmatmul.mubr.f32.gmra.mxu0 %v6819
        %v6900 = vpop.f32.mrf.mxu0
        %v6901 = vadd.f32 0.0, %v6900
        %v6902 = vpop.f32.mrf.mxu0
        %6903 = vmatprep.mubr.f32.mxu0 0.0
        %6904 = vmatmul.mubr.f32.gmra.mxu0 %v6822
        %v6905 = vpop.f32.mrf.mxu0
        %v6906 = vadd.f32 0.0, %v6905
        %v6907 = vpop.f32.mrf.mxu0
        %6908 = vdwg.mxu0
        %v6910 = vsel %vm4309, %v6196, 0
        %v6913 = vsel %vm4309, %v6201, 0
        %v6916 = vsel %vm4309, %v6206, 0
        %v6919 = vsel %vm4309, %v6211, 0
        %6921 = vmatprep.subr.mxu0 0.0
        %6922 = vmatpush1.msra.mxu0 0.0
        %6923 = vmatprep.subr.mxu0 0.0
        %6924 = vmatpush1.msra.mxu0 0.0
        %6925 = vmatprep.subr.mxu0 0.0
        %6926 = vmatpush1.msra.mxu0 0.0
        %6927 = vmatprep.subr.mxu0 0.0
        %6928 = vmatpush1.msra.mxu0 0.0
        %6929 = vmatprep.subr.mxu0 0.0
        %6930 = vmatpush1.msra.mxu0 0.0
        %6931 = vmatprep.subr.mxu0 0.0
        %6932 = vmatpush1.msra.mxu0 0.0
        %6933 = vmatprep.subr.mxu0 0.0
        %6934 = vmatpush1.msra.mxu0 0.0
        %6935 = vmatprep.subr.mxu0 0.0
        %6936 = vmatpush1.msra.mxu0 0.0
        %6937 = vmatprep.subr.mxu0 0.0
        %6938 = vmatpush1.msra.mxu0 0.0
        %6939 = vmatprep.subr.mxu0 0.0
        %6940 = vmatpush1.msra.mxu0 0.0
        %6941 = vmatprep.subr.mxu0 0.0
        %6942 = vmatpush1.msra.mxu0 0.0
        %6943 = vmatprep.subr.mxu0 0.0
        %6944 = vmatpush1.msra.mxu0 0.0
        %6945 = vmatprep.subr.mxu0 0.0
        %6946 = vmatpush1.msra.mxu0 0.0
        %6947 = vmatprep.subr.mxu0 0.0
        %6948 = vmatpush1.msra.mxu0 0.0
        %6949 = vmatprep.subr.mxu0 0.0
        %6950 = vmatpush1.msra.mxu0 %v6324
        %6951 = vmatprep.subr.mxu0 0.0
        %6952 = vmatpush1.msra.mxu0 %v6323
        %6953 = vmatprep.subr.mxu0 0.0
        %6954 = vmatpush2.msra.mxu0 0.0
        %6955 = vmatprep.subr.mxu0 0.0
        %6956 = vmatpush2.msra.mxu0 0.0
        %6957 = vmatprep.subr.mxu0 0.0
        %6958 = vmatpush2.msra.mxu0 0.0
        %6959 = vmatprep.subr.mxu0 0.0
        %6960 = vmatpush2.msra.mxu0 0.0
        %6961 = vmatprep.subr.mxu0 0.0
        %6962 = vmatpush2.msra.mxu0 0.0
        %6963 = vmatprep.subr.mxu0 0.0
        %6964 = vmatpush2.msra.mxu0 0.0
        %6965 = vmatprep.subr.mxu0 0.0
        %6966 = vmatpush2.msra.mxu0 0.0
        %6967 = vmatprep.subr.mxu0 0.0
        %6968 = vmatpush2.msra.mxu0 0.0
        %6969 = vmatprep.subr.mxu0 0.0
        %6970 = vmatpush2.msra.mxu0 0.0
        %6971 = vmatprep.subr.mxu0 0.0
        %6972 = vmatpush2.msra.mxu0 0.0
        %6973 = vmatprep.subr.mxu0 0.0
        %6974 = vmatpush2.msra.mxu0 0.0
        %6975 = vmatprep.subr.mxu0 0.0
        %6976 = vmatpush2.msra.mxu0 0.0
        %6977 = vmatprep.subr.mxu0 0.0
        %6978 = vmatpush2.msra.mxu0 0.0
        %6979 = vmatprep.subr.mxu0 0.0
        %6980 = vmatpush2.msra.mxu0 0.0
        %6981 = vmatprep.subr.mxu0 0.0
        %6982 = vmatpush2.msra.mxu0 0.0
        %6983 = vmatprep.subr.mxu0 0.0
        %6984 = vmatpush2.msra.mxu0 0.0
        %6985 = vmatprep.mubr.f32.mxu0 0.0
        %6986 = vmatmul.mubr.f32.gmra.mxu0 %v6910
        %v6987 = vpop.f32.mrf.mxu0
        %v6988 = vadd.f32 0.0, %v6987
        %v6989 = vpop.f32.mrf.mxu0
        %6990 = vmatprep.mubr.f32.mxu0 0.0
        %6991 = vmatmul.mubr.f32.gmra.mxu0 %v6913
        %v6992 = vpop.f32.mrf.mxu0
        %v6993 = vadd.f32 0.0, %v6992
        %v6994 = vpop.f32.mrf.mxu0
        %6995 = vmatprep.mubr.f32.mxu0 0.0
        %6996 = vmatmul.mubr.f32.gmra.mxu0 %v6916
        %v6997 = vpop.f32.mrf.mxu0
        %v6998 = vadd.f32 0.0, %v6997
        %v6999 = vpop.f32.mrf.mxu0
        %7000 = vmatprep.mubr.f32.mxu0 0.0
        %7001 = vmatmul.mubr.f32.gmra.mxu0 %v6919
        %v7002 = vpop.f32.mrf.mxu0
        %v7003 = vadd.f32 0.0, %v7002
        %v7004 = vpop.f32.mrf.mxu0
        %7005 = vdwg.mxu0
        %v7007 = vsel %vm4309, %v6293, 0
        %v7010 = vsel %vm4309, %v6298, 0
        %v7013 = vsel %vm4309, %v6303, 0
        %v7016 = vsel %vm4309, %v6308, 0
        %7018 = vmatprep.subr.mxu0 0.0
        %7019 = vmatpush1.msra.mxu0 0.0
        %7020 = vmatprep.subr.mxu0 0.0
        %7021 = vmatpush1.msra.mxu0 0.0
        %7022 = vmatprep.subr.mxu0 0.0
        %7023 = vmatpush1.msra.mxu0 0.0
        %7024 = vmatprep.subr.mxu0 0.0
        %7025 = vmatpush1.msra.mxu0 0.0
        %7026 = vmatprep.subr.mxu0 0.0
        %7027 = vmatpush1.msra.mxu0 0.0
        %7028 = vmatprep.subr.mxu0 0.0
        %7029 = vmatpush1.msra.mxu0 0.0
        %7030 = vmatprep.subr.mxu0 0.0
        %7031 = vmatpush1.msra.mxu0 0.0
        %7032 = vmatprep.subr.mxu0 0.0
        %7033 = vmatpush1.msra.mxu0 0.0
        %7034 = vmatprep.subr.mxu0 0.0
        %7035 = vmatpush1.msra.mxu0 0.0
        %7036 = vmatprep.subr.mxu0 0.0
        %7037 = vmatpush1.msra.mxu0 0.0
        %7038 = vmatprep.subr.mxu0 0.0
        %7039 = vmatpush1.msra.mxu0 0.0
        %7040 = vmatprep.subr.mxu0 0.0
        %7041 = vmatpush1.msra.mxu0 0.0
        %7042 = vmatprep.subr.mxu0 0.0
        %7043 = vmatpush1.msra.mxu0 0.0
        %7044 = vmatprep.subr.mxu0 0.0
        %7045 = vmatpush1.msra.mxu0 0.0
        %7046 = vmatprep.subr.mxu0 0.0
        %7047 = vmatpush1.msra.mxu0 %v6326
        %7048 = vmatprep.subr.mxu0 0.0
        %7049 = vmatpush1.msra.mxu0 %v6325
        %7050 = vmatprep.subr.mxu0 0.0
        %7051 = vmatpush2.msra.mxu0 0.0
        %7052 = vmatprep.subr.mxu0 0.0
        %7053 = vmatpush2.msra.mxu0 0.0
        %7054 = vmatprep.subr.mxu0 0.0
        %7055 = vmatpush2.msra.mxu0 0.0
        %7056 = vmatprep.subr.mxu0 0.0
        %7057 = vmatpush2.msra.mxu0 0.0
        %7058 = vmatprep.subr.mxu0 0.0
        %7059 = vmatpush2.msra.mxu0 0.0
        %7060 = vmatprep.subr.mxu0 0.0
        %7061 = vmatpush2.msra.mxu0 0.0
        %7062 = vmatprep.subr.mxu0 0.0
        %7063 = vmatpush2.msra.mxu0 0.0
        %7064 = vmatprep.subr.mxu0 0.0
        %7065 = vmatpush2.msra.mxu0 0.0
        %7066 = vmatprep.subr.mxu0 0.0
        %7067 = vmatpush2.msra.mxu0 0.0
        %7068 = vmatprep.subr.mxu0 0.0
        %7069 = vmatpush2.msra.mxu0 0.0
        %7070 = vmatprep.subr.mxu0 0.0
        %7071 = vmatpush2.msra.mxu0 0.0
        %7072 = vmatprep.subr.mxu0 0.0
        %7073 = vmatpush2.msra.mxu0 0.0
        %7074 = vmatprep.subr.mxu0 0.0
        %7075 = vmatpush2.msra.mxu0 0.0
        %7076 = vmatprep.subr.mxu0 0.0
        %7077 = vmatpush2.msra.mxu0 0.0
        %7078 = vmatprep.subr.mxu0 0.0
        %7079 = vmatpush2.msra.mxu0 0.0
        %7080 = vmatprep.subr.mxu0 0.0
        %7081 = vmatpush2.msra.mxu0 0.0
        %7082 = vmatprep.mubr.f32.mxu0 0.0
        %7083 = vmatmul.mubr.f32.gmra.mxu0 %v7007
        %v7084 = vpop.f32.mrf.mxu0
        %v7085 = vadd.f32 0.0, %v7084
        %v7086 = vpop.f32.mrf.mxu0
        %7087 = vmatprep.mubr.f32.mxu0 0.0
        %7088 = vmatmul.mubr.f32.gmra.mxu0 %v7010
        %v7089 = vpop.f32.mrf.mxu0
        %v7090 = vadd.f32 0.0, %v7089
        %v7091 = vpop.f32.mrf.mxu0
        %7092 = vmatprep.mubr.f32.mxu0 0.0
        %7093 = vmatmul.mubr.f32.gmra.mxu0 %v7013
        %v7094 = vpop.f32.mrf.mxu0
        %v7095 = vadd.f32 0.0, %v7094
        %v7096 = vpop.f32.mrf.mxu0
        %7097 = vmatprep.mubr.f32.mxu0 0.0
        %7098 = vmatmul.mubr.f32.gmra.mxu0 %v7016
        %v7099 = vpop.f32.mrf.mxu0
        %v7100 = vadd.f32 0.0, %v7099
        %v7101 = vpop.f32.mrf.mxu0
        %7102 = vdwg.mxu0
        %v7103 = vadd.f32 %v6406, %v6503
        %v7104 = vadd.f32 %v7103, %v6600
        %v7105 = vadd.f32 %v7104, %v6697
        %v7106 = vadd.f32 %v7105, %v6794
        %v7107 = vadd.f32 %v7106, %v6891
        %v7108 = vadd.f32 %v7107, %v6988
        %v7109 = vadd.f32 %v7108, %v7085
        %v7110 = vadd.f32 %v6411, %v6508
        %v7111 = vadd.f32 %v7110, %v6605
        %v7112 = vadd.f32 %v7111, %v6702
        %v7113 = vadd.f32 %v7112, %v6799
        %v7114 = vadd.f32 %v7113, %v6896
        %v7115 = vadd.f32 %v7114, %v6993
        %v7116 = vadd.f32 %v7115, %v7090
        %v7117 = vadd.f32 %v6416, %v6513
        %v7118 = vadd.f32 %v7117, %v6610
        %v7119 = vadd.f32 %v7118, %v6707
        %v7120 = vadd.f32 %v7119, %v6804
        %v7121 = vadd.f32 %v7120, %v6901
        %v7122 = vadd.f32 %v7121, %v6998
        %v7123 = vadd.f32 %v7122, %v7095
        %v7124 = vadd.f32 %v6421, %v6518
        %v7125 = vadd.f32 %v7124, %v6615
        %v7126 = vadd.f32 %v7125, %v6712
        %v7127 = vadd.f32 %v7126, %v6809
        %v7128 = vadd.f32 %v7127, %v6906
        %v7129 = vadd.f32 %v7128, %v7003
        %v7130 = vadd.f32 %v7129, %v7100
        %v7131 = vld [vmem:[%s8] sm:$0x1]
        %v7133 = vlaneseq
        %v7134 = vshrl.u32 %v7133, 7
        %v7135 = vsub.s32 0, %v7134
        %v7136 = vrot.slane %v7131, %v7135
        %v7138 = vadd.f32 %v7109, %v7136
        %v7139 = vadd.f32 %v7116, %v7136
        %v7140 = vadd.f32 %v7123, %v7136
        %v7141 = vadd.f32 %v7130, %v7136
        %v7142 = vadd.f32 %v7138, %v524
        %v7143 = vadd.f32 %v7139, %v525
        %v7144 = vadd.f32 %v7140, %v526
        %v7145 = vadd.f32 %v7141, %v527
        %7146 = vadd.xlane.f32.xlu0 %v7142
        %v7147 = vpop.xlane.xlu0 %7146
        %7148 = vadd.xlane.f32.xlu0 %v7143
        %v7149 = vpop.xlane.xlu0 %7148
        %7150 = vadd.xlane.f32.xlu0 %v7144
        %v7151 = vpop.xlane.xlu0 %7150
        %7152 = vadd.xlane.f32.xlu0 %v7145
        %v7153 = vpop.xlane.xlu0 %7152
        %v7154 = vrcp.pop 128.0
        %v7155 = vmul.f32 %v7147, %v7154
        %v7156 = vmul.f32 %v7149, %v7154
        %v7157 = vmul.f32 %v7151, %v7154
        %v7158 = vmul.f32 %v7153, %v7154
        %v7159 = vsub.f32 %v7142, %v7155
        %v7160 = vsub.f32 %v7143, %v7156
        %v7161 = vsub.f32 %v7144, %v7157
        %v7162 = vsub.f32 %v7145, %v7158
        %v7163 = vmul.f32 %v7159, %v7159
        %v7164 = vmul.f32 %v7160, %v7160
        %v7165 = vmul.f32 %v7161, %v7161
        %v7166 = vmul.f32 %v7162, %v7162
        %7167 = vadd.xlane.f32.xlu0 %v7163
        %v7168 = vpop.xlane.xlu0 %7167
        %7169 = vadd.xlane.f32.xlu0 %v7164
        %v7170 = vpop.xlane.xlu0 %7169
        %7171 = vadd.xlane.f32.xlu0 %v7165
        %v7172 = vpop.xlane.xlu0 %7171
        %7173 = vadd.xlane.f32.xlu0 %v7166
        %v7174 = vpop.xlane.xlu0 %7173
        %v7175 = vmul.f32 %v7168, 0.007874016
        %v7176 = vmul.f32 %v7170, 0.007874016
        %v7177 = vmul.f32 %v7172, 0.007874016
        %v7178 = vmul.f32 %v7174, 0.007874016
        %v7179 = vadd.f32 %v7175, 1e-08
        %v7180 = vadd.f32 %v7176, 1e-08
        %v7181 = vadd.f32 %v7177, 1e-08
        %v7182 = vadd.f32 %v7178, 1e-08
        %v7183 = vrsqrt.pop %v7179
        %v7184 = vrsqrt.pop %v7180
        %v7185 = vrsqrt.pop %v7181
        %v7186 = vrsqrt.pop %v7182
        %v7187 = vmul.f32 %v7159, %v7183
        %v7188 = vmul.f32 %v7160, %v7184
        %v7189 = vmul.f32 %v7161, %v7185
        %v7190 = vmul.f32 %v7162, %v7186
        %v7191 = vld [vmem:[%s9] sm:$0x1]
        %v7192 = vlaneseq
        %v7193 = vshrl.u32 %v7192, 7
        %v7194 = vsub.s32 0, %v7193
        %v7195 = vrot.slane %v7191, %v7194
        %v7196 = vmul.f32 %v7195, %v7187
        %v7197 = vmul.f32 %v7195, %v7188
        %v7198 = vmul.f32 %v7195, %v7189
        %v7199 = vmul.f32 %v7195, %v7190
        %v7200 = vld [vmem:[%s9 + $0x1] sm:$0x1]
        %v7201 = vlaneseq
        %v7202 = vshrl.u32 %v7201, 7
        %v7203 = vsub.s32 0, %v7202
        %v7204 = vrot.slane %v7200, %v7203
        %v7205 = vadd.f32 %v7196, %v7204
        %v7206 = vadd.f32 %v7197, %v7204
        %v7207 = vadd.f32 %v7198, %v7204
        %v7208 = vadd.f32 %v7199, %v7204
        %7209 = vst [vmem:[%s520] sm:$0xff] %v7205
        %7210 = vst [vmem:[%s520 + $0x8] sm:$0xff] %v7206
        %7211 = vst [vmem:[%s520 + $0x10] sm:$0xff] %v7207
        %7212 = vst [vmem:[%s520 + $0x18] sm:$0xff] %v7208
        %s7213 = sand.u32 %s283, 1
        %s7214 = scalar_lea.sflag [#allocation4], %s7213
        %s7215 = sand.u32 %s283, 1
        %s7216 = smul.addr %s7215, 32
        %s7217 = scalar_lea.vmem [#allocation13], %s7216
        // Predicated region
        $region85: #{tpu_custom_call.1} parent=59 // pred_check
          %p7218 = pneg %p293
        $region86: #{tpu_custom_call.1} parent=59 // pred_check_branch
          %7220 = sbr.rel (%p7218) target = $region88
        $region87: #{tpu_custom_call.1} parent=59 // pred_region
          %s7221 = smul.u32 4, %s37
          %s7223 = ssub.s32 512, 512
          %7224 = vsyncadd %s7214, %s7223
          %s7225 = smul.addr %s36, 4
          %s7226 = sadd.s32 %s7221, %s7225
          %s7227 = smul.addr %s7226, 128
          %s7228 = scalar_lea.hbm %s10, %s7227
          %s7229 = sshll.u32 %s7217, 4
          %s7230 = int_to_ptr.vmem [resolvable:$true] %s7229
          %7235 = dma.vmem_to_hbm [thread:$0]  %s7230, 512, %s7228, %s7214, 128, 128, 8
        $region88: #{tpu_custom_call.1} parent=59 // pred_fallthru
          _
      $region60: #{tpu_custom_call.1} parent=5 // pred_fallthru
        _
      %p7236 = scmp.le.s32.totalorder 2, %s27
      // Predicated region
      $region89: #{tpu_custom_call.1} parent=5 // pred_check
        %p7237 = pneg %p7236
      $region90: #{tpu_custom_call.1} parent=5 // pred_check_branch
        %7239 = sbr.rel (%p7237) target = $region92
      $region91: #{tpu_custom_call.1} parent=5 // pred_region
        %s7240 = ssub.s32 %s27, 2
        // Predicated region
        $region93: #{tpu_custom_call.1} parent=91 // pred_check
          %p7241 = pneg %p299
        $region94: #{tpu_custom_call.1} parent=91 // pred_check_branch
          %7243 = sbr.rel (%p7241) target = $region96
        $region95: #{tpu_custom_call.1} parent=91 // pred_region
          %s7244 = sand.u32 %s284, 1
          %s7245 = scalar_lea.sflag [#allocation4], %s7244
          %s7246 = sand.u32 %s284, 1
          %s7247 = smul.addr %s7246, 32
          %s7248 = scalar_lea.vmem [#allocation13], %s7247
          %7249 = dma.done %s7245, 512
        $region96: #{tpu_custom_call.1} parent=91 // pred_fallthru
          _
      $region92: #{tpu_custom_call.1} parent=5 // pred_fallthru
        _
    $region6: #{tpu_custom_call.1} parent=1 // loop_footer
      %s31 = sadd.s32 1, %s27
    $region7: #{tpu_custom_call.1} parent=1 // loop_footer_branch
      %26 = sbr.rel target = $region3
    $region8: #{tpu_custom_call.1} parent=1 // loop_exit
      _
    %7250 = vsyncpa [#allocation3], 1
    %s7251 = scalar_lea.sflag [#allocation3], 1
    %7252 = vsyncpa %s7251, 1
    %7253 = vsyncpa [#allocation6], 1
    %s7254 = scalar_lea.sflag [#allocation6], 1
    %7255 = vsyncpa %s7254, 1
    %7256 = vsyncpa [#allocation9], 1
    %7257 = vsyncpa [#allocation12], 1
    %7258 = vsyncpa [#allocation4], 1
    %s7259 = scalar_lea.sflag [#allocation4], 1
    %7260 = vsyncpa %s7259, 1

</llo_original>
